<compile_context>
chip_gen: v6e
topology: v6e:2x2x1
jax: 0.10.0
libtpu: 0.0.40
codegen_flags: <defaults>
</compile_context>

<pallas_src>
import functools
import jax
import jax.numpy as jnp
from jax.experimental import pallas as pl
from jax.experimental.pallas import tpu as pltpu

EPS = 1e-5  # PyTorch layer_norm_eps default


# ----------------------------- fused Pallas kernel -----------------------------

def _decoder_kernel(x_ref, mem_ref,
                    wqkv_s_ref, bqkv_s_ref, wo_s_ref, bo_s_ref,
                    wq_c_ref, bq_c_ref, wkv_c_ref, bkv_c_ref, wo_c_ref, bo_c_ref,
                    w1_ref, b1_ref, w2_ref, b2_ref,
                    g1_ref, be1_ref, g2_ref, be2_ref, g3_ref, be3_ref,
                    o_ref, x_state,
                    *, num_heads, B, T, S):
    """One decoder layer per grid step (grid axis = layer index).

    x_ref   : (B*T, E) f32 (resident)     mem_ref : (B*S, E) f32 (resident)
    weights : per-layer slabs, leading block dim of size 1 (GEMM weights bf16,
              biases / LN params f32).
    x_state : (B*T, E) f32 VMEM scratch carrying the activation across layers.
    """
    E = x_ref.shape[-1]
    Dh = E // num_heads
    bf16 = jnp.bfloat16
    li = pl.program_id(0)

    @pl.when(li == 0)
    def _():
        x_state[...] = x_ref[...]

    x = x_state[...]                     # (B*T, E) f32
    mem_bf = mem_ref[...].astype(bf16)   # (B*S, E) bf16

    def layer_norm(y, g, b):
        mu = jnp.mean(y, axis=-1, keepdims=True)
        var = jnp.mean(jnp.square(y - mu), axis=-1, keepdims=True)
        return (y - mu) * jax.lax.rsqrt(var + EPS) * g + b

    def mha(q3, k3, v3):
        # q3: (B, Tq, E), k3/v3: (B, Tk, E) f32 -> (B*Tq, E) f32
        # Softmax scale already folded into the Q projection weights.
        q3 = q3.astype(bf16)
        k3 = k3.astype(bf16)
        v3 = v3.astype(bf16)
        outs = []
        for h in range(num_heads):
            sl = slice(h * Dh, (h + 1) * Dh)
            s = jnp.einsum('bqd,bkd->bqk', q3[:, :, sl], k3[:, :, sl],
                           preferred_element_type=jnp.float32)      # (B, Tq, Tk)
            m = jnp.max(s, axis=-1, keepdims=True)
            p = jnp.exp(s - m)
            p = p * pl.reciprocal(jnp.sum(p, axis=-1, keepdims=True), approx=True)
            outs.append(jnp.einsum('bqk,bkd->bqd', p.astype(bf16), v3[:, :, sl],
                                   preferred_element_type=jnp.float32))
        o = jnp.concatenate(outs, axis=-1)                           # (B, Tq, E)
        return o.reshape(-1, E)

    # ----------------- self attention (packed QKV GEMM) -----------------
    qkv = jnp.dot(x.astype(bf16), wqkv_s_ref[0],
                  preferred_element_type=jnp.float32) + bqkv_s_ref[0]   # (B*T, 3E)
    sa_heads = mha(qkv[:, :E].reshape(B, T, E),
                   qkv[:, E:2 * E].reshape(B, T, E),
                   qkv[:, 2 * E:].reshape(B, T, E))
    sa = jnp.dot(sa_heads.astype(bf16), wo_s_ref[0],
                 preferred_element_type=jnp.float32) + bo_s_ref[0]
    x = layer_norm(x + sa, g1_ref[0], be1_ref[0])

    # ---------------- cross attention (q GEMM + packed KV GEMM) ----------
    q_p = jnp.dot(x.astype(bf16), wq_c_ref[0],
                  preferred_element_type=jnp.float32) + bq_c_ref[0]     # (B*T, E)
    kv = jnp.dot(mem_bf, wkv_c_ref[0],
                 preferred_element_type=jnp.float32) + bkv_c_ref[0]     # (B*S, 2E)
    ca_heads = mha(q_p.reshape(B, T, E),
                   kv[:, :E].reshape(B, S, E),
                   kv[:, E:].reshape(B, S, E))
    ca = jnp.dot(ca_heads.astype(bf16), wo_c_ref[0],
                 preferred_element_type=jnp.float32) + bo_c_ref[0]
    x = layer_norm(x + ca, g2_ref[0], be2_ref[0])

    # ------------------------------ FFN ---------------------------------
    h1 = jnp.maximum(
        jnp.dot(x.astype(bf16), w1_ref[0],
                preferred_element_type=jnp.float32) + b1_ref[0], 0.0)    # (B*T, F)
    ff = jnp.dot(h1.astype(bf16), w2_ref[0],
                 preferred_element_type=jnp.float32) + b2_ref[0]         # (B*T, E)
    x = layer_norm(x + ff, g3_ref[0], be3_ref[0])

    x_state[...] = x
    o_ref[...] = x.astype(o_ref.dtype)


# --------------------------- wrapper / param prep ------------------------------

def prepare_decoder_params(params, embed_dim, num_heads):
    """One-time host-side prep: split / transpose / stack weights per layer,
    fold the softmax 1/sqrt(Dh) scale into the Q projections.
    GEMM weights -> bf16, biases & LayerNorm params -> f32 row vectors."""
    E = embed_dim
    scale = (E // num_heads) ** -0.5
    bf16, f32 = jnp.bfloat16, jnp.float32

    def stack(fn):
        return jnp.stack([fn(lp) for lp in params["layers"]])

    def self_qkv_w(p):
        w = p["self_attn"]["in_proj_weight"]          # (3E, E), rows 0:E = Q
        return w.at[:E].multiply(scale).T.astype(bf16)

    def self_qkv_b(p):
        b = p["self_attn"]["in_proj_bias"]
        return b.at[:E].multiply(scale).reshape(1, 3 * E).astype(f32)

    return (
        # self attention (packed QKV, Q pre-scaled)
        stack(self_qkv_w),                                                           # (L,E,3E)
        stack(self_qkv_b),                                                           # (L,1,3E)
        stack(lambda p: p["self_attn"]["out_proj_weight"].T.astype(bf16)),           # (L,E,E)
        stack(lambda p: p["self_attn"]["out_proj_bias"].reshape(1, E).astype(f32)),
        # cross attention (q pre-scaled, kv kept packed)
        stack(lambda p: (p["cross_attn"]["in_proj_weight"][:E] * scale).T.astype(bf16)),  # (L,E,E)
        stack(lambda p: (p["cross_attn"]["in_proj_bias"][:E] * scale).reshape(1, E).astype(f32)),
        stack(lambda p: p["cross_attn"]["in_proj_weight"][E:].T.astype(bf16)),       # (L,E,2E)
        stack(lambda p: p["cross_attn"]["in_proj_bias"][E:].reshape(1, 2 * E).astype(f32)),
        stack(lambda p: p["cross_attn"]["out_proj_weight"].T.astype(bf16)),          # (L,E,E)
        stack(lambda p: p["cross_attn"]["out_proj_bias"].reshape(1, E).astype(f32)),
        # feed-forward
        stack(lambda p: p["linear1_w"].T.astype(bf16)),                              # (L,E,F)
        stack(lambda p: p["linear1_b"].reshape(1, -1).astype(f32)),
        stack(lambda p: p["linear2_w"].T.astype(bf16)),                              # (L,F,E)
        stack(lambda p: p["linear2_b"].reshape(1, E).astype(f32)),
        # layer norms
        stack(lambda p: p["norm1_w"].reshape(1, E).astype(f32)),
        stack(lambda p: p["norm1_b"].reshape(1, E).astype(f32)),
        stack(lambda p: p["norm2_w"].reshape(1, E).astype(f32)),
        stack(lambda p: p["norm2_b"].reshape(1, E).astype(f32)),
        stack(lambda p: p["norm3_w"].reshape(1, E).astype(f32)),
        stack(lambda p: p["norm3_b"].reshape(1, E).astype(f32)),
    )


def transformer_decoder(tgt, memory, packed_weights, num_heads, num_layers):
    B, T, E = tgt.shape
    S = memory.shape[1]
    assert E % num_heads == 0

    x2 = tgt.reshape(B * T, E)
    m2 = memory.reshape(B * S, E)

    def resident_spec(a):
        nd = a.ndim
        return pl.BlockSpec(a.shape, lambda l, nd=nd: (0,) * nd)

    def per_layer_spec(a):
        # a: (L, ...) stacked per layer -> stream one layer slab per grid step
        blk = (1,) + a.shape[1:]
        nd = a.ndim
        return pl.BlockSpec(blk, lambda l, nd=nd: (l,) + (0,) * (nd - 1))

    in_specs = [resident_spec(x2), resident_spec(m2)] + \
               [per_layer_spec(w) for w in packed_weights]

    kernel = functools.partial(_decoder_kernel, num_heads=num_heads, B=B, T=T, S=S)

    out = pl.pallas_call(
        kernel,
        out_shape=jax.ShapeDtypeStruct((B * T, E), jnp.float32),
        grid_spec=pltpu.PrefetchScalarGridSpec(
            num_scalar_prefetch=0,
            grid=(num_layers,),
            in_specs=in_specs,
            out_specs=pl.BlockSpec((B * T, E), lambda l: (0, 0)),
            scratch_shapes=[pltpu.VMEM((B * T, E), jnp.float32)],
        ),
        compiler_params=pltpu.CompilerParams(
            dimension_semantics=("arbitrary",),
            vmem_limit_bytes=32 * 1024 * 1024),
    )(x2, m2, *packed_weights)
    return out.reshape(B, T, E)


# --------------------------- deterministic params ------------------------------

def init_params(key, embed_dim, num_heads, feedforward_dim, num_layers):
    def nrm(k, shape, scale=0.05):
        return (scale * jax.random.normal(k, shape)).astype(jnp.float32)

    layers = []
    for li in range(num_layers):
        k = jax.random.fold_in(key, li)
        ks = jax.random.split(k, 12)
        E, F = embed_dim, feedforward_dim
        layers.append({
            "self_attn": {
                "in_proj_weight": nrm(ks[0], (3 * E, E)),
                "in_proj_bias": nrm(ks[1], (3 * E,)),
                "out_proj_weight": nrm(ks[2], (E, E)),
                "out_proj_bias": nrm(ks[3], (E,)),
            },
            "cross_attn": {
                "in_proj_weight": nrm(ks[4], (3 * E, E)),
                "in_proj_bias": nrm(ks[5], (3 * E,)),
                "out_proj_weight": nrm(ks[6], (E, E)),
                "out_proj_bias": nrm(ks[7], (E,)),
            },
            "linear1_w": nrm(ks[8], (F, E)),
            "linear1_b": nrm(ks[9], (F,)),
            "linear2_w": nrm(ks[10], (E, F)),
            "linear2_b": nrm(ks[11], (E,)),
            "norm1_w": jnp.ones((E,), jnp.float32),
            "norm1_b": jnp.zeros((E,), jnp.float32),
            "norm2_w": jnp.ones((E,), jnp.float32),
            "norm2_b": jnp.zeros((E,), jnp.float32),
            "norm3_w": jnp.ones((E,), jnp.float32),
            "norm3_b": jnp.zeros((E,), jnp.float32),
        })
    return {"layers": layers}


# ----------------------------------- main ---------------------------------------

if __name__ == "__main__":
    # Module hyperparameters
    embed_dim = 32
    num_heads = 4
    feedforward_dim = 64
    num_layers = 2
    # TODO(synk): dropout (p=0.1) is identity here (inference semantics); no
    # tgt_mask/memory_mask support (the reference forward passes none).

    # Small input shapes consistent with forward(tgt, memory)
    B, T, S = 2, 8, 12

    key = jax.random.PRNGKey(0)
    k_tgt, k_mem, k_par = jax.random.split(key, 3)
    tgt = jax.random.normal(k_tgt, (B, T, embed_dim), dtype=jnp.float32)
    memory = jax.random.normal(k_mem, (B, S, embed_dim), dtype=jnp.float32)

    params = init_params(k_par, embed_dim, num_heads, feedforward_dim, num_layers)
    packed = prepare_decoder_params(params, embed_dim, num_heads)

    fwd = jax.jit(functools.partial(transformer_decoder,
                                    num_heads=num_heads, num_layers=num_layers))
    out = jax.block_until_ready(fwd(tgt, memory, packed))

    assert out.shape == (B, T, embed_dim)
    assert bool(jnp.all(jnp.isfinite(out)))
    print("KERNEL_OK")
</pallas_src>

<mosaic_0001>
module attributes {stable_mosaic.version = 11 : i64} {
  func.func @_decoder_kernel(%arg0: i32, %arg1: memref<16x32xf32, #tpu.memory_space<vmem>>, %arg2: memref<24x32xf32, #tpu.memory_space<vmem>>, %arg3: memref<1x32x96xbf16, #tpu.memory_space<vmem>>, %arg4: memref<1x1x96xf32, #tpu.memory_space<vmem>>, %arg5: memref<1x32x32xbf16, #tpu.memory_space<vmem>>, %arg6: memref<1x1x32xf32, #tpu.memory_space<vmem>>, %arg7: memref<1x32x32xbf16, #tpu.memory_space<vmem>>, %arg8: memref<1x1x32xf32, #tpu.memory_space<vmem>>, %arg9: memref<1x32x64xbf16, #tpu.memory_space<vmem>>, %arg10: memref<1x1x64xf32, #tpu.memory_space<vmem>>, %arg11: memref<1x32x32xbf16, #tpu.memory_space<vmem>>, %arg12: memref<1x1x32xf32, #tpu.memory_space<vmem>>, %arg13: memref<1x32x64xbf16, #tpu.memory_space<vmem>>, %arg14: memref<1x1x64xf32, #tpu.memory_space<vmem>>, %arg15: memref<1x64x32xbf16, #tpu.memory_space<vmem>>, %arg16: memref<1x1x32xf32, #tpu.memory_space<vmem>>, %arg17: memref<1x1x32xf32, #tpu.memory_space<vmem>>, %arg18: memref<1x1x32xf32, #tpu.memory_space<vmem>>, %arg19: memref<1x1x32xf32, #tpu.memory_space<vmem>>, %arg20: memref<1x1x32xf32, #tpu.memory_space<vmem>>, %arg21: memref<1x1x32xf32, #tpu.memory_space<vmem>>, %arg22: memref<1x1x32xf32, #tpu.memory_space<vmem>>, %arg23: memref<16x32xf32, #tpu.memory_space<vmem>>, %arg24: memref<16x32xf32, #tpu.memory_space<vmem>>) attributes {dimension_semantics = [#tpu.dimension_semantics<arbitrary>], iteration_bounds = array<i64: 2>, scalar_prefetch = 0 : i64, scratch_operands = 1 : i64, tpu.core_type = #tpu.core_type<tc>, window_params = [{pipeline_mode = #tpu.pipeline_mode<synchronous>, transform_indices = @transform_0, window_bounds = array<i64: 16, 32>}, {pipeline_mode = #tpu.pipeline_mode<synchronous>, transform_indices = @transform_1, window_bounds = array<i64: 24, 32>}, {transform_indices = @transform_2, window_bounds = array<i64: 1, 32, 96>}, {transform_indices = @transform_3, window_bounds = array<i64: 1, 1, 96>}, {transform_indices = @transform_4, window_bounds = array<i64: 1, 32, 32>}, {transform_indices = @transform_5, window_bounds = array<i64: 1, 1, 32>}, {transform_indices = @transform_6, window_bounds = array<i64: 1, 32, 32>}, {transform_indices = @transform_7, window_bounds = array<i64: 1, 1, 32>}, {transform_indices = @transform_8, window_bounds = array<i64: 1, 32, 64>}, {transform_indices = @transform_9, window_bounds = array<i64: 1, 1, 64>}, {transform_indices = @transform_10, window_bounds = array<i64: 1, 32, 32>}, {transform_indices = @transform_11, window_bounds = array<i64: 1, 1, 32>}, {transform_indices = @transform_12, window_bounds = array<i64: 1, 32, 64>}, {transform_indices = @transform_13, window_bounds = array<i64: 1, 1, 64>}, {transform_indices = @transform_14, window_bounds = array<i64: 1, 64, 32>}, {transform_indices = @transform_15, window_bounds = array<i64: 1, 1, 32>}, {transform_indices = @transform_16, window_bounds = array<i64: 1, 1, 32>}, {transform_indices = @transform_17, window_bounds = array<i64: 1, 1, 32>}, {transform_indices = @transform_18, window_bounds = array<i64: 1, 1, 32>}, {transform_indices = @transform_19, window_bounds = array<i64: 1, 1, 32>}, {transform_indices = @transform_20, window_bounds = array<i64: 1, 1, 32>}, {transform_indices = @transform_21, window_bounds = array<i64: 1, 1, 32>}, {pipeline_mode = #tpu.pipeline_mode<synchronous>, transform_indices = @transform_22, window_bounds = array<i64: 16, 32>}]} {
    %c0_i32 = arith.constant 0 : i32
    %0 = arith.cmpi eq, %arg0, %c0_i32 : i32
    %1 = arith.extui %0 : i1 to i32
    %c0_i32_0 = arith.constant 0 : i32
    %2 = arith.cmpi ne, %1, %c0_i32_0 : i32
    scf.if %2 {
      %c0_122 = arith.constant 0 : index
      %c0_123 = arith.constant 0 : index
      %295 = vector.load %arg1[%c0_122, %c0_123] : memref<16x32xf32, #tpu.memory_space<vmem>>, vector<16x32xf32>
      %c0_124 = arith.constant 0 : index
      %c0_125 = arith.constant 0 : index
      %296 = vector.load %arg24[%c0_124, %c0_125] : memref<16x32xf32, #tpu.memory_space<vmem>>, vector<16x32xf32>
      tpu.vector_store %arg24[%c0_124, %c0_125], %295 {strides = array<i32>} : memref<16x32xf32, #tpu.memory_space<vmem>>, vector<16x32xf32>,
    } else {
    }
    %c0 = arith.constant 0 : index
    %c0_1 = arith.constant 0 : index
    %3 = vector.load %arg24[%c0, %c0_1] : memref<16x32xf32, #tpu.memory_space<vmem>>, vector<16x32xf32>
    %c0_2 = arith.constant 0 : index
    %c0_3 = arith.constant 0 : index
    %4 = vector.load %arg2[%c0_2, %c0_3] : memref<24x32xf32, #tpu.memory_space<vmem>>, vector<24x32xf32>
    %5 = arith.truncf %4 : vector<24x32xf32> to vector<24x32xbf16>
    %6 = arith.truncf %3 : vector<16x32xf32> to vector<16x32xbf16>
    %c0_4 = arith.constant 0 : index
    %c0_5 = arith.constant 0 : index
    %c0_6 = arith.constant 0 : index
    %7 = vector.load %arg3[%c0_4, %c0_5, %c0_6] : memref<1x32x96xbf16, #tpu.memory_space<vmem>>, vector<1x32x96xbf16>
    %8 = vector.shape_cast %7 : vector<1x32x96xbf16> to vector<32x96xbf16>
    %cst = arith.constant dense<0.000000e+00> : vector<16x96xf32>
    %9 = tpu.matmul %6, %8, %cst {dimension_numbers = #tpu.dot_dimension_numbers<[1], [0], [0], [1], [0, 0, 1, 1], [], []>} : vector<16x32xbf16>, vector<32x96xbf16>, vector<16x96xf32> -> vector<16x96xf32>
    %c0_7 = arith.constant 0 : index
    %c0_8 = arith.constant 0 : index
    %c0_9 = arith.constant 0 : index
    %10 = vector.load %arg4[%c0_7, %c0_8, %c0_9] : memref<1x1x96xf32, #tpu.memory_space<vmem>>, vector<1x1x96xf32>
    %11 = vector.shape_cast %10 : vector<1x1x96xf32> to vector<1x96xf32>
    %12 = vector.broadcast %11 : vector<1x96xf32> to vector<16x96xf32>
    %13 = arith.addf %9, %12 : vector<16x96xf32>
    %14 = vector.extract_strided_slice %13 {offsets = [0, 0], sizes = [16, 32], strides = [1, 1]} : vector<16x96xf32> to vector<16x32xf32>
    %15 = vector.shape_cast %14 : vector<16x32xf32> to vector<2x8x32xf32>
    %16 = vector.extract_strided_slice %13 {offsets = [0, 32], sizes = [16, 32], strides = [1, 1]} : vector<16x96xf32> to vector<16x32xf32>
    %17 = vector.shape_cast %16 : vector<16x32xf32> to vector<2x8x32xf32>
    %18 = vector.extract_strided_slice %13 {offsets = [0, 64], sizes = [16, 32], strides = [1, 1]} : vector<16x96xf32> to vector<16x32xf32>
    %19 = vector.shape_cast %18 : vector<16x32xf32> to vector<2x8x32xf32>
    %20 = arith.truncf %15 : vector<2x8x32xf32> to vector<2x8x32xbf16>
    %21 = arith.truncf %17 : vector<2x8x32xf32> to vector<2x8x32xbf16>
    %22 = arith.truncf %19 : vector<2x8x32xf32> to vector<2x8x32xbf16>
    %23 = vector.extract_strided_slice %20 {offsets = [0, 0, 0], sizes = [2, 8, 8], strides = [1, 1, 1]} : vector<2x8x32xbf16> to vector<2x8x8xbf16>
    %24 = vector.extract_strided_slice %21 {offsets = [0, 0, 0], sizes = [2, 8, 8], strides = [1, 1, 1]} : vector<2x8x32xbf16> to vector<2x8x8xbf16>
    "tpu.trace_start"() <{level = 10 : i32, message = "bqd,bkd->bqk"}> : () -> ()
    %cst_10 = arith.constant dense<0.000000e+00> : vector<2x8x8xf32>
    %25 = tpu.matmul %23, %24, %cst_10 {dimension_numbers = #tpu.dot_dimension_numbers<[2], [2], [1], [1], [0, 0, 0, 1, 1, 1], [0], [0]>} : vector<2x8x8xbf16>, vector<2x8x8xbf16>, vector<2x8x8xf32> -> vector<2x8x8xf32>
    "tpu.trace_stop"() : () -> ()
    %cst_11 = arith.constant dense<0xFF800000> : vector<2x8xf32>
    %26 = vector.multi_reduction <maximumf>, %25, %cst_11 [2] : vector<2x8x8xf32> to vector<2x8xf32>
    %27 = vector.shape_cast %26 : vector<2x8xf32> to vector<2x8x1xf32>
    %28 = vector.broadcast %27 : vector<2x8x1xf32> to vector<2x8x8xf32>
    %29 = arith.subf %25, %28 : vector<2x8x8xf32>
    %30 = math.exp %29 : vector<2x8x8xf32>
    %cst_12 = arith.constant dense<0.000000e+00> : vector<2x8xf32>
    %31 = vector.multi_reduction <add>, %30, %cst_12 [2] : vector<2x8x8xf32> to vector<2x8xf32>
    %32 = vector.shape_cast %31 : vector<2x8xf32> to vector<2x8x1xf32>
    %33 = tpu.reciprocal %32 {approx = true} : vector<2x8x1xf32> -> vector<2x8x1xf32>
    %34 = vector.broadcast %33 : vector<2x8x1xf32> to vector<2x8x8xf32>
    %35 = arith.mulf %30, %34 : vector<2x8x8xf32>
    %36 = arith.truncf %35 : vector<2x8x8xf32> to vector<2x8x8xbf16>
    %37 = vector.extract_strided_slice %22 {offsets = [0, 0, 0], sizes = [2, 8, 8], strides = [1, 1, 1]} : vector<2x8x32xbf16> to vector<2x8x8xbf16>
    "tpu.trace_start"() <{level = 10 : i32, message = "bqk,bkd->bqd"}> : () -> ()
    %cst_13 = arith.constant dense<0.000000e+00> : vector<2x8x8xf32>
    %38 = tpu.matmul %36, %37, %cst_13 {dimension_numbers = #tpu.dot_dimension_numbers<[2], [1], [1], [2], [0, 0, 0, 1, 1, 2], [0], [0]>} : vector<2x8x8xbf16>, vector<2x8x8xbf16>, vector<2x8x8xf32> -> vector<2x8x8xf32>
    "tpu.trace_stop"() : () -> ()
    %39 = vector.extract_strided_slice %20 {offsets = [0, 0, 8], sizes = [2, 8, 8], strides = [1, 1, 1]} : vector<2x8x32xbf16> to vector<2x8x8xbf16>
    %40 = vector.extract_strided_slice %21 {offsets = [0, 0, 8], sizes = [2, 8, 8], strides = [1, 1, 1]} : vector<2x8x32xbf16> to vector<2x8x8xbf16>
    "tpu.trace_start"() <{level = 10 : i32, message = "bqd,bkd->bqk"}> : () -> ()
    %cst_14 = arith.constant dense<0.000000e+00> : vector<2x8x8xf32>
    %41 = tpu.matmul %39, %40, %cst_14 {dimension_numbers = #tpu.dot_dimension_numbers<[2], [2], [1], [1], [0, 0, 0, 1, 1, 1], [0], [0]>} : vector<2x8x8xbf16>, vector<2x8x8xbf16>, vector<2x8x8xf32> -> vector<2x8x8xf32>
    "tpu.trace_stop"() : () -> ()
    %cst_15 = arith.constant dense<0xFF800000> : vector<2x8xf32>
    %42 = vector.multi_reduction <maximumf>, %41, %cst_15 [2] : vector<2x8x8xf32> to vector<2x8xf32>
    %43 = vector.shape_cast %42 : vector<2x8xf32> to vector<2x8x1xf32>
    %44 = vector.broadcast %43 : vector<2x8x1xf32> to vector<2x8x8xf32>
    %45 = arith.subf %41, %44 : vector<2x8x8xf32>
    %46 = math.exp %45 : vector<2x8x8xf32>
    %cst_16 = arith.constant dense<0.000000e+00> : vector<2x8xf32>
    %47 = vector.multi_reduction <add>, %46, %cst_16 [2] : vector<2x8x8xf32> to vector<2x8xf32>
    %48 = vector.shape_cast %47 : vector<2x8xf32> to vector<2x8x1xf32>
    %49 = tpu.reciprocal %48 {approx = true} : vector<2x8x1xf32> -> vector<2x8x1xf32>
    %50 = vector.broadcast %49 : vector<2x8x1xf32> to vector<2x8x8xf32>
    %51 = arith.mulf %46, %50 : vector<2x8x8xf32>
    %52 = arith.truncf %51 : vector<2x8x8xf32> to vector<2x8x8xbf16>
    %53 = vector.extract_strided_slice %22 {offsets = [0, 0, 8], sizes = [2, 8, 8], strides = [1, 1, 1]} : vector<2x8x32xbf16> to vector<2x8x8xbf16>
    "tpu.trace_start"() <{level = 10 : i32, message = "bqk,bkd->bqd"}> : () -> ()
    %cst_17 = arith.constant dense<0.000000e+00> : vector<2x8x8xf32>
    %54 = tpu.matmul %52, %53, %cst_17 {dimension_numbers = #tpu.dot_dimension_numbers<[2], [1], [1], [2], [0, 0, 0, 1, 1, 2], [0], [0]>} : vector<2x8x8xbf16>, vector<2x8x8xbf16>, vector<2x8x8xf32> -> vector<2x8x8xf32>
    "tpu.trace_stop"() : () -> ()
    %55 = vector.extract_strided_slice %20 {offsets = [0, 0, 16], sizes = [2, 8, 8], strides = [1, 1, 1]} : vector<2x8x32xbf16> to vector<2x8x8xbf16>
    %56 = vector.extract_strided_slice %21 {offsets = [0, 0, 16], sizes = [2, 8, 8], strides = [1, 1, 1]} : vector<2x8x32xbf16> to vector<2x8x8xbf16>
    "tpu.trace_start"() <{level = 10 : i32, message = "bqd,bkd->bqk"}> : () -> ()
    %cst_18 = arith.constant dense<0.000000e+00> : vector<2x8x8xf32>
    %57 = tpu.matmul %55, %56, %cst_18 {dimension_numbers = #tpu.dot_dimension_numbers<[2], [2], [1], [1], [0, 0, 0, 1, 1, 1], [0], [0]>} : vector<2x8x8xbf16>, vector<2x8x8xbf16>, vector<2x8x8xf32> -> vector<2x8x8xf32>
    "tpu.trace_stop"() : () -> ()
    %cst_19 = arith.constant dense<0xFF800000> : vector<2x8xf32>
    %58 = vector.multi_reduction <maximumf>, %57, %cst_19 [2] : vector<2x8x8xf32> to vector<2x8xf32>
    %59 = vector.shape_cast %58 : vector<2x8xf32> to vector<2x8x1xf32>
    %60 = vector.broadcast %59 : vector<2x8x1xf32> to vector<2x8x8xf32>
    %61 = arith.subf %57, %60 : vector<2x8x8xf32>
    %62 = math.exp %61 : vector<2x8x8xf32>
    %cst_20 = arith.constant dense<0.000000e+00> : vector<2x8xf32>
    %63 = vector.multi_reduction <add>, %62, %cst_20 [2] : vector<2x8x8xf32> to vector<2x8xf32>
    %64 = vector.shape_cast %63 : vector<2x8xf32> to vector<2x8x1xf32>
    %65 = tpu.reciprocal %64 {approx = true} : vector<2x8x1xf32> -> vector<2x8x1xf32>
    %66 = vector.broadcast %65 : vector<2x8x1xf32> to vector<2x8x8xf32>
    %67 = arith.mulf %62, %66 : vector<2x8x8xf32>
    %68 = arith.truncf %67 : vector<2x8x8xf32> to vector<2x8x8xbf16>
    %69 = vector.extract_strided_slice %22 {offsets = [0, 0, 16], sizes = [2, 8, 8], strides = [1, 1, 1]} : vector<2x8x32xbf16> to vector<2x8x8xbf16>
    "tpu.trace_start"() <{level = 10 : i32, message = "bqk,bkd->bqd"}> : () -> ()
    %cst_21 = arith.constant dense<0.000000e+00> : vector<2x8x8xf32>
    %70 = tpu.matmul %68, %69, %cst_21 {dimension_numbers = #tpu.dot_dimension_numbers<[2], [1], [1], [2], [0, 0, 0, 1, 1, 2], [0], [0]>} : vector<2x8x8xbf16>, vector<2x8x8xbf16>, vector<2x8x8xf32> -> vector<2x8x8xf32>
    "tpu.trace_stop"() : () -> ()
    %71 = vector.extract_strided_slice %20 {offsets = [0, 0, 24], sizes = [2, 8, 8], strides = [1, 1, 1]} : vector<2x8x32xbf16> to vector<2x8x8xbf16>
    %72 = vector.extract_strided_slice %21 {offsets = [0, 0, 24], sizes = [2, 8, 8], strides = [1, 1, 1]} : vector<2x8x32xbf16> to vector<2x8x8xbf16>
    "tpu.trace_start"() <{level = 10 : i32, message = "bqd,bkd->bqk"}> : () -> ()
    %cst_22 = arith.constant dense<0.000000e+00> : vector<2x8x8xf32>
    %73 = tpu.matmul %71, %72, %cst_22 {dimension_numbers = #tpu.dot_dimension_numbers<[2], [2], [1], [1], [0, 0, 0, 1, 1, 1], [0], [0]>} : vector<2x8x8xbf16>, vector<2x8x8xbf16>, vector<2x8x8xf32> -> vector<2x8x8xf32>
    "tpu.trace_stop"() : () -> ()
    %cst_23 = arith.constant dense<0xFF800000> : vector<2x8xf32>
    %74 = vector.multi_reduction <maximumf>, %73, %cst_23 [2] : vector<2x8x8xf32> to vector<2x8xf32>
    %75 = vector.shape_cast %74 : vector<2x8xf32> to vector<2x8x1xf32>
    %76 = vector.broadcast %75 : vector<2x8x1xf32> to vector<2x8x8xf32>
    %77 = arith.subf %73, %76 : vector<2x8x8xf32>
    %78 = math.exp %77 : vector<2x8x8xf32>
    %cst_24 = arith.constant dense<0.000000e+00> : vector<2x8xf32>
    %79 = vector.multi_reduction <add>, %78, %cst_24 [2] : vector<2x8x8xf32> to vector<2x8xf32>
    %80 = vector.shape_cast %79 : vector<2x8xf32> to vector<2x8x1xf32>
    %81 = tpu.reciprocal %80 {approx = true} : vector<2x8x1xf32> -> vector<2x8x1xf32>
    %82 = vector.broadcast %81 : vector<2x8x1xf32> to vector<2x8x8xf32>
    %83 = arith.mulf %78, %82 : vector<2x8x8xf32>
    %84 = arith.truncf %83 : vector<2x8x8xf32> to vector<2x8x8xbf16>
    %85 = vector.extract_strided_slice %22 {offsets = [0, 0, 24], sizes = [2, 8, 8], strides = [1, 1, 1]} : vector<2x8x32xbf16> to vector<2x8x8xbf16>
    "tpu.trace_start"() <{level = 10 : i32, message = "bqk,bkd->bqd"}> : () -> ()
    %cst_25 = arith.constant dense<0.000000e+00> : vector<2x8x8xf32>
    %86 = tpu.matmul %84, %85, %cst_25 {dimension_numbers = #tpu.dot_dimension_numbers<[2], [1], [1], [2], [0, 0, 0, 1, 1, 2], [0], [0]>} : vector<2x8x8xbf16>, vector<2x8x8xbf16>, vector<2x8x8xf32> -> vector<2x8x8xf32>
    "tpu.trace_stop"() : () -> ()
    %87 = tpu.concatenate %38, %54, %70, %86 in 2 : vector<2x8x8xf32>, vector<2x8x8xf32>, vector<2x8x8xf32>, vector<2x8x8xf32> -> vector<2x8x32xf32>
    %88 = vector.shape_cast %87 : vector<2x8x32xf32> to vector<16x32xf32>
    %89 = arith.truncf %88 : vector<16x32xf32> to vector<16x32xbf16>
    %c0_26 = arith.constant 0 : index
    %c0_27 = arith.constant 0 : index
    %c0_28 = arith.constant 0 : index
    %90 = vector.load %arg5[%c0_26, %c0_27, %c0_28] : memref<1x32x32xbf16, #tpu.memory_space<vmem>>, vector<1x32x32xbf16>
    %91 = vector.shape_cast %90 : vector<1x32x32xbf16> to vector<32x32xbf16>
    %cst_29 = arith.constant dense<0.000000e+00> : vector<16x32xf32>
    %92 = tpu.matmul %89, %91, %cst_29 {dimension_numbers = #tpu.dot_dimension_numbers<[1], [0], [0], [1], [0, 0, 1, 1], [], []>} : vector<16x32xbf16>, vector<32x32xbf16>, vector<16x32xf32> -> vector<16x32xf32>
    %c0_30 = arith.constant 0 : index
    %c0_31 = arith.constant 0 : index
    %c0_32 = arith.constant 0 : index
    %93 = vector.load %arg6[%c0_30, %c0_31, %c0_32] : memref<1x1x32xf32, #tpu.memory_space<vmem>>, vector<1x1x32xf32>
    %94 = vector.shape_cast %93 : vector<1x1x32xf32> to vector<1x32xf32>
    %95 = vector.broadcast %94 : vector<1x32xf32> to vector<16x32xf32>
    %96 = arith.addf %92, %95 : vector<16x32xf32>
    %97 = arith.addf %3, %96 : vector<16x32xf32>
    %c0_33 = arith.constant 0 : index
    %c0_34 = arith.constant 0 : index
    %c0_35 = arith.constant 0 : index
    %98 = vector.load %arg17[%c0_33, %c0_34, %c0_35] : memref<1x1x32xf32, #tpu.memory_space<vmem>>, vector<1x1x32xf32>
    %99 = vector.shape_cast %98 : vector<1x1x32xf32> to vector<1x32xf32>
    %c0_36 = arith.constant 0 : index
    %c0_37 = arith.constant 0 : index
    %c0_38 = arith.constant 0 : index
    %100 = vector.load %arg18[%c0_36, %c0_37, %c0_38] : memref<1x1x32xf32, #tpu.memory_space<vmem>>, vector<1x1x32xf32>
    %101 = vector.shape_cast %100 : vector<1x1x32xf32> to vector<1x32xf32>
    %cst_39 = arith.constant dense<0.000000e+00> : vector<16xf32>
    %102 = vector.multi_reduction <add>, %97, %cst_39 [1] : vector<16x32xf32> to vector<16xf32>
    %103 = vector.shape_cast %102 : vector<16xf32> to vector<16x1xf32>
    %cst_40 = arith.constant 3.200000e+01 : f32
    %104 = vector.broadcast %cst_40 : f32 to vector<16x1xf32>
    %105 = arith.divf %103, %104 : vector<16x1xf32>
    %106 = vector.broadcast %105 : vector<16x1xf32> to vector<16x32xf32>
    %107 = arith.subf %97, %106 : vector<16x32xf32>
    %108 = arith.mulf %107, %107 : vector<16x32xf32>
    %cst_41 = arith.constant dense<0.000000e+00> : vector<16xf32>
    %109 = vector.multi_reduction <add>, %108, %cst_41 [1] : vector<16x32xf32> to vector<16xf32>
    %110 = vector.shape_cast %109 : vector<16xf32> to vector<16x1xf32>
    %cst_42 = arith.constant 3.200000e+01 : f32
    %111 = vector.broadcast %cst_42 : f32 to vector<16x1xf32>
    %112 = arith.divf %110, %111 : vector<16x1xf32>
    %113 = vector.broadcast %105 : vector<16x1xf32> to vector<16x32xf32>
    %114 = arith.subf %97, %113 : vector<16x32xf32>
    %cst_43 = arith.constant 9.99999974E-6 : f32
    %115 = vector.broadcast %cst_43 : f32 to vector<16x1xf32>
    %116 = arith.addf %112, %115 : vector<16x1xf32>
    %117 = math.rsqrt %116 : vector<16x1xf32>
    %118 = vector.broadcast %117 : vector<16x1xf32> to vector<16x32xf32>
    %119 = arith.mulf %114, %118 : vector<16x32xf32>
    %120 = vector.broadcast %99 : vector<1x32xf32> to vector<16x32xf32>
    %121 = arith.mulf %119, %120 : vector<16x32xf32>
    %122 = vector.broadcast %101 : vector<1x32xf32> to vector<16x32xf32>
    %123 = arith.addf %121, %122 : vector<16x32xf32>
    %124 = arith.truncf %123 : vector<16x32xf32> to vector<16x32xbf16>
    %c0_44 = arith.constant 0 : index
    %c0_45 = arith.constant 0 : index
    %c0_46 = arith.constant 0 : index
    %125 = vector.load %arg7[%c0_44, %c0_45, %c0_46] : memref<1x32x32xbf16, #tpu.memory_space<vmem>>, vector<1x32x32xbf16>
    %126 = vector.shape_cast %125 : vector<1x32x32xbf16> to vector<32x32xbf16>
    %cst_47 = arith.constant dense<0.000000e+00> : vector<16x32xf32>
    %127 = tpu.matmul %124, %126, %cst_47 {dimension_numbers = #tpu.dot_dimension_numbers<[1], [0], [0], [1], [0, 0, 1, 1], [], []>} : vector<16x32xbf16>, vector<32x32xbf16>, vector<16x32xf32> -> vector<16x32xf32>
    %c0_48 = arith.constant 0 : index
    %c0_49 = arith.constant 0 : index
    %c0_50 = arith.constant 0 : index
    %128 = vector.load %arg8[%c0_48, %c0_49, %c0_50] : memref<1x1x32xf32, #tpu.memory_space<vmem>>, vector<1x1x32xf32>
    %129 = vector.shape_cast %128 : vector<1x1x32xf32> to vector<1x32xf32>
    %130 = vector.broadcast %129 : vector<1x32xf32> to vector<16x32xf32>
    %131 = arith.addf %127, %130 : vector<16x32xf32>
    %c0_51 = arith.constant 0 : index
    %c0_52 = arith.constant 0 : index
    %c0_53 = arith.constant 0 : index
    %132 = vector.load %arg9[%c0_51, %c0_52, %c0_53] : memref<1x32x64xbf16, #tpu.memory_space<vmem>>, vector<1x32x64xbf16>
    %133 = vector.shape_cast %132 : vector<1x32x64xbf16> to vector<32x64xbf16>
    %cst_54 = arith.constant dense<0.000000e+00> : vector<24x64xf32>
    %134 = tpu.matmul %5, %133, %cst_54 {dimension_numbers = #tpu.dot_dimension_numbers<[1], [0], [0], [1], [0, 0, 1, 1], [], []>} : vector<24x32xbf16>, vector<32x64xbf16>, vector<24x64xf32> -> vector<24x64xf32>
    %c0_55 = arith.constant 0 : index
    %c0_56 = arith.constant 0 : index
    %c0_57 = arith.constant 0 : index
    %135 = vector.load %arg10[%c0_55, %c0_56, %c0_57] : memref<1x1x64xf32, #tpu.memory_space<vmem>>, vector<1x1x64xf32>
    %136 = vector.shape_cast %135 : vector<1x1x64xf32> to vector<1x64xf32>
    %137 = vector.broadcast %136 : vector<1x64xf32> to vector<24x64xf32>
    %138 = arith.addf %134, %137 : vector<24x64xf32>
    %139 = vector.shape_cast %131 : vector<16x32xf32> to vector<2x8x32xf32>
    %140 = vector.extract_strided_slice %138 {offsets = [0, 0], sizes = [24, 32], strides = [1, 1]} : vector<24x64xf32> to vector<24x32xf32>
    %141 = vector.shape_cast %140 : vector<24x32xf32> to vector<2x12x32xf32>
    %142 = vector.extract_strided_slice %138 {offsets = [0, 32], sizes = [24, 32], strides = [1, 1]} : vector<24x64xf32> to vector<24x32xf32>
    %143 = vector.shape_cast %142 : vector<24x32xf32> to vector<2x12x32xf32>
    %144 = arith.truncf %139 : vector<2x8x32xf32> to vector<2x8x32xbf16>
    %145 = arith.truncf %141 : vector<2x12x32xf32> to vector<2x12x32xbf16>
    %146 = arith.truncf %143 : vector<2x12x32xf32> to vector<2x12x32xbf16>
    %147 = vector.extract_strided_slice %144 {offsets = [0, 0, 0], sizes = [2, 8, 8], strides = [1, 1, 1]} : vector<2x8x32xbf16> to vector<2x8x8xbf16>
    %148 = vector.extract_strided_slice %145 {offsets = [0, 0, 0], sizes = [2, 12, 8], strides = [1, 1, 1]} : vector<2x12x32xbf16> to vector<2x12x8xbf16>
    "tpu.trace_start"() <{level = 10 : i32, message = "bqd,bkd->bqk"}> : () -> ()
    %cst_58 = arith.constant dense<0.000000e+00> : vector<2x8x12xf32>
    %149 = tpu.matmul %147, %148, %cst_58 {dimension_numbers = #tpu.dot_dimension_numbers<[2], [2], [1], [1], [0, 0, 0, 1, 1, 1], [0], [0]>} : vector<2x8x8xbf16>, vector<2x12x8xbf16>, vector<2x8x12xf32> -> vector<2x8x12xf32>
    "tpu.trace_stop"() : () -> ()
    %cst_59 = arith.constant dense<0xFF800000> : vector<2x8xf32>
    %150 = vector.multi_reduction <maximumf>, %149, %cst_59 [2] : vector<2x8x12xf32> to vector<2x8xf32>
    %151 = vector.shape_cast %150 : vector<2x8xf32> to vector<2x8x1xf32>
    %152 = vector.broadcast %151 : vector<2x8x1xf32> to vector<2x8x12xf32>
    %153 = arith.subf %149, %152 : vector<2x8x12xf32>
    %154 = math.exp %153 : vector<2x8x12xf32>
    %cst_60 = arith.constant dense<0.000000e+00> : vector<2x8xf32>
    %155 = vector.multi_reduction <add>, %154, %cst_60 [2] : vector<2x8x12xf32> to vector<2x8xf32>
    %156 = vector.shape_cast %155 : vector<2x8xf32> to vector<2x8x1xf32>
    %157 = tpu.reciprocal %156 {approx = true} : vector<2x8x1xf32> -> vector<2x8x1xf32>
    %158 = vector.broadcast %157 : vector<2x8x1xf32> to vector<2x8x12xf32>
    %159 = arith.mulf %154, %158 : vector<2x8x12xf32>
    %160 = arith.truncf %159 : vector<2x8x12xf32> to vector<2x8x12xbf16>
    %161 = vector.extract_strided_slice %146 {offsets = [0, 0, 0], sizes = [2, 12, 8], strides = [1, 1, 1]} : vector<2x12x32xbf16> to vector<2x12x8xbf16>
    "tpu.trace_start"() <{level = 10 : i32, message = "bqk,bkd->bqd"}> : () -> ()
    %cst_61 = arith.constant dense<0.000000e+00> : vector<2x8x8xf32>
    %162 = tpu.matmul %160, %161, %cst_61 {dimension_numbers = #tpu.dot_dimension_numbers<[2], [1], [1], [2], [0, 0, 0, 1, 1, 2], [0], [0]>} : vector<2x8x12xbf16>, vector<2x12x8xbf16>, vector<2x8x8xf32> -> vector<2x8x8xf32>
    "tpu.trace_stop"() : () -> ()
    %163 = vector.extract_strided_slice %144 {offsets = [0, 0, 8], sizes = [2, 8, 8], strides = [1, 1, 1]} : vector<2x8x32xbf16> to vector<2x8x8xbf16>
    %164 = vector.extract_strided_slice %145 {offsets = [0, 0, 8], sizes = [2, 12, 8], strides = [1, 1, 1]} : vector<2x12x32xbf16> to vector<2x12x8xbf16>
    "tpu.trace_start"() <{level = 10 : i32, message = "bqd,bkd->bqk"}> : () -> ()
    %cst_62 = arith.constant dense<0.000000e+00> : vector<2x8x12xf32>
    %165 = tpu.matmul %163, %164, %cst_62 {dimension_numbers = #tpu.dot_dimension_numbers<[2], [2], [1], [1], [0, 0, 0, 1, 1, 1], [0], [0]>} : vector<2x8x8xbf16>, vector<2x12x8xbf16>, vector<2x8x12xf32> -> vector<2x8x12xf32>
    "tpu.trace_stop"() : () -> ()
    %cst_63 = arith.constant dense<0xFF800000> : vector<2x8xf32>
    %166 = vector.multi_reduction <maximumf>, %165, %cst_63 [2] : vector<2x8x12xf32> to vector<2x8xf32>
    %167 = vector.shape_cast %166 : vector<2x8xf32> to vector<2x8x1xf32>
    %168 = vector.broadcast %167 : vector<2x8x1xf32> to vector<2x8x12xf32>
    %169 = arith.subf %165, %168 : vector<2x8x12xf32>
    %170 = math.exp %169 : vector<2x8x12xf32>
    %cst_64 = arith.constant dense<0.000000e+00> : vector<2x8xf32>
    %171 = vector.multi_reduction <add>, %170, %cst_64 [2] : vector<2x8x12xf32> to vector<2x8xf32>
    %172 = vector.shape_cast %171 : vector<2x8xf32> to vector<2x8x1xf32>
    %173 = tpu.reciprocal %172 {approx = true} : vector<2x8x1xf32> -> vector<2x8x1xf32>
    %174 = vector.broadcast %173 : vector<2x8x1xf32> to vector<2x8x12xf32>
    %175 = arith.mulf %170, %174 : vector<2x8x12xf32>
    %176 = arith.truncf %175 : vector<2x8x12xf32> to vector<2x8x12xbf16>
    %177 = vector.extract_strided_slice %146 {offsets = [0, 0, 8], sizes = [2, 12, 8], strides = [1, 1, 1]} : vector<2x12x32xbf16> to vector<2x12x8xbf16>
    "tpu.trace_start"() <{level = 10 : i32, message = "bqk,bkd->bqd"}> : () -> ()
    %cst_65 = arith.constant dense<0.000000e+00> : vector<2x8x8xf32>
    %178 = tpu.matmul %176, %177, %cst_65 {dimension_numbers = #tpu.dot_dimension_numbers<[2], [1], [1], [2], [0, 0, 0, 1, 1, 2], [0], [0]>} : vector<2x8x12xbf16>, vector<2x12x8xbf16>, vector<2x8x8xf32> -> vector<2x8x8xf32>
    "tpu.trace_stop"() : () -> ()
    %179 = vector.extract_strided_slice %144 {offsets = [0, 0, 16], sizes = [2, 8, 8], strides = [1, 1, 1]} : vector<2x8x32xbf16> to vector<2x8x8xbf16>
    %180 = vector.extract_strided_slice %145 {offsets = [0, 0, 16], sizes = [2, 12, 8], strides = [1, 1, 1]} : vector<2x12x32xbf16> to vector<2x12x8xbf16>
    "tpu.trace_start"() <{level = 10 : i32, message = "bqd,bkd->bqk"}> : () -> ()
    %cst_66 = arith.constant dense<0.000000e+00> : vector<2x8x12xf32>
    %181 = tpu.matmul %179, %180, %cst_66 {dimension_numbers = #tpu.dot_dimension_numbers<[2], [2], [1], [1], [0, 0, 0, 1, 1, 1], [0], [0]>} : vector<2x8x8xbf16>, vector<2x12x8xbf16>, vector<2x8x12xf32> -> vector<2x8x12xf32>
    "tpu.trace_stop"() : () -> ()
    %cst_67 = arith.constant dense<0xFF800000> : vector<2x8xf32>
    %182 = vector.multi_reduction <maximumf>, %181, %cst_67 [2] : vector<2x8x12xf32> to vector<2x8xf32>
    %183 = vector.shape_cast %182 : vector<2x8xf32> to vector<2x8x1xf32>
    %184 = vector.broadcast %183 : vector<2x8x1xf32> to vector<2x8x12xf32>
    %185 = arith.subf %181, %184 : vector<2x8x12xf32>
    %186 = math.exp %185 : vector<2x8x12xf32>
    %cst_68 = arith.constant dense<0.000000e+00> : vector<2x8xf32>
    %187 = vector.multi_reduction <add>, %186, %cst_68 [2] : vector<2x8x12xf32> to vector<2x8xf32>
    %188 = vector.shape_cast %187 : vector<2x8xf32> to vector<2x8x1xf32>
    %189 = tpu.reciprocal %188 {approx = true} : vector<2x8x1xf32> -> vector<2x8x1xf32>
    %190 = vector.broadcast %189 : vector<2x8x1xf32> to vector<2x8x12xf32>
    %191 = arith.mulf %186, %190 : vector<2x8x12xf32>
    %192 = arith.truncf %191 : vector<2x8x12xf32> to vector<2x8x12xbf16>
    %193 = vector.extract_strided_slice %146 {offsets = [0, 0, 16], sizes = [2, 12, 8], strides = [1, 1, 1]} : vector<2x12x32xbf16> to vector<2x12x8xbf16>
    "tpu.trace_start"() <{level = 10 : i32, message = "bqk,bkd->bqd"}> : () -> ()
    %cst_69 = arith.constant dense<0.000000e+00> : vector<2x8x8xf32>
    %194 = tpu.matmul %192, %193, %cst_69 {dimension_numbers = #tpu.dot_dimension_numbers<[2], [1], [1], [2], [0, 0, 0, 1, 1, 2], [0], [0]>} : vector<2x8x12xbf16>, vector<2x12x8xbf16>, vector<2x8x8xf32> -> vector<2x8x8xf32>
    "tpu.trace_stop"() : () -> ()
    %195 = vector.extract_strided_slice %144 {offsets = [0, 0, 24], sizes = [2, 8, 8], strides = [1, 1, 1]} : vector<2x8x32xbf16> to vector<2x8x8xbf16>
    %196 = vector.extract_strided_slice %145 {offsets = [0, 0, 24], sizes = [2, 12, 8], strides = [1, 1, 1]} : vector<2x12x32xbf16> to vector<2x12x8xbf16>
    "tpu.trace_start"() <{level = 10 : i32, message = "bqd,bkd->bqk"}> : () -> ()
    %cst_70 = arith.constant dense<0.000000e+00> : vector<2x8x12xf32>
    %197 = tpu.matmul %195, %196, %cst_70 {dimension_numbers = #tpu.dot_dimension_numbers<[2], [2], [1], [1], [0, 0, 0, 1, 1, 1], [0], [0]>} : vector<2x8x8xbf16>, vector<2x12x8xbf16>, vector<2x8x12xf32> -> vector<2x8x12xf32>
    "tpu.trace_stop"() : () -> ()
    %cst_71 = arith.constant dense<0xFF800000> : vector<2x8xf32>
    %198 = vector.multi_reduction <maximumf>, %197, %cst_71 [2] : vector<2x8x12xf32> to vector<2x8xf32>
    %199 = vector.shape_cast %198 : vector<2x8xf32> to vector<2x8x1xf32>
    %200 = vector.broadcast %199 : vector<2x8x1xf32> to vector<2x8x12xf32>
    %201 = arith.subf %197, %200 : vector<2x8x12xf32>
    %202 = math.exp %201 : vector<2x8x12xf32>
    %cst_72 = arith.constant dense<0.000000e+00> : vector<2x8xf32>
    %203 = vector.multi_reduction <add>, %202, %cst_72 [2] : vector<2x8x12xf32> to vector<2x8xf32>
    %204 = vector.shape_cast %203 : vector<2x8xf32> to vector<2x8x1xf32>
    %205 = tpu.reciprocal %204 {approx = true} : vector<2x8x1xf32> -> vector<2x8x1xf32>
    %206 = vector.broadcast %205 : vector<2x8x1xf32> to vector<2x8x12xf32>
    %207 = arith.mulf %202, %206 : vector<2x8x12xf32>
    %208 = arith.truncf %207 : vector<2x8x12xf32> to vector<2x8x12xbf16>
    %209 = vector.extract_strided_slice %146 {offsets = [0, 0, 24], sizes = [2, 12, 8], strides = [1, 1, 1]} : vector<2x12x32xbf16> to vector<2x12x8xbf16>
    "tpu.trace_start"() <{level = 10 : i32, message = "bqk,bkd->bqd"}> : () -> ()
    %cst_73 = arith.constant dense<0.000000e+00> : vector<2x8x8xf32>
    %210 = tpu.matmul %208, %209, %cst_73 {dimension_numbers = #tpu.dot_dimension_numbers<[2], [1], [1], [2], [0, 0, 0, 1, 1, 2], [0], [0]>} : vector<2x8x12xbf16>, vector<2x12x8xbf16>, vector<2x8x8xf32> -> vector<2x8x8xf32>
    "tpu.trace_stop"() : () -> ()
    %211 = tpu.concatenate %162, %178, %194, %210 in 2 : vector<2x8x8xf32>, vector<2x8x8xf32>, vector<2x8x8xf32>, vector<2x8x8xf32> -> vector<2x8x32xf32>
    %212 = vector.shape_cast %211 : vector<2x8x32xf32> to vector<16x32xf32>
    %213 = arith.truncf %212 : vector<16x32xf32> to vector<16x32xbf16>
    %c0_74 = arith.constant 0 : index
    %c0_75 = arith.constant 0 : index
    %c0_76 = arith.constant 0 : index
    %214 = vector.load %arg11[%c0_74, %c0_75, %c0_76] : memref<1x32x32xbf16, #tpu.memory_space<vmem>>, vector<1x32x32xbf16>
    %215 = vector.shape_cast %214 : vector<1x32x32xbf16> to vector<32x32xbf16>
    %cst_77 = arith.constant dense<0.000000e+00> : vector<16x32xf32>
    %216 = tpu.matmul %213, %215, %cst_77 {dimension_numbers = #tpu.dot_dimension_numbers<[1], [0], [0], [1], [0, 0, 1, 1], [], []>} : vector<16x32xbf16>, vector<32x32xbf16>, vector<16x32xf32> -> vector<16x32xf32>
    %c0_78 = arith.constant 0 : index
    %c0_79 = arith.constant 0 : index
    %c0_80 = arith.constant 0 : index
    %217 = vector.load %arg12[%c0_78, %c0_79, %c0_80] : memref<1x1x32xf32, #tpu.memory_space<vmem>>, vector<1x1x32xf32>
    %218 = vector.shape_cast %217 : vector<1x1x32xf32> to vector<1x32xf32>
    %219 = vector.broadcast %218 : vector<1x32xf32> to vector<16x32xf32>
    %220 = arith.addf %216, %219 : vector<16x32xf32>
    %221 = arith.addf %123, %220 : vector<16x32xf32>
    %c0_81 = arith.constant 0 : index
    %c0_82 = arith.constant 0 : index
    %c0_83 = arith.constant 0 : index
    %222 = vector.load %arg19[%c0_81, %c0_82, %c0_83] : memref<1x1x32xf32, #tpu.memory_space<vmem>>, vector<1x1x32xf32>
    %223 = vector.shape_cast %222 : vector<1x1x32xf32> to vector<1x32xf32>
    %c0_84 = arith.constant 0 : index
    %c0_85 = arith.constant 0 : index
    %c0_86 = arith.constant 0 : index
    %224 = vector.load %arg20[%c0_84, %c0_85, %c0_86] : memref<1x1x32xf32, #tpu.memory_space<vmem>>, vector<1x1x32xf32>
    %225 = vector.shape_cast %224 : vector<1x1x32xf32> to vector<1x32xf32>
    %cst_87 = arith.constant dense<0.000000e+00> : vector<16xf32>
    %226 = vector.multi_reduction <add>, %221, %cst_87 [1] : vector<16x32xf32> to vector<16xf32>
    %227 = vector.shape_cast %226 : vector<16xf32> to vector<16x1xf32>
    %cst_88 = arith.constant 3.200000e+01 : f32
    %228 = vector.broadcast %cst_88 : f32 to vector<16x1xf32>
    %229 = arith.divf %227, %228 : vector<16x1xf32>
    %230 = vector.broadcast %229 : vector<16x1xf32> to vector<16x32xf32>
    %231 = arith.subf %221, %230 : vector<16x32xf32>
    %232 = arith.mulf %231, %231 : vector<16x32xf32>
    %cst_89 = arith.constant dense<0.000000e+00> : vector<16xf32>
    %233 = vector.multi_reduction <add>, %232, %cst_89 [1] : vector<16x32xf32> to vector<16xf32>
    %234 = vector.shape_cast %233 : vector<16xf32> to vector<16x1xf32>
    %cst_90 = arith.constant 3.200000e+01 : f32
    %235 = vector.broadcast %cst_90 : f32 to vector<16x1xf32>
    %236 = arith.divf %234, %235 : vector<16x1xf32>
    %237 = vector.broadcast %229 : vector<16x1xf32> to vector<16x32xf32>
    %238 = arith.subf %221, %237 : vector<16x32xf32>
    %cst_91 = arith.constant 9.99999974E-6 : f32
    %239 = vector.broadcast %cst_91 : f32 to vector<16x1xf32>
    %240 = arith.addf %236, %239 : vector<16x1xf32>
    %241 = math.rsqrt %240 : vector<16x1xf32>
    %242 = vector.broadcast %241 : vector<16x1xf32> to vector<16x32xf32>
    %243 = arith.mulf %238, %242 : vector<16x32xf32>
    %244 = vector.broadcast %223 : vector<1x32xf32> to vector<16x32xf32>
    %245 = arith.mulf %243, %244 : vector<16x32xf32>
    %246 = vector.broadcast %225 : vector<1x32xf32> to vector<16x32xf32>
    %247 = arith.addf %245, %246 : vector<16x32xf32>
    %248 = arith.truncf %247 : vector<16x32xf32> to vector<16x32xbf16>
    %c0_92 = arith.constant 0 : index
    %c0_93 = arith.constant 0 : index
    %c0_94 = arith.constant 0 : index
    %249 = vector.load %arg13[%c0_92, %c0_93, %c0_94] : memref<1x32x64xbf16, #tpu.memory_space<vmem>>, vector<1x32x64xbf16>
    %250 = vector.shape_cast %249 : vector<1x32x64xbf16> to vector<32x64xbf16>
    %cst_95 = arith.constant dense<0.000000e+00> : vector<16x64xf32>
    %251 = tpu.matmul %248, %250, %cst_95 {dimension_numbers = #tpu.dot_dimension_numbers<[1], [0], [0], [1], [0, 0, 1, 1], [], []>} : vector<16x32xbf16>, vector<32x64xbf16>, vector<16x64xf32> -> vector<16x64xf32>
    %c0_96 = arith.constant 0 : index
    %c0_97 = arith.constant 0 : index
    %c0_98 = arith.constant 0 : index
    %252 = vector.load %arg14[%c0_96, %c0_97, %c0_98] : memref<1x1x64xf32, #tpu.memory_space<vmem>>, vector<1x1x64xf32>
    %253 = vector.shape_cast %252 : vector<1x1x64xf32> to vector<1x64xf32>
    %254 = vector.broadcast %253 : vector<1x64xf32> to vector<16x64xf32>
    %255 = arith.addf %251, %254 : vector<16x64xf32>
    %cst_99 = arith.constant 0.000000e+00 : f32
    %256 = vector.broadcast %cst_99 : f32 to vector<16x64xf32>
    %257 = arith.maximumf %255, %256 : vector<16x64xf32>
    %258 = arith.truncf %257 : vector<16x64xf32> to vector<16x64xbf16>
    %c0_100 = arith.constant 0 : index
    %c0_101 = arith.constant 0 : index
    %c0_102 = arith.constant 0 : index
    %259 = vector.load %arg15[%c0_100, %c0_101, %c0_102] : memref<1x64x32xbf16, #tpu.memory_space<vmem>>, vector<1x64x32xbf16>
    %260 = vector.shape_cast %259 : vector<1x64x32xbf16> to vector<64x32xbf16>
    %cst_103 = arith.constant dense<0.000000e+00> : vector<16x32xf32>
    %261 = tpu.matmul %258, %260, %cst_103 {dimension_numbers = #tpu.dot_dimension_numbers<[1], [0], [0], [1], [0, 0, 1, 1], [], []>} : vector<16x64xbf16>, vector<64x32xbf16>, vector<16x32xf32> -> vector<16x32xf32>
    %c0_104 = arith.constant 0 : index
    %c0_105 = arith.constant 0 : index
    %c0_106 = arith.constant 0 : index
    %262 = vector.load %arg16[%c0_104, %c0_105, %c0_106] : memref<1x1x32xf32, #tpu.memory_space<vmem>>, vector<1x1x32xf32>
    %263 = vector.shape_cast %262 : vector<1x1x32xf32> to vector<1x32xf32>
    %264 = vector.broadcast %263 : vector<1x32xf32> to vector<16x32xf32>
    %265 = arith.addf %261, %264 : vector<16x32xf32>
    %266 = arith.addf %247, %265 : vector<16x32xf32>
    %c0_107 = arith.constant 0 : index
    %c0_108 = arith.constant 0 : index
    %c0_109 = arith.constant 0 : index
    %267 = vector.load %arg21[%c0_107, %c0_108, %c0_109] : memref<1x1x32xf32, #tpu.memory_space<vmem>>, vector<1x1x32xf32>
    %268 = vector.shape_cast %267 : vector<1x1x32xf32> to vector<1x32xf32>
    %c0_110 = arith.constant 0 : index
    %c0_111 = arith.constant 0 : index
    %c0_112 = arith.constant 0 : index
    %269 = vector.load %arg22[%c0_110, %c0_111, %c0_112] : memref<1x1x32xf32, #tpu.memory_space<vmem>>, vector<1x1x32xf32>
    %270 = vector.shape_cast %269 : vector<1x1x32xf32> to vector<1x32xf32>
    %cst_113 = arith.constant dense<0.000000e+00> : vector<16xf32>
    %271 = vector.multi_reduction <add>, %266, %cst_113 [1] : vector<16x32xf32> to vector<16xf32>
    %272 = vector.shape_cast %271 : vector<16xf32> to vector<16x1xf32>
    %cst_114 = arith.constant 3.200000e+01 : f32
    %273 = vector.broadcast %cst_114 : f32 to vector<16x1xf32>
    %274 = arith.divf %272, %273 : vector<16x1xf32>
    %275 = vector.broadcast %274 : vector<16x1xf32> to vector<16x32xf32>
    %276 = arith.subf %266, %275 : vector<16x32xf32>
    %277 = arith.mulf %276, %276 : vector<16x32xf32>
    %cst_115 = arith.constant dense<0.000000e+00> : vector<16xf32>
    %278 = vector.multi_reduction <add>, %277, %cst_115 [1] : vector<16x32xf32> to vector<16xf32>
    %279 = vector.shape_cast %278 : vector<16xf32> to vector<16x1xf32>
    %cst_116 = arith.constant 3.200000e+01 : f32
    %280 = vector.broadcast %cst_116 : f32 to vector<16x1xf32>
    %281 = arith.divf %279, %280 : vector<16x1xf32>
    %282 = vector.broadcast %274 : vector<16x1xf32> to vector<16x32xf32>
    %283 = arith.subf %266, %282 : vector<16x32xf32>
    %cst_117 = arith.constant 9.99999974E-6 : f32
    %284 = vector.broadcast %cst_117 : f32 to vector<16x1xf32>
    %285 = arith.addf %281, %284 : vector<16x1xf32>
    %286 = math.rsqrt %285 : vector<16x1xf32>
    %287 = vector.broadcast %286 : vector<16x1xf32> to vector<16x32xf32>
    %288 = arith.mulf %283, %287 : vector<16x32xf32>
    %289 = vector.broadcast %268 : vector<1x32xf32> to vector<16x32xf32>
    %290 = arith.mulf %288, %289 : vector<16x32xf32>
    %291 = vector.broadcast %270 : vector<1x32xf32> to vector<16x32xf32>
    %292 = arith.addf %290, %291 : vector<16x32xf32>
    %c0_118 = arith.constant 0 : index
    %c0_119 = arith.constant 0 : index
    %293 = vector.load %arg24[%c0_118, %c0_119] : memref<16x32xf32, #tpu.memory_space<vmem>>, vector<16x32xf32>
    tpu.vector_store %arg24[%c0_118, %c0_119], %292 {strides = array<i32>} : memref<16x32xf32, #tpu.memory_space<vmem>>, vector<16x32xf32>,
    %c0_120 = arith.constant 0 : index
    %c0_121 = arith.constant 0 : index
    %294 = vector.load %arg23[%c0_120, %c0_121] : memref<16x32xf32, #tpu.memory_space<vmem>>, vector<16x32xf32>
    tpu.vector_store %arg23[%c0_120, %c0_121], %292 {strides = array<i32>} : memref<16x32xf32, #tpu.memory_space<vmem>>, vector<16x32xf32>,
    return
  }
  func.func @transform_0(%arg0: i32) -> (i32, i32) {
    %c0_i32 = arith.constant 0 : i32
    %c0_i32_0 = arith.constant 0 : i32
    %c0_i32_1 = arith.constant 0 : i32
    return %c0_i32, %c0_i32_0 : i32, i32
  }
  func.func @transform_1(%arg0: i32) -> (i32, i32) {
    %c0_i32 = arith.constant 0 : i32
    %c0_i32_0 = arith.constant 0 : i32
    %c0_i32_1 = arith.constant 0 : i32
    return %c0_i32, %c0_i32_0 : i32, i32
  }
  func.func @transform_2(%arg0: i32) -> (i32, i32, i32) {
    %c0_i32 = arith.constant 0 : i32
    %c0_i32_0 = arith.constant 0 : i32
    %c0_i32_1 = arith.constant 0 : i32
    return %arg0, %c0_i32, %c0_i32_0 : i32, i32, i32
  }
  func.func @transform_3(%arg0: i32) -> (i32, i32, i32) {
    %c0_i32 = arith.constant 0 : i32
    %c0_i32_0 = arith.constant 0 : i32
    %c0_i32_1 = arith.constant 0 : i32
    return %arg0, %c0_i32, %c0_i32_0 : i32, i32, i32
  }
  func.func @transform_4(%arg0: i32) -> (i32, i32, i32) {
    %c0_i32 = arith.constant 0 : i32
    %c0_i32_0 = arith.constant 0 : i32
    %c0_i32_1 = arith.constant 0 : i32
    return %arg0, %c0_i32, %c0_i32_0 : i32, i32, i32
  }
  func.func @transform_5(%arg0: i32) -> (i32, i32, i32) {
    %c0_i32 = arith.constant 0 : i32
    %c0_i32_0 = arith.constant 0 : i32
    %c0_i32_1 = arith.constant 0 : i32
    return %arg0, %c0_i32, %c0_i32_0 : i32, i32, i32
  }
  func.func @transform_6(%arg0: i32) -> (i32, i32, i32) {
    %c0_i32 = arith.constant 0 : i32
    %c0_i32_0 = arith.constant 0 : i32
    %c0_i32_1 = arith.constant 0 : i32
    return %arg0, %c0_i32, %c0_i32_0 : i32, i32, i32
  }
  func.func @transform_7(%arg0: i32) -> (i32, i32, i32) {
    %c0_i32 = arith.constant 0 : i32
    %c0_i32_0 = arith.constant 0 : i32
    %c0_i32_1 = arith.constant 0 : i32
    return %arg0, %c0_i32, %c0_i32_0 : i32, i32, i32
  }
  func.func @transform_8(%arg0: i32) -> (i32, i32, i32) {
    %c0_i32 = arith.constant 0 : i32
    %c0_i32_0 = arith.constant 0 : i32
    %c0_i32_1 = arith.constant 0 : i32
    return %arg0, %c0_i32, %c0_i32_0 : i32, i32, i32
  }
  func.func @transform_9(%arg0: i32) -> (i32, i32, i32) {
    %c0_i32 = arith.constant 0 : i32
    %c0_i32_0 = arith.constant 0 : i32
    %c0_i32_1 = arith.constant 0 : i32
    return %arg0, %c0_i32, %c0_i32_0 : i32, i32, i32
  }
  func.func @transform_10(%arg0: i32) -> (i32, i32, i32) {
    %c0_i32 = arith.constant 0 : i32
    %c0_i32_0 = arith.constant 0 : i32
    %c0_i32_1 = arith.constant 0 : i32
    return %arg0, %c0_i32, %c0_i32_0 : i32, i32, i32
  }
  func.func @transform_11(%arg0: i32) -> (i32, i32, i32) {
    %c0_i32 = arith.constant 0 : i32
    %c0_i32_0 = arith.constant 0 : i32
    %c0_i32_1 = arith.constant 0 : i32
    return %arg0, %c0_i32, %c0_i32_0 : i32, i32, i32
  }
  func.func @transform_12(%arg0: i32) -> (i32, i32, i32) {
    %c0_i32 = arith.constant 0 : i32
    %c0_i32_0 = arith.constant 0 : i32
    %c0_i32_1 = arith.constant 0 : i32
    return %arg0, %c0_i32, %c0_i32_0 : i32, i32, i32
  }
  func.func @transform_13(%arg0: i32) -> (i32, i32, i32) {
    %c0_i32 = arith.constant 0 : i32
    %c0_i32_0 = arith.constant 0 : i32
    %c0_i32_1 = arith.constant 0 : i32
    return %arg0, %c0_i32, %c0_i32_0 : i32, i32, i32
  }
  func.func @transform_14(%arg0: i32) -> (i32, i32, i32) {
    %c0_i32 = arith.constant 0 : i32
    %c0_i32_0 = arith.constant 0 : i32
    %c0_i32_1 = arith.constant 0 : i32
    return %arg0, %c0_i32, %c0_i32_0 : i32, i32, i32
  }
  func.func @transform_15(%arg0: i32) -> (i32, i32, i32) {
    %c0_i32 = arith.constant 0 : i32
    %c0_i32_0 = arith.constant 0 : i32
    %c0_i32_1 = arith.constant 0 : i32
    return %arg0, %c0_i32, %c0_i32_0 : i32, i32, i32
  }
  func.func @transform_16(%arg0: i32) -> (i32, i32, i32) {
    %c0_i32 = arith.constant 0 : i32
    %c0_i32_0 = arith.constant 0 : i32
    %c0_i32_1 = arith.constant 0 : i32
    return %arg0, %c0_i32, %c0_i32_0 : i32, i32, i32
  }
  func.func @transform_17(%arg0: i32) -> (i32, i32, i32) {
    %c0_i32 = arith.constant 0 : i32
    %c0_i32_0 = arith.constant 0 : i32
    %c0_i32_1 = arith.constant 0 : i32
    return %arg0, %c0_i32, %c0_i32_0 : i32, i32, i32
  }
  func.func @transform_18(%arg0: i32) -> (i32, i32, i32) {
    %c0_i32 = arith.constant 0 : i32
    %c0_i32_0 = arith.constant 0 : i32
    %c0_i32_1 = arith.constant 0 : i32
    return %arg0, %c0_i32, %c0_i32_0 : i32, i32, i32
  }
  func.func @transform_19(%arg0: i32) -> (i32, i32, i32) {
    %c0_i32 = arith.constant 0 : i32
    %c0_i32_0 = arith.constant 0 : i32
    %c0_i32_1 = arith.constant 0 : i32
    return %arg0, %c0_i32, %c0_i32_0 : i32, i32, i32
  }
  func.func @transform_20(%arg0: i32) -> (i32, i32, i32) {
    %c0_i32 = arith.constant 0 : i32
    %c0_i32_0 = arith.constant 0 : i32
    %c0_i32_1 = arith.constant 0 : i32
    return %arg0, %c0_i32, %c0_i32_0 : i32, i32, i32
  }
  func.func @transform_21(%arg0: i32) -> (i32, i32, i32) {
    %c0_i32 = arith.constant 0 : i32
    %c0_i32_0 = arith.constant 0 : i32
    %c0_i32_1 = arith.constant 0 : i32
    return %arg0, %c0_i32, %c0_i32_0 : i32, i32, i32
  }
  func.func @transform_22(%arg0: i32) -> (i32, i32) {
    %c0_i32 = arith.constant 0 : i32
    %c0_i32_0 = arith.constant 0 : i32
    %c0_i32_1 = arith.constant 0 : i32
    return %c0_i32, %c0_i32_0 : i32, i32
  }
}

</mosaic_0001>

<llo_original>
// kernel: transformer_decoder.1
$region0: #{transformer_decoder.1}
  #allocation0 [shape = 'u32[]', space=smem, size = 0x4, offset = 0x4, fixed_abs, tag = 'smem constant byte address 0x4 - core index']
  #allocation1 [shape = 'u32[144,128]{1,0:T(1,128)}', space=vmem, size = 0x12000, scoped, tag = 'internal scratch']
  #allocation2 [shape = 'f32[16,32]{1,0:T(8,128)}', space=vmem, size = 0x2000, scoped, tag = 'scratch operand']
  %s0 = inlined_call_operand.hbm [shape: f32[16,32], index: 0, kind: input, shape index: {}]
  %s1 = inlined_call_operand.vmem [shape: f32[24,32], index: 1, kind: input, shape index: {}]
  %s2 = inlined_call_operand.vmem [shape: bf16[2,32,96], index: 2, kind: input, shape index: {}]
  %s3 = inlined_call_operand.vmem [shape: f32[2,1,96], index: 3, kind: input, shape index: {}]
  %s4 = inlined_call_operand.vmem [shape: bf16[2,32,32], index: 4, kind: input, shape index: {}]
  %s5 = inlined_call_operand.hbm [shape: f32[2,1,32], index: 5, kind: input, shape index: {}]
  %s6 = inlined_call_operand.vmem [shape: bf16[2,32,32], index: 6, kind: input, shape index: {}]
  %s7 = inlined_call_operand.hbm [shape: f32[2,1,32], index: 7, kind: input, shape index: {}]
  %s8 = inlined_call_operand.vmem [shape: bf16[2,32,64], index: 8, kind: input, shape index: {}]
  %s9 = inlined_call_operand.hbm [shape: f32[2,1,64], index: 9, kind: input, shape index: {}]
  %s10 = inlined_call_operand.vmem [shape: bf16[2,32,32], index: 10, kind: input, shape index: {}]
  %s11 = inlined_call_operand.vmem [shape: f32[2,1,32], index: 11, kind: input, shape index: {}]
  %s12 = inlined_call_operand.vmem [shape: bf16[2,32,64], index: 12, kind: input, shape index: {}]
  %s13 = inlined_call_operand.vmem [shape: f32[2,1,64], index: 13, kind: input, shape index: {}]
  %s14 = inlined_call_operand.vmem [shape: bf16[2,64,32], index: 14, kind: input, shape index: {}]
  %s15 = inlined_call_operand.vmem [shape: f32[2,1,32], index: 15, kind: input, shape index: {}]
  %s16 = inlined_call_operand.vmem [shape: f32[2,1,32], index: 16, kind: input, shape index: {}]
  %s17 = inlined_call_operand.vmem [shape: f32[2,1,32], index: 17, kind: input, shape index: {}]
  %s18 = inlined_call_operand.vmem [shape: f32[2,1,32], index: 18, kind: input, shape index: {}]
  %s19 = inlined_call_operand.vmem [shape: f32[2,1,32], index: 19, kind: input, shape index: {}]
  %s20 = inlined_call_operand.vmem [shape: f32[2,1,32], index: 20, kind: input, shape index: {}]
  %s21 = inlined_call_operand.vmem [shape: f32[2,1,32], index: 21, kind: input, shape index: {}]
  %s22 = inlined_call_operand.hbm [shape: f32[16,32], index: 22, kind: output, shape index: {}]
  %s23 = sld [smem:[#allocation0]]
  $region141: #{transformer_decoder.1} parent=0
    _
  %s25 = ssub.s32 1, %s23
  %s26 = scalar_select 0, %s25, %s23
  $region1: #{transformer_decoder.1} parent=0
    #allocation3 [shape = 'u8[8192]{0}', space=vmem, size = 0x2000, scoped, tag = 'input window, operand 0, single buffered']
    #allocation4 [shape = 's32[2]{0}', space=sflag, size = 0x8, scoped, tag = 'scoped memory for transformer_decoder.1']
    #allocation5 [shape = 's32[2]{0}', space=sflag, size = 0x8, scoped, tag = 'scoped memory for transformer_decoder.1']
    #allocation6 [shape = 'u8[1024]{0}', space=vmem, size = 0x400, scoped, tag = 'input window, operand 5']
    #allocation7 [shape = 's32[2]{0}', space=sflag, size = 0x8, scoped, tag = 'scoped memory for transformer_decoder.1']
    #allocation8 [shape = 'u8[1024]{0}', space=vmem, size = 0x400, scoped, tag = 'input window, operand 7']
    #allocation9 [shape = 'u8[1024]{0}', space=vmem, size = 0x400, scoped, tag = 'input window, operand 9']
    #allocation10 [shape = 's32[2]{0}', space=sflag, size = 0x8, scoped, tag = 'scoped memory for transformer_decoder.1']
    #allocation11 [shape = 'u8[8192]{0}', space=vmem, size = 0x2000, scoped, tag = 'output window, operand 0, single buffered']
    %27 = vsyncpa [#allocation4], 0
    %28 = vsyncpa [#allocation7], 0
    %s29 = scalar_lea.sflag [#allocation7], 1
    %30 = vsyncpa %s29, 0
    %31 = vsyncpa [#allocation10], 0
    %s32 = scalar_lea.sflag [#allocation10], 1
    %33 = vsyncpa %s32, 0
    %34 = vsyncpa [#allocation5], 0
    loop: start=0, step=1, limit=4
    $region2: #{transformer_decoder.1} parent=1 // loop_pre_header
      _
    $region3: #{transformer_decoder.1} parent=1 // loop_header
      %s36 = sphi 0, %s40
      %p37 = scmp.ge.s32.totalorder %s36, 4
      %s44 = sphi 0, %s44
      %s46 = sphi 0, %s44
      %s47 = sphi 0, %s46
      %s61 = sphi 0, %s47
      %s65 = sphi 0, %s65
      %s67 = sphi 0, %s65
      %s68 = sphi 0, %s67
      %s82 = sphi 0, %s68
      %s88 = sphi 0, %s90
      %s91 = sphi 0, %s88
      %s92 = sphi 0, %s91
      %s108 = sphi 0, %s92
      %s114 = sphi 0, %s116
      %s117 = sphi 0, %s114
      %s118 = sphi 0, %s117
      %s134 = sphi 0, %s118
      %s140 = sphi 0, %s142
      %s143 = sphi 0, %s140
      %s144 = sphi 0, %s143
      %s160 = sphi 0, %s144
      %s166 = sphi 0, %s168
      %s169 = sphi 0, %s166
      %s170 = sphi 0, %s169
      %s186 = sphi 0, %s170
      %s192 = sphi 0, %s194
      %s195 = sphi 0, %s192
      %s196 = sphi 0, %s195
      %s212 = sphi 0, %s196
      %s218 = sphi 0, %s220
      %s221 = sphi 0, %s218
      %s222 = sphi 0, %s221
      %s238 = sphi 0, %s222
      %s244 = sphi 0, %s246
      %s247 = sphi 0, %s244
      %s248 = sphi 0, %s247
      %s264 = sphi 0, %s248
      %s270 = sphi 0, %s272
      %s273 = sphi 0, %s270
      %s274 = sphi 0, %s273
      %s290 = sphi 0, %s274
      %s296 = sphi 0, %s298
      %s299 = sphi 0, %s296
      %s300 = sphi 0, %s299
      %s316 = sphi 0, %s300
      %s322 = sphi 0, %s324
      %s325 = sphi 0, %s322
      %s326 = sphi 0, %s325
      %s342 = sphi 0, %s326
      %s348 = sphi 0, %s350
      %s351 = sphi 0, %s348
      %s352 = sphi 0, %s351
      %s368 = sphi 0, %s352
      %s374 = sphi 0, %s376
      %s377 = sphi 0, %s374
      %s378 = sphi 0, %s377
      %s394 = sphi 0, %s378
      %s400 = sphi 0, %s402
      %s403 = sphi 0, %s400
      %s404 = sphi 0, %s403
      %s420 = sphi 0, %s404
      %s426 = sphi 0, %s428
      %s429 = sphi 0, %s426
      %s430 = sphi 0, %s429
      %s446 = sphi 0, %s430
      %s452 = sphi 0, %s454
      %s455 = sphi 0, %s452
      %s456 = sphi 0, %s455
      %s472 = sphi 0, %s456
      %s478 = sphi 0, %s480
      %s481 = sphi 0, %s478
      %s482 = sphi 0, %s481
      %s498 = sphi 0, %s482
      %s504 = sphi 0, %s506
      %s507 = sphi 0, %s504
      %s508 = sphi 0, %s507
      %s524 = sphi 0, %s508
      %s530 = sphi 0, %s532
      %s533 = sphi 0, %s530
      %s534 = sphi 0, %s533
      %s550 = sphi 0, %s534
      %s556 = sphi 0, %s558
      %s559 = sphi 0, %s556
      %s560 = sphi 0, %s559
      %s576 = sphi 0, %s560
      %s582 = sphi 0, %s584
      %s585 = sphi 0, %s582
      %s586 = sphi 0, %s585
      %s602 = sphi 0, %s586
      %s606 = sphi 0, %s606
      %s608 = sphi 0, %s606
      %s609 = sphi 0, %s608
      %s623 = sphi 0, %s609
    $region4: #{transformer_decoder.1} parent=1 // loop_header_branch
      %39 = sbr.rel (%p37) target = $region8
    $region5: #{transformer_decoder.1} parent=1 // loop_body
      %s41 = ssub.s32 %s36, 1
      %s42 = ssub.s32 %s36, 2
      %s43 = sadd.s32 %s36, 1
      %s45 = sadd.s32 %s44, 1
      %p48 = scmp.eq.s32.totalorder %s36, 1
      %p49 = scmp.ne.s32.totalorder %s44, %s46
      %p50 = scmp.eq.s32.totalorder %s36, 0
      %p51 = por %p49, %p50
      %p52 = scmp.ne.s32.totalorder %s44, %s46
      %p53 = scmp.eq.s32.totalorder %s41, 1
      %p54 = por %p52, %p53
      %p55 = scmp.ne.s32.totalorder %s46, %s47
      %p56 = scmp.eq.s32.totalorder %s41, 0
      %p57 = por %p55, %p56
      %p58 = scmp.ne.s32.totalorder %s46, %s47
      %p59 = scmp.eq.s32.totalorder %s42, 1
      %p60 = por %p58, %p59
      %p62 = scmp.ne.s32.totalorder %s47, %s61
      %p63 = scmp.eq.s32.totalorder %s42, 0
      %p64 = por %p62, %p63
      %s66 = sadd.s32 %s65, 1
      %p69 = scmp.eq.s32.totalorder %s36, 1
      %p70 = scmp.ne.s32.totalorder %s65, %s67
      %p71 = scmp.eq.s32.totalorder %s36, 0
      %p72 = por %p70, %p71
      %p73 = scmp.ne.s32.totalorder %s65, %s67
      %p74 = scmp.eq.s32.totalorder %s41, 1
      %p75 = por %p73, %p74
      %p76 = scmp.ne.s32.totalorder %s67, %s68
      %p77 = scmp.eq.s32.totalorder %s41, 0
      %p78 = por %p76, %p77
      %p79 = scmp.ne.s32.totalorder %s67, %s68
      %p80 = scmp.eq.s32.totalorder %s42, 1
      %p81 = por %p79, %p80
      %p83 = scmp.ne.s32.totalorder %s68, %s82
      %p84 = scmp.eq.s32.totalorder %s42, 0
      %p85 = por %p83, %p84
      %s86 = ssub.s32 %s36, %s43
      %p87 = scmp.eq.s32.totalorder %s86, 0
      %s89 = sadd.s32 %s88, 1
      %s90 = scalar_select %p87, %s88, %s89
      %p93 = pneg %p87
      %p94 = scmp.eq.s32.totalorder %s36, 1
      %p95 = por %p93, %p94
      %p96 = scmp.ne.s32.totalorder %s88, %s91
      %p97 = scmp.eq.s32.totalorder %s36, 0
      %p98 = por %p96, %p97
      %p99 = scmp.ne.s32.totalorder %s88, %s91
      %p100 = scmp.eq.s32.totalorder %s41, 1
      %p101 = por %p99, %p100
      %p102 = scmp.ne.s32.totalorder %s91, %s92
      %p103 = scmp.eq.s32.totalorder %s41, 0
      %p104 = por %p102, %p103
      %p105 = scmp.ne.s32.totalorder %s91, %s92
      %p106 = scmp.eq.s32.totalorder %s42, 1
      %p107 = por %p105, %p106
      %p109 = scmp.ne.s32.totalorder %s92, %s108
      %p110 = scmp.eq.s32.totalorder %s42, 0
      %p111 = por %p109, %p110
      %s112 = ssub.s32 %s36, %s43
      %p113 = scmp.eq.s32.totalorder %s112, 0
      %s115 = sadd.s32 %s114, 1
      %s116 = scalar_select %p113, %s114, %s115
      %p119 = pneg %p113
      %p120 = scmp.eq.s32.totalorder %s36, 1
      %p121 = por %p119, %p120
      %p122 = scmp.ne.s32.totalorder %s114, %s117
      %p123 = scmp.eq.s32.totalorder %s36, 0
      %p124 = por %p122, %p123
      %p125 = scmp.ne.s32.totalorder %s114, %s117
      %p126 = scmp.eq.s32.totalorder %s41, 1
      %p127 = por %p125, %p126
      %p128 = scmp.ne.s32.totalorder %s117, %s118
      %p129 = scmp.eq.s32.totalorder %s41, 0
      %p130 = por %p128, %p129
      %p131 = scmp.ne.s32.totalorder %s117, %s118
      %p132 = scmp.eq.s32.totalorder %s42, 1
      %p133 = por %p131, %p132
      %p135 = scmp.ne.s32.totalorder %s118, %s134
      %p136 = scmp.eq.s32.totalorder %s42, 0
      %p137 = por %p135, %p136
      %s138 = ssub.s32 %s36, %s43
      %p139 = scmp.eq.s32.totalorder %s138, 0
      %s141 = sadd.s32 %s140, 1
      %s142 = scalar_select %p139, %s140, %s141
      %p145 = pneg %p139
      %p146 = scmp.eq.s32.totalorder %s36, 1
      %p147 = por %p145, %p146
      %p148 = scmp.ne.s32.totalorder %s140, %s143
      %p149 = scmp.eq.s32.totalorder %s36, 0
      %p150 = por %p148, %p149
      %p151 = scmp.ne.s32.totalorder %s140, %s143
      %p152 = scmp.eq.s32.totalorder %s41, 1
      %p153 = por %p151, %p152
      %p154 = scmp.ne.s32.totalorder %s143, %s144
      %p155 = scmp.eq.s32.totalorder %s41, 0
      %p156 = por %p154, %p155
      %p157 = scmp.ne.s32.totalorder %s143, %s144
      %p158 = scmp.eq.s32.totalorder %s42, 1
      %p159 = por %p157, %p158
      %p161 = scmp.ne.s32.totalorder %s144, %s160
      %p162 = scmp.eq.s32.totalorder %s42, 0
      %p163 = por %p161, %p162
      %s164 = ssub.s32 %s36, %s43
      %p165 = scmp.eq.s32.totalorder %s164, 0
      %s167 = sadd.s32 %s166, 1
      %s168 = scalar_select %p165, %s166, %s167
      %p171 = pneg %p165
      %p172 = scmp.eq.s32.totalorder %s36, 1
      %p173 = por %p171, %p172
      %p174 = scmp.ne.s32.totalorder %s166, %s169
      %p175 = scmp.eq.s32.totalorder %s36, 0
      %p176 = por %p174, %p175
      %p177 = scmp.ne.s32.totalorder %s166, %s169
      %p178 = scmp.eq.s32.totalorder %s41, 1
      %p179 = por %p177, %p178
      %p180 = scmp.ne.s32.totalorder %s169, %s170
      %p181 = scmp.eq.s32.totalorder %s41, 0
      %p182 = por %p180, %p181
      %p183 = scmp.ne.s32.totalorder %s169, %s170
      %p184 = scmp.eq.s32.totalorder %s42, 1
      %p185 = por %p183, %p184
      %p187 = scmp.ne.s32.totalorder %s170, %s186
      %p188 = scmp.eq.s32.totalorder %s42, 0
      %p189 = por %p187, %p188
      %s190 = ssub.s32 %s36, %s43
      %p191 = scmp.eq.s32.totalorder %s190, 0
      %s193 = sadd.s32 %s192, 1
      %s194 = scalar_select %p191, %s192, %s193
      %p197 = pneg %p191
      %p198 = scmp.eq.s32.totalorder %s36, 1
      %p199 = por %p197, %p198
      %p200 = scmp.ne.s32.totalorder %s192, %s195
      %p201 = scmp.eq.s32.totalorder %s36, 0
      %p202 = por %p200, %p201
      %p203 = scmp.ne.s32.totalorder %s192, %s195
      %p204 = scmp.eq.s32.totalorder %s41, 1
      %p205 = por %p203, %p204
      %p206 = scmp.ne.s32.totalorder %s195, %s196
      %p207 = scmp.eq.s32.totalorder %s41, 0
      %p208 = por %p206, %p207
      %p209 = scmp.ne.s32.totalorder %s195, %s196
      %p210 = scmp.eq.s32.totalorder %s42, 1
      %p211 = por %p209, %p210
      %p213 = scmp.ne.s32.totalorder %s196, %s212
      %p214 = scmp.eq.s32.totalorder %s42, 0
      %p215 = por %p213, %p214
      %s216 = ssub.s32 %s36, %s43
      %p217 = scmp.eq.s32.totalorder %s216, 0
      %s219 = sadd.s32 %s218, 1
      %s220 = scalar_select %p217, %s218, %s219
      %p223 = pneg %p217
      %p224 = scmp.eq.s32.totalorder %s36, 1
      %p225 = por %p223, %p224
      %p226 = scmp.ne.s32.totalorder %s218, %s221
      %p227 = scmp.eq.s32.totalorder %s36, 0
      %p228 = por %p226, %p227
      %p229 = scmp.ne.s32.totalorder %s218, %s221
      %p230 = scmp.eq.s32.totalorder %s41, 1
      %p231 = por %p229, %p230
      %p232 = scmp.ne.s32.totalorder %s221, %s222
      %p233 = scmp.eq.s32.totalorder %s41, 0
      %p234 = por %p232, %p233
      %p235 = scmp.ne.s32.totalorder %s221, %s222
      %p236 = scmp.eq.s32.totalorder %s42, 1
      %p237 = por %p235, %p236
      %p239 = scmp.ne.s32.totalorder %s222, %s238
      %p240 = scmp.eq.s32.totalorder %s42, 0
      %p241 = por %p239, %p240
      %s242 = ssub.s32 %s36, %s43
      %p243 = scmp.eq.s32.totalorder %s242, 0
      %s245 = sadd.s32 %s244, 1
      %s246 = scalar_select %p243, %s244, %s245
      %p249 = pneg %p243
      %p250 = scmp.eq.s32.totalorder %s36, 1
      %p251 = por %p249, %p250
      %p252 = scmp.ne.s32.totalorder %s244, %s247
      %p253 = scmp.eq.s32.totalorder %s36, 0
      %p254 = por %p252, %p253
      %p255 = scmp.ne.s32.totalorder %s244, %s247
      %p256 = scmp.eq.s32.totalorder %s41, 1
      %p257 = por %p255, %p256
      %p258 = scmp.ne.s32.totalorder %s247, %s248
      %p259 = scmp.eq.s32.totalorder %s41, 0
      %p260 = por %p258, %p259
      %p261 = scmp.ne.s32.totalorder %s247, %s248
      %p262 = scmp.eq.s32.totalorder %s42, 1
      %p263 = por %p261, %p262
      %p265 = scmp.ne.s32.totalorder %s248, %s264
      %p266 = scmp.eq.s32.totalorder %s42, 0
      %p267 = por %p265, %p266
      %s268 = ssub.s32 %s36, %s43
      %p269 = scmp.eq.s32.totalorder %s268, 0
      %s271 = sadd.s32 %s270, 1
      %s272 = scalar_select %p269, %s270, %s271
      %p275 = pneg %p269
      %p276 = scmp.eq.s32.totalorder %s36, 1
      %p277 = por %p275, %p276
      %p278 = scmp.ne.s32.totalorder %s270, %s273
      %p279 = scmp.eq.s32.totalorder %s36, 0
      %p280 = por %p278, %p279
      %p281 = scmp.ne.s32.totalorder %s270, %s273
      %p282 = scmp.eq.s32.totalorder %s41, 1
      %p283 = por %p281, %p282
      %p284 = scmp.ne.s32.totalorder %s273, %s274
      %p285 = scmp.eq.s32.totalorder %s41, 0
      %p286 = por %p284, %p285
      %p287 = scmp.ne.s32.totalorder %s273, %s274
      %p288 = scmp.eq.s32.totalorder %s42, 1
      %p289 = por %p287, %p288
      %p291 = scmp.ne.s32.totalorder %s274, %s290
      %p292 = scmp.eq.s32.totalorder %s42, 0
      %p293 = por %p291, %p292
      %s294 = ssub.s32 %s36, %s43
      %p295 = scmp.eq.s32.totalorder %s294, 0
      %s297 = sadd.s32 %s296, 1
      %s298 = scalar_select %p295, %s296, %s297
      %p301 = pneg %p295
      %p302 = scmp.eq.s32.totalorder %s36, 1
      %p303 = por %p301, %p302
      %p304 = scmp.ne.s32.totalorder %s296, %s299
      %p305 = scmp.eq.s32.totalorder %s36, 0
      %p306 = por %p304, %p305
      %p307 = scmp.ne.s32.totalorder %s296, %s299
      %p308 = scmp.eq.s32.totalorder %s41, 1
      %p309 = por %p307, %p308
      %p310 = scmp.ne.s32.totalorder %s299, %s300
      %p311 = scmp.eq.s32.totalorder %s41, 0
      %p312 = por %p310, %p311
      %p313 = scmp.ne.s32.totalorder %s299, %s300
      %p314 = scmp.eq.s32.totalorder %s42, 1
      %p315 = por %p313, %p314
      %p317 = scmp.ne.s32.totalorder %s300, %s316
      %p318 = scmp.eq.s32.totalorder %s42, 0
      %p319 = por %p317, %p318
      %s320 = ssub.s32 %s36, %s43
      %p321 = scmp.eq.s32.totalorder %s320, 0
      %s323 = sadd.s32 %s322, 1
      %s324 = scalar_select %p321, %s322, %s323
      %p327 = pneg %p321
      %p328 = scmp.eq.s32.totalorder %s36, 1
      %p329 = por %p327, %p328
      %p330 = scmp.ne.s32.totalorder %s322, %s325
      %p331 = scmp.eq.s32.totalorder %s36, 0
      %p332 = por %p330, %p331
      %p333 = scmp.ne.s32.totalorder %s322, %s325
      %p334 = scmp.eq.s32.totalorder %s41, 1
      %p335 = por %p333, %p334
      %p336 = scmp.ne.s32.totalorder %s325, %s326
      %p337 = scmp.eq.s32.totalorder %s41, 0
      %p338 = por %p336, %p337
      %p339 = scmp.ne.s32.totalorder %s325, %s326
      %p340 = scmp.eq.s32.totalorder %s42, 1
      %p341 = por %p339, %p340
      %p343 = scmp.ne.s32.totalorder %s326, %s342
      %p344 = scmp.eq.s32.totalorder %s42, 0
      %p345 = por %p343, %p344
      %s346 = ssub.s32 %s36, %s43
      %p347 = scmp.eq.s32.totalorder %s346, 0
      %s349 = sadd.s32 %s348, 1
      %s350 = scalar_select %p347, %s348, %s349
      %p353 = pneg %p347
      %p354 = scmp.eq.s32.totalorder %s36, 1
      %p355 = por %p353, %p354
      %p356 = scmp.ne.s32.totalorder %s348, %s351
      %p357 = scmp.eq.s32.totalorder %s36, 0
      %p358 = por %p356, %p357
      %p359 = scmp.ne.s32.totalorder %s348, %s351
      %p360 = scmp.eq.s32.totalorder %s41, 1
      %p361 = por %p359, %p360
      %p362 = scmp.ne.s32.totalorder %s351, %s352
      %p363 = scmp.eq.s32.totalorder %s41, 0
      %p364 = por %p362, %p363
      %p365 = scmp.ne.s32.totalorder %s351, %s352
      %p366 = scmp.eq.s32.totalorder %s42, 1
      %p367 = por %p365, %p366
      %p369 = scmp.ne.s32.totalorder %s352, %s368
      %p370 = scmp.eq.s32.totalorder %s42, 0
      %p371 = por %p369, %p370
      %s372 = ssub.s32 %s36, %s43
      %p373 = scmp.eq.s32.totalorder %s372, 0
      %s375 = sadd.s32 %s374, 1
      %s376 = scalar_select %p373, %s374, %s375
      %p379 = pneg %p373
      %p380 = scmp.eq.s32.totalorder %s36, 1
      %p381 = por %p379, %p380
      %p382 = scmp.ne.s32.totalorder %s374, %s377
      %p383 = scmp.eq.s32.totalorder %s36, 0
      %p384 = por %p382, %p383
      %p385 = scmp.ne.s32.totalorder %s374, %s377
      %p386 = scmp.eq.s32.totalorder %s41, 1
      %p387 = por %p385, %p386
      %p388 = scmp.ne.s32.totalorder %s377, %s378
      %p389 = scmp.eq.s32.totalorder %s41, 0
      %p390 = por %p388, %p389
      %p391 = scmp.ne.s32.totalorder %s377, %s378
      %p392 = scmp.eq.s32.totalorder %s42, 1
      %p393 = por %p391, %p392
      %p395 = scmp.ne.s32.totalorder %s378, %s394
      %p396 = scmp.eq.s32.totalorder %s42, 0
      %p397 = por %p395, %p396
      %s398 = ssub.s32 %s36, %s43
      %p399 = scmp.eq.s32.totalorder %s398, 0
      %s401 = sadd.s32 %s400, 1
      %s402 = scalar_select %p399, %s400, %s401
      %p405 = pneg %p399
      %p406 = scmp.eq.s32.totalorder %s36, 1
      %p407 = por %p405, %p406
      %p408 = scmp.ne.s32.totalorder %s400, %s403
      %p409 = scmp.eq.s32.totalorder %s36, 0
      %p410 = por %p408, %p409
      %p411 = scmp.ne.s32.totalorder %s400, %s403
      %p412 = scmp.eq.s32.totalorder %s41, 1
      %p413 = por %p411, %p412
      %p414 = scmp.ne.s32.totalorder %s403, %s404
      %p415 = scmp.eq.s32.totalorder %s41, 0
      %p416 = por %p414, %p415
      %p417 = scmp.ne.s32.totalorder %s403, %s404
      %p418 = scmp.eq.s32.totalorder %s42, 1
      %p419 = por %p417, %p418
      %p421 = scmp.ne.s32.totalorder %s404, %s420
      %p422 = scmp.eq.s32.totalorder %s42, 0
      %p423 = por %p421, %p422
      %s424 = ssub.s32 %s36, %s43
      %p425 = scmp.eq.s32.totalorder %s424, 0
      %s427 = sadd.s32 %s426, 1
      %s428 = scalar_select %p425, %s426, %s427
      %p431 = pneg %p425
      %p432 = scmp.eq.s32.totalorder %s36, 1
      %p433 = por %p431, %p432
      %p434 = scmp.ne.s32.totalorder %s426, %s429
      %p435 = scmp.eq.s32.totalorder %s36, 0
      %p436 = por %p434, %p435
      %p437 = scmp.ne.s32.totalorder %s426, %s429
      %p438 = scmp.eq.s32.totalorder %s41, 1
      %p439 = por %p437, %p438
      %p440 = scmp.ne.s32.totalorder %s429, %s430
      %p441 = scmp.eq.s32.totalorder %s41, 0
      %p442 = por %p440, %p441
      %p443 = scmp.ne.s32.totalorder %s429, %s430
      %p444 = scmp.eq.s32.totalorder %s42, 1
      %p445 = por %p443, %p444
      %p447 = scmp.ne.s32.totalorder %s430, %s446
      %p448 = scmp.eq.s32.totalorder %s42, 0
      %p449 = por %p447, %p448
      %s450 = ssub.s32 %s36, %s43
      %p451 = scmp.eq.s32.totalorder %s450, 0
      %s453 = sadd.s32 %s452, 1
      %s454 = scalar_select %p451, %s452, %s453
      %p457 = pneg %p451
      %p458 = scmp.eq.s32.totalorder %s36, 1
      %p459 = por %p457, %p458
      %p460 = scmp.ne.s32.totalorder %s452, %s455
      %p461 = scmp.eq.s32.totalorder %s36, 0
      %p462 = por %p460, %p461
      %p463 = scmp.ne.s32.totalorder %s452, %s455
      %p464 = scmp.eq.s32.totalorder %s41, 1
      %p465 = por %p463, %p464
      %p466 = scmp.ne.s32.totalorder %s455, %s456
      %p467 = scmp.eq.s32.totalorder %s41, 0
      %p468 = por %p466, %p467
      %p469 = scmp.ne.s32.totalorder %s455, %s456
      %p470 = scmp.eq.s32.totalorder %s42, 1
      %p471 = por %p469, %p470
      %p473 = scmp.ne.s32.totalorder %s456, %s472
      %p474 = scmp.eq.s32.totalorder %s42, 0
      %p475 = por %p473, %p474
      %s476 = ssub.s32 %s36, %s43
      %p477 = scmp.eq.s32.totalorder %s476, 0
      %s479 = sadd.s32 %s478, 1
      %s480 = scalar_select %p477, %s478, %s479
      %p483 = pneg %p477
      %p484 = scmp.eq.s32.totalorder %s36, 1
      %p485 = por %p483, %p484
      %p486 = scmp.ne.s32.totalorder %s478, %s481
      %p487 = scmp.eq.s32.totalorder %s36, 0
      %p488 = por %p486, %p487
      %p489 = scmp.ne.s32.totalorder %s478, %s481
      %p490 = scmp.eq.s32.totalorder %s41, 1
      %p491 = por %p489, %p490
      %p492 = scmp.ne.s32.totalorder %s481, %s482
      %p493 = scmp.eq.s32.totalorder %s41, 0
      %p494 = por %p492, %p493
      %p495 = scmp.ne.s32.totalorder %s481, %s482
      %p496 = scmp.eq.s32.totalorder %s42, 1
      %p497 = por %p495, %p496
      %p499 = scmp.ne.s32.totalorder %s482, %s498
      %p500 = scmp.eq.s32.totalorder %s42, 0
      %p501 = por %p499, %p500
      %s502 = ssub.s32 %s36, %s43
      %p503 = scmp.eq.s32.totalorder %s502, 0
      %s505 = sadd.s32 %s504, 1
      %s506 = scalar_select %p503, %s504, %s505
      %p509 = pneg %p503
      %p510 = scmp.eq.s32.totalorder %s36, 1
      %p511 = por %p509, %p510
      %p512 = scmp.ne.s32.totalorder %s504, %s507
      %p513 = scmp.eq.s32.totalorder %s36, 0
      %p514 = por %p512, %p513
      %p515 = scmp.ne.s32.totalorder %s504, %s507
      %p516 = scmp.eq.s32.totalorder %s41, 1
      %p517 = por %p515, %p516
      %p518 = scmp.ne.s32.totalorder %s507, %s508
      %p519 = scmp.eq.s32.totalorder %s41, 0
      %p520 = por %p518, %p519
      %p521 = scmp.ne.s32.totalorder %s507, %s508
      %p522 = scmp.eq.s32.totalorder %s42, 1
      %p523 = por %p521, %p522
      %p525 = scmp.ne.s32.totalorder %s508, %s524
      %p526 = scmp.eq.s32.totalorder %s42, 0
      %p527 = por %p525, %p526
      %s528 = ssub.s32 %s36, %s43
      %p529 = scmp.eq.s32.totalorder %s528, 0
      %s531 = sadd.s32 %s530, 1
      %s532 = scalar_select %p529, %s530, %s531
      %p535 = pneg %p529
      %p536 = scmp.eq.s32.totalorder %s36, 1
      %p537 = por %p535, %p536
      %p538 = scmp.ne.s32.totalorder %s530, %s533
      %p539 = scmp.eq.s32.totalorder %s36, 0
      %p540 = por %p538, %p539
      %p541 = scmp.ne.s32.totalorder %s530, %s533
      %p542 = scmp.eq.s32.totalorder %s41, 1
      %p543 = por %p541, %p542
      %p544 = scmp.ne.s32.totalorder %s533, %s534
      %p545 = scmp.eq.s32.totalorder %s41, 0
      %p546 = por %p544, %p545
      %p547 = scmp.ne.s32.totalorder %s533, %s534
      %p548 = scmp.eq.s32.totalorder %s42, 1
      %p549 = por %p547, %p548
      %p551 = scmp.ne.s32.totalorder %s534, %s550
      %p552 = scmp.eq.s32.totalorder %s42, 0
      %p553 = por %p551, %p552
      %s554 = ssub.s32 %s36, %s43
      %p555 = scmp.eq.s32.totalorder %s554, 0
      %s557 = sadd.s32 %s556, 1
      %s558 = scalar_select %p555, %s556, %s557
      %p561 = pneg %p555
      %p562 = scmp.eq.s32.totalorder %s36, 1
      %p563 = por %p561, %p562
      %p564 = scmp.ne.s32.totalorder %s556, %s559
      %p565 = scmp.eq.s32.totalorder %s36, 0
      %p566 = por %p564, %p565
      %p567 = scmp.ne.s32.totalorder %s556, %s559
      %p568 = scmp.eq.s32.totalorder %s41, 1
      %p569 = por %p567, %p568
      %p570 = scmp.ne.s32.totalorder %s559, %s560
      %p571 = scmp.eq.s32.totalorder %s41, 0
      %p572 = por %p570, %p571
      %p573 = scmp.ne.s32.totalorder %s559, %s560
      %p574 = scmp.eq.s32.totalorder %s42, 1
      %p575 = por %p573, %p574
      %p577 = scmp.ne.s32.totalorder %s560, %s576
      %p578 = scmp.eq.s32.totalorder %s42, 0
      %p579 = por %p577, %p578
      %s580 = ssub.s32 %s36, %s43
      %p581 = scmp.eq.s32.totalorder %s580, 0
      %s583 = sadd.s32 %s582, 1
      %s584 = scalar_select %p581, %s582, %s583
      %p587 = pneg %p581
      %p588 = scmp.eq.s32.totalorder %s36, 1
      %p589 = por %p587, %p588
      %p590 = scmp.ne.s32.totalorder %s582, %s585
      %p591 = scmp.eq.s32.totalorder %s36, 0
      %p592 = por %p590, %p591
      %p593 = scmp.ne.s32.totalorder %s582, %s585
      %p594 = scmp.eq.s32.totalorder %s41, 1
      %p595 = por %p593, %p594
      %p596 = scmp.ne.s32.totalorder %s585, %s586
      %p597 = scmp.eq.s32.totalorder %s41, 0
      %p598 = por %p596, %p597
      %p599 = scmp.ne.s32.totalorder %s585, %s586
      %p600 = scmp.eq.s32.totalorder %s42, 1
      %p601 = por %p599, %p600
      %p603 = scmp.ne.s32.totalorder %s586, %s602
      %p604 = scmp.eq.s32.totalorder %s42, 0
      %p605 = por %p603, %p604
      %s607 = sadd.s32 %s606, 1
      %p610 = scmp.eq.s32.totalorder %s36, 1
      %p611 = scmp.ne.s32.totalorder %s606, %s608
      %p612 = scmp.eq.s32.totalorder %s36, 0
      %p613 = por %p611, %p612
      %p614 = scmp.ne.s32.totalorder %s606, %s608
      %p615 = scmp.eq.s32.totalorder %s41, 1
      %p616 = por %p614, %p615
      %p617 = scmp.ne.s32.totalorder %s608, %s609
      %p618 = scmp.eq.s32.totalorder %s41, 0
      %p619 = por %p617, %p618
      %p620 = scmp.ne.s32.totalorder %s608, %s609
      %p621 = scmp.eq.s32.totalorder %s42, 1
      %p622 = por %p620, %p621
      %p624 = scmp.ne.s32.totalorder %s609, %s623
      %p625 = scmp.eq.s32.totalorder %s42, 0
      %p626 = por %p624, %p625
      %p627 = scmp.le.s32.totalorder 1, %s36
      %p628 = scmp.lt.s32.totalorder %s36, 3
      %p629 = pnand %p627, %p628
      %p630 = pneg %p629
      // Predicated region
      $region9: #{transformer_decoder.1} parent=5 // pred_check
        _
      $region10: #{transformer_decoder.1} parent=5 // pred_check_branch
        %632 = sbr.rel (%p629) target = $region12
      $region11: #{transformer_decoder.1} parent=5 // pred_region
        %s633 = ssub.s32 %s36, 1
        // Predicated region
        $region13: #{transformer_decoder.1} parent=11 // pred_check
          %p634 = pneg %p57
        $region14: #{transformer_decoder.1} parent=11 // pred_check_branch
          %636 = sbr.rel (%p634) target = $region16
        $region15: #{transformer_decoder.1} parent=11 // pred_region
          %s638 = ssub.s32 256, 256
          %639 = vsyncadd [#allocation4], %s638
          %s640 = sshll.u32 [#allocation3], 4
          %s641 = int_to_ptr.vmem [resolvable:$true] %s640
          %646 = dma.hbm_to_vmem [thread:$0]  %s0, 256, %s641, [#allocation4], 128, 128, 8
        $region16: #{transformer_decoder.1} parent=11 // pred_fallthru
          _
        // Predicated region
        $region17: #{transformer_decoder.1} parent=11 // pred_check
          %p647 = pneg %p78
        $region18: #{transformer_decoder.1} parent=11 // pred_check_branch
          %649 = sbr.rel (%p647) target = $region20
        $region19: #{transformer_decoder.1} parent=11 // pred_region
          _
        $region20: #{transformer_decoder.1} parent=11 // pred_fallthru
          _
      $region12: #{transformer_decoder.1} parent=5 // pred_fallthru
        _
      %p650 = scmp.lt.s32.totalorder %s36, 2
      // Predicated region
      $region21: #{transformer_decoder.1} parent=5 // pred_check
        %p651 = pneg %p650
      $region22: #{transformer_decoder.1} parent=5 // pred_check_branch
        %653 = sbr.rel (%p651) target = $region24
      $region23: #{transformer_decoder.1} parent=5 // pred_region
        // Predicated region
        $region25: #{transformer_decoder.1} parent=23 // pred_check
          %p654 = pneg %p98
        $region26: #{transformer_decoder.1} parent=23 // pred_check_branch
          %656 = sbr.rel (%p654) target = $region28
        $region27: #{transformer_decoder.1} parent=23 // pred_region
          %p657 = scmp.lt.s32.totalorder %s36, 1
          %s658 = scalar_select %p657, %s36, 1
          %s659 = smul.addr %s658, 4
          %s660 = smul.addr %s659, 4
          %s661 = scalar_lea.vmem %s2, %s660
        $region28: #{transformer_decoder.1} parent=23 // pred_fallthru
          _
        // Predicated region
        $region29: #{transformer_decoder.1} parent=23 // pred_check
          %p662 = pneg %p124
        $region30: #{transformer_decoder.1} parent=23 // pred_check_branch
          %664 = sbr.rel (%p662) target = $region32
        $region31: #{transformer_decoder.1} parent=23 // pred_region
          %p665 = scmp.lt.s32.totalorder %s36, 1
          %s666 = scalar_select %p665, %s36, 1
          %s667 = scalar_lea.vmem %s3, %s666
        $region32: #{transformer_decoder.1} parent=23 // pred_fallthru
          _
        // Predicated region
        $region33: #{transformer_decoder.1} parent=23 // pred_check
          %p668 = pneg %p150
        $region34: #{transformer_decoder.1} parent=23 // pred_check_branch
          %670 = sbr.rel (%p668) target = $region36
        $region35: #{transformer_decoder.1} parent=23 // pred_region
          %p671 = scmp.lt.s32.totalorder %s36, 1
          %s672 = scalar_select %p671, %s36, 1
          %s673 = smul.addr %s672, 4
          %s674 = smul.addr %s673, 4
          %s675 = scalar_lea.vmem %s4, %s674
        $region36: #{transformer_decoder.1} parent=23 // pred_fallthru
          _
        // Predicated region
        $region37: #{transformer_decoder.1} parent=23 // pred_check
          %p676 = pneg %p176
        $region38: #{transformer_decoder.1} parent=23 // pred_check_branch
          %678 = sbr.rel (%p676) target = $region40
        $region39: #{transformer_decoder.1} parent=23 // pred_region
          %s679 = sand.u32 %s36, 1
          %s680 = scalar_lea.sflag [#allocation7], %s679
          %s681 = sand.u32 %s166, 1
          %s682 = scalar_lea.vmem [#allocation6], %s681
          %s684 = ssub.s32 16, 16
          %685 = vsyncadd %s680, %s684
          %s686 = smul.addr %s36, 16
          %s687 = scalar_lea.hbm %s5, %s686
          %s689 = sshll.u32 %s682, 4
          %s690 = int_to_ptr.vmem [resolvable:$true] %s689
          %692 = dma.hbm_to_vmem [thread:$0]  %s687, 16, %s690, %s680
        $region40: #{transformer_decoder.1} parent=23 // pred_fallthru
          _
        // Predicated region
        $region41: #{transformer_decoder.1} parent=23 // pred_check
          %p693 = pneg %p202
        $region42: #{transformer_decoder.1} parent=23 // pred_check_branch
          %695 = sbr.rel (%p693) target = $region44
        $region43: #{transformer_decoder.1} parent=23 // pred_region
          %p696 = scmp.lt.s32.totalorder %s36, 1
          %s697 = scalar_select %p696, %s36, 1
          %s698 = smul.addr %s697, 4
          %s699 = smul.addr %s698, 4
          %s700 = scalar_lea.vmem %s6, %s699
        $region44: #{transformer_decoder.1} parent=23 // pred_fallthru
          _
        // Predicated region
        $region45: #{transformer_decoder.1} parent=23 // pred_check
          %p701 = pneg %p228
        $region46: #{transformer_decoder.1} parent=23 // pred_check_branch
          %703 = sbr.rel (%p701) target = $region48
        $region47: #{transformer_decoder.1} parent=23 // pred_region
          %s704 = sand.u32 %s36, 1
          %s705 = scalar_lea.sflag [#allocation7], %s704
          %s706 = sand.u32 %s218, 1
          %s707 = scalar_lea.vmem [#allocation8], %s706
          %s709 = ssub.s32 16, 16
          %710 = vsyncadd %s705, %s709
          %s711 = smul.addr %s36, 16
          %s712 = scalar_lea.hbm %s7, %s711
          %s714 = sshll.u32 %s707, 4
          %s715 = int_to_ptr.vmem [resolvable:$true] %s714
          %717 = dma.hbm_to_vmem [thread:$0]  %s712, 16, %s715, %s705
        $region48: #{transformer_decoder.1} parent=23 // pred_fallthru
          _
        // Predicated region
        $region49: #{transformer_decoder.1} parent=23 // pred_check
          %p718 = pneg %p254
        $region50: #{transformer_decoder.1} parent=23 // pred_check_branch
          %720 = sbr.rel (%p718) target = $region52
        $region51: #{transformer_decoder.1} parent=23 // pred_region
          %p721 = scmp.lt.s32.totalorder %s36, 1
          %s722 = scalar_select %p721, %s36, 1
          %s723 = smul.addr %s722, 4
          %s724 = smul.addr %s723, 4
          %s725 = scalar_lea.vmem %s8, %s724
        $region52: #{transformer_decoder.1} parent=23 // pred_fallthru
          _
        // Predicated region
        $region53: #{transformer_decoder.1} parent=23 // pred_check
          %p726 = pneg %p280
        $region54: #{transformer_decoder.1} parent=23 // pred_check_branch
          %728 = sbr.rel (%p726) target = $region56
        $region55: #{transformer_decoder.1} parent=23 // pred_region
          %s729 = sand.u32 %s270, 1
          %s730 = scalar_lea.sflag [#allocation10], %s729
          %s731 = sand.u32 %s270, 1
          %s732 = scalar_lea.vmem [#allocation9], %s731
          %s734 = ssub.s32 16, 16
          %735 = vsyncadd %s730, %s734
          %s736 = smul.addr %s36, 16
          %s737 = scalar_lea.hbm %s9, %s736
          %s739 = sshll.u32 %s732, 4
          %s740 = int_to_ptr.vmem [resolvable:$true] %s739
          %742 = dma.hbm_to_vmem [thread:$0]  %s737, 16, %s740, %s730
        $region56: #{transformer_decoder.1} parent=23 // pred_fallthru
          _
        // Predicated region
        $region57: #{transformer_decoder.1} parent=23 // pred_check
          %p743 = pneg %p306
        $region58: #{transformer_decoder.1} parent=23 // pred_check_branch
          %745 = sbr.rel (%p743) target = $region60
        $region59: #{transformer_decoder.1} parent=23 // pred_region
          %p746 = scmp.lt.s32.totalorder %s36, 1
          %s747 = scalar_select %p746, %s36, 1
          %s748 = smul.addr %s747, 4
          %s749 = smul.addr %s748, 4
          %s750 = scalar_lea.vmem %s10, %s749
        $region60: #{transformer_decoder.1} parent=23 // pred_fallthru
          _
        // Predicated region
        $region61: #{transformer_decoder.1} parent=23 // pred_check
          %p751 = pneg %p332
        $region62: #{transformer_decoder.1} parent=23 // pred_check_branch
          %753 = sbr.rel (%p751) target = $region64
        $region63: #{transformer_decoder.1} parent=23 // pred_region
          %p754 = scmp.lt.s32.totalorder %s36, 1
          %s755 = scalar_select %p754, %s36, 1
          %s756 = scalar_lea.vmem %s11, %s755
        $region64: #{transformer_decoder.1} parent=23 // pred_fallthru
          _
        // Predicated region
        $region65: #{transformer_decoder.1} parent=23 // pred_check
          %p757 = pneg %p358
        $region66: #{transformer_decoder.1} parent=23 // pred_check_branch
          %759 = sbr.rel (%p757) target = $region68
        $region67: #{transformer_decoder.1} parent=23 // pred_region
          %p760 = scmp.lt.s32.totalorder %s36, 1
          %s761 = scalar_select %p760, %s36, 1
          %s762 = smul.addr %s761, 4
          %s763 = smul.addr %s762, 4
          %s764 = scalar_lea.vmem %s12, %s763
        $region68: #{transformer_decoder.1} parent=23 // pred_fallthru
          _
        // Predicated region
        $region69: #{transformer_decoder.1} parent=23 // pred_check
          %p765 = pneg %p384
        $region70: #{transformer_decoder.1} parent=23 // pred_check_branch
          %767 = sbr.rel (%p765) target = $region72
        $region71: #{transformer_decoder.1} parent=23 // pred_region
          %p768 = scmp.lt.s32.totalorder %s36, 1
          %s769 = scalar_select %p768, %s36, 1
          %s770 = scalar_lea.vmem %s13, %s769
        $region72: #{transformer_decoder.1} parent=23 // pred_fallthru
          _
        // Predicated region
        $region73: #{transformer_decoder.1} parent=23 // pred_check
          %p771 = pneg %p410
        $region74: #{transformer_decoder.1} parent=23 // pred_check_branch
          %773 = sbr.rel (%p771) target = $region76
        $region75: #{transformer_decoder.1} parent=23 // pred_region
          %p774 = scmp.lt.s32.totalorder %s36, 1
          %s775 = scalar_select %p774, %s36, 1
          %s776 = smul.addr %s775, 8
          %s777 = smul.addr %s776, 4
          %s778 = scalar_lea.vmem %s14, %s777
        $region76: #{transformer_decoder.1} parent=23 // pred_fallthru
          _
        // Predicated region
        $region77: #{transformer_decoder.1} parent=23 // pred_check
          %p779 = pneg %p436
        $region78: #{transformer_decoder.1} parent=23 // pred_check_branch
          %781 = sbr.rel (%p779) target = $region80
        $region79: #{transformer_decoder.1} parent=23 // pred_region
          %p782 = scmp.lt.s32.totalorder %s36, 1
          %s783 = scalar_select %p782, %s36, 1
          %s784 = scalar_lea.vmem %s15, %s783
        $region80: #{transformer_decoder.1} parent=23 // pred_fallthru
          _
        // Predicated region
        $region81: #{transformer_decoder.1} parent=23 // pred_check
          %p785 = pneg %p462
        $region82: #{transformer_decoder.1} parent=23 // pred_check_branch
          %787 = sbr.rel (%p785) target = $region84
        $region83: #{transformer_decoder.1} parent=23 // pred_region
          %p788 = scmp.lt.s32.totalorder %s36, 1
          %s789 = scalar_select %p788, %s36, 1
          %s790 = scalar_lea.vmem %s16, %s789
        $region84: #{transformer_decoder.1} parent=23 // pred_fallthru
          _
        // Predicated region
        $region85: #{transformer_decoder.1} parent=23 // pred_check
          %p791 = pneg %p488
        $region86: #{transformer_decoder.1} parent=23 // pred_check_branch
          %793 = sbr.rel (%p791) target = $region88
        $region87: #{transformer_decoder.1} parent=23 // pred_region
          %p794 = scmp.lt.s32.totalorder %s36, 1
          %s795 = scalar_select %p794, %s36, 1
          %s796 = scalar_lea.vmem %s17, %s795
        $region88: #{transformer_decoder.1} parent=23 // pred_fallthru
          _
        // Predicated region
        $region89: #{transformer_decoder.1} parent=23 // pred_check
          %p797 = pneg %p514
        $region90: #{transformer_decoder.1} parent=23 // pred_check_branch
          %799 = sbr.rel (%p797) target = $region92
        $region91: #{transformer_decoder.1} parent=23 // pred_region
          %p800 = scmp.lt.s32.totalorder %s36, 1
          %s801 = scalar_select %p800, %s36, 1
          %s802 = scalar_lea.vmem %s18, %s801
        $region92: #{transformer_decoder.1} parent=23 // pred_fallthru
          _
        // Predicated region
        $region93: #{transformer_decoder.1} parent=23 // pred_check
          %p803 = pneg %p540
        $region94: #{transformer_decoder.1} parent=23 // pred_check_branch
          %805 = sbr.rel (%p803) target = $region96
        $region95: #{transformer_decoder.1} parent=23 // pred_region
          %p806 = scmp.lt.s32.totalorder %s36, 1
          %s807 = scalar_select %p806, %s36, 1
          %s808 = scalar_lea.vmem %s19, %s807
        $region96: #{transformer_decoder.1} parent=23 // pred_fallthru
          _
        // Predicated region
        $region97: #{transformer_decoder.1} parent=23 // pred_check
          %p809 = pneg %p566
        $region98: #{transformer_decoder.1} parent=23 // pred_check_branch
          %811 = sbr.rel (%p809) target = $region100
        $region99: #{transformer_decoder.1} parent=23 // pred_region
          %p812 = scmp.lt.s32.totalorder %s36, 1
          %s813 = scalar_select %p812, %s36, 1
          %s814 = scalar_lea.vmem %s20, %s813
        $region100: #{transformer_decoder.1} parent=23 // pred_fallthru
          _
        // Predicated region
        $region101: #{transformer_decoder.1} parent=23 // pred_check
          %p815 = pneg %p592
        $region102: #{transformer_decoder.1} parent=23 // pred_check_branch
          %817 = sbr.rel (%p815) target = $region104
        $region103: #{transformer_decoder.1} parent=23 // pred_region
          %p818 = scmp.lt.s32.totalorder %s36, 1
          %s819 = scalar_select %p818, %s36, 1
          %s820 = scalar_lea.vmem %s21, %s819
        $region104: #{transformer_decoder.1} parent=23 // pred_fallthru
          _
      $region24: #{transformer_decoder.1} parent=5 // pred_fallthru
        _
      %p821 = scmp.le.s32.totalorder 1, %s36
      %p822 = scmp.lt.s32.totalorder %s36, 3
      %p823 = pnand %p821, %p822
      %p824 = pneg %p823
      // Predicated region
      $region105: #{transformer_decoder.1} parent=5 // pred_check
        _
      $region106: #{transformer_decoder.1} parent=5 // pred_check_branch
        %826 = sbr.rel (%p823) target = $region108
      $region107: #{transformer_decoder.1} parent=5 // pred_region
        %s827 = ssub.s32 %s36, 1
        // Predicated region
        $region109: #{transformer_decoder.1} parent=107 // pred_check
          %p828 = pneg %p57
        $region110: #{transformer_decoder.1} parent=107 // pred_check_branch
          %830 = sbr.rel (%p828) target = $region112
        $region111: #{transformer_decoder.1} parent=107 // pred_region
          %831 = dma.done [#allocation4], 256
        $region112: #{transformer_decoder.1} parent=107 // pred_fallthru
          _
        %s832 = sand.u32 %s41, 1
        %s833 = scalar_lea.sflag [#allocation7], %s832
        %s834 = sand.u32 %s169, 1
        %s835 = scalar_lea.vmem [#allocation6], %s834
        // Predicated region
        $region113: #{transformer_decoder.1} parent=107 // pred_check
          %p836 = pneg %p182
        $region114: #{transformer_decoder.1} parent=107 // pred_check_branch
          %838 = sbr.rel (%p836) target = $region116
        $region115: #{transformer_decoder.1} parent=107 // pred_region
          %839 = dma.done %s833, 16
        $region116: #{transformer_decoder.1} parent=107 // pred_fallthru
          _
        %s840 = sand.u32 %s41, 1
        %s841 = scalar_lea.sflag [#allocation7], %s840
        %s842 = sand.u32 %s221, 1
        %s843 = scalar_lea.vmem [#allocation8], %s842
        // Predicated region
        $region117: #{transformer_decoder.1} parent=107 // pred_check
          %p844 = pneg %p234
        $region118: #{transformer_decoder.1} parent=107 // pred_check_branch
          %846 = sbr.rel (%p844) target = $region120
        $region119: #{transformer_decoder.1} parent=107 // pred_region
          %847 = dma.done %s841, 16
        $region120: #{transformer_decoder.1} parent=107 // pred_fallthru
          _
        %s848 = sand.u32 %s273, 1
        %s849 = scalar_lea.sflag [#allocation10], %s848
        %s850 = sand.u32 %s273, 1
        %s851 = scalar_lea.vmem [#allocation9], %s850
        // Predicated region
        $region121: #{transformer_decoder.1} parent=107 // pred_check
          %p852 = pneg %p286
        $region122: #{transformer_decoder.1} parent=107 // pred_check_branch
          %854 = sbr.rel (%p852) target = $region124
        $region123: #{transformer_decoder.1} parent=107 // pred_region
          %855 = dma.done %s849, 16
        $region124: #{transformer_decoder.1} parent=107 // pred_fallthru
          _
        %p856 = pneg %p57
        %p857 = pneg %p54
        %p858 = pneg %p78
        %p859 = pneg %p75
        %p860 = scmp.lt.s32.totalorder %s41, 1
        %s861 = scalar_select %p860, %s41, 1
        %s862 = smul.addr %s861, 4
        %s863 = smul.addr %s862, 4
        %s864 = scalar_lea.vmem %s2, %s863
        %p865 = pneg %p104
        %p866 = pneg %p101
        %p867 = scmp.lt.s32.totalorder %s41, 1
        %s868 = scalar_select %p867, %s41, 1
        %s869 = scalar_lea.vmem %s3, %s868
        %p870 = pneg %p130
        %p871 = pneg %p127
        %p872 = scmp.lt.s32.totalorder %s41, 1
        %s873 = scalar_select %p872, %s41, 1
        %s874 = smul.addr %s873, 4
        %s875 = smul.addr %s874, 4
        %s876 = scalar_lea.vmem %s4, %s875
        %p877 = pneg %p156
        %p878 = pneg %p153
        %s879 = sand.u32 %s41, 1
        %s880 = scalar_lea.sflag [#allocation7], %s879
        %s881 = sand.u32 %s169, 1
        %s882 = scalar_lea.vmem [#allocation6], %s881
        %p883 = pneg %p182
        %p884 = pneg %p179
        %p885 = scmp.lt.s32.totalorder %s41, 1
        %s886 = scalar_select %p885, %s41, 1
        %s887 = smul.addr %s886, 4
        %s888 = smul.addr %s887, 4
        %s889 = scalar_lea.vmem %s6, %s888
        %p890 = pneg %p208
        %p891 = pneg %p205
        %s892 = sand.u32 %s41, 1
        %s893 = scalar_lea.sflag [#allocation7], %s892
        %s894 = sand.u32 %s221, 1
        %s895 = scalar_lea.vmem [#allocation8], %s894
        %p896 = pneg %p234
        %p897 = pneg %p231
        %p898 = scmp.lt.s32.totalorder %s41, 1
        %s899 = scalar_select %p898, %s41, 1
        %s900 = smul.addr %s899, 4
        %s901 = smul.addr %s900, 4
        %s902 = scalar_lea.vmem %s8, %s901
        %p903 = pneg %p260
        %p904 = pneg %p257
        %s905 = sand.u32 %s273, 1
        %s906 = scalar_lea.sflag [#allocation10], %s905
        %s907 = sand.u32 %s273, 1
        %s908 = scalar_lea.vmem [#allocation9], %s907
        %p909 = pneg %p286
        %p910 = pneg %p283
        %p911 = scmp.lt.s32.totalorder %s41, 1
        %s912 = scalar_select %p911, %s41, 1
        %s913 = smul.addr %s912, 4
        %s914 = smul.addr %s913, 4
        %s915 = scalar_lea.vmem %s10, %s914
        %p916 = pneg %p312
        %p917 = pneg %p309
        %p918 = scmp.lt.s32.totalorder %s41, 1
        %s919 = scalar_select %p918, %s41, 1
        %s920 = scalar_lea.vmem %s11, %s919
        %p921 = pneg %p338
        %p922 = pneg %p335
        %p923 = scmp.lt.s32.totalorder %s41, 1
        %s924 = scalar_select %p923, %s41, 1
        %s925 = smul.addr %s924, 4
        %s926 = smul.addr %s925, 4
        %s927 = scalar_lea.vmem %s12, %s926
        %p928 = pneg %p364
        %p929 = pneg %p361
        %p930 = scmp.lt.s32.totalorder %s41, 1
        %s931 = scalar_select %p930, %s41, 1
        %s932 = scalar_lea.vmem %s13, %s931
        %p933 = pneg %p390
        %p934 = pneg %p387
        %p935 = scmp.lt.s32.totalorder %s41, 1
        %s936 = scalar_select %p935, %s41, 1
        %s937 = smul.addr %s936, 8
        %s938 = smul.addr %s937, 4
        %s939 = scalar_lea.vmem %s14, %s938
        %p940 = pneg %p416
        %p941 = pneg %p413
        %p942 = scmp.lt.s32.totalorder %s41, 1
        %s943 = scalar_select %p942, %s41, 1
        %s944 = scalar_lea.vmem %s15, %s943
        %p945 = pneg %p442
        %p946 = pneg %p439
        %p947 = scmp.lt.s32.totalorder %s41, 1
        %s948 = scalar_select %p947, %s41, 1
        %s949 = scalar_lea.vmem %s16, %s948
        %p950 = pneg %p468
        %p951 = pneg %p465
        %p952 = scmp.lt.s32.totalorder %s41, 1
        %s953 = scalar_select %p952, %s41, 1
        %s954 = scalar_lea.vmem %s17, %s953
        %p955 = pneg %p494
        %p956 = pneg %p491
        %p957 = scmp.lt.s32.totalorder %s41, 1
        %s958 = scalar_select %p957, %s41, 1
        %s959 = scalar_lea.vmem %s18, %s958
        %p960 = pneg %p520
        %p961 = pneg %p517
        %p962 = scmp.lt.s32.totalorder %s41, 1
        %s963 = scalar_select %p962, %s41, 1
        %s964 = scalar_lea.vmem %s19, %s963
        %p965 = pneg %p546
        %p966 = pneg %p543
        %p967 = scmp.lt.s32.totalorder %s41, 1
        %s968 = scalar_select %p967, %s41, 1
        %s969 = scalar_lea.vmem %s20, %s968
        %p970 = pneg %p572
        %p971 = pneg %p569
        %p972 = scmp.lt.s32.totalorder %s41, 1
        %s973 = scalar_select %p972, %s41, 1
        %s974 = scalar_lea.vmem %s21, %s973
        %p975 = pneg %p598
        %p976 = pneg %p595
        %p977 = pneg %p619
        %p978 = pneg %p616
        %p979 = scmp.lt.s32.totalorder %s41, 1
        %s980 = scalar_select %p979, %s41, 1
        %s981 = smul.addr %s980, 4
        %s982 = smul.addr %s981, 4
        %s983 = scalar_lea.vmem %s2, %s982
        %p984 = scmp.lt.s32.totalorder %s41, 1
        %s985 = scalar_select %p984, %s41, 1
        %s986 = scalar_lea.vmem %s3, %s985
        %p987 = scmp.lt.s32.totalorder %s41, 1
        %s988 = scalar_select %p987, %s41, 1
        %s989 = smul.addr %s988, 4
        %s990 = smul.addr %s989, 4
        %s991 = scalar_lea.vmem %s4, %s990
        %p992 = scmp.lt.s32.totalorder %s41, 1
        %s993 = scalar_select %p992, %s41, 1
        %s994 = smul.addr %s993, 4
        %s995 = smul.addr %s994, 4
        %s996 = scalar_lea.vmem %s6, %s995
        %p997 = scmp.lt.s32.totalorder %s41, 1
        %s998 = scalar_select %p997, %s41, 1
        %s999 = smul.addr %s998, 4
        %s1000 = smul.addr %s999, 4
        %s1001 = scalar_lea.vmem %s8, %s1000
        %p1002 = scmp.lt.s32.totalorder %s41, 1
        %s1003 = scalar_select %p1002, %s41, 1
        %s1004 = smul.addr %s1003, 4
        %s1005 = smul.addr %s1004, 4
        %s1006 = scalar_lea.vmem %s10, %s1005
        %p1007 = scmp.lt.s32.totalorder %s41, 1
        %s1008 = scalar_select %p1007, %s41, 1
        %s1009 = scalar_lea.vmem %s11, %s1008
        %p1010 = scmp.lt.s32.totalorder %s41, 1
        %s1011 = scalar_select %p1010, %s41, 1
        %s1012 = smul.addr %s1011, 4
        %s1013 = smul.addr %s1012, 4
        %s1014 = scalar_lea.vmem %s12, %s1013
        %p1015 = scmp.lt.s32.totalorder %s41, 1
        %s1016 = scalar_select %p1015, %s41, 1
        %s1017 = scalar_lea.vmem %s13, %s1016
        %p1018 = scmp.lt.s32.totalorder %s41, 1
        %s1019 = scalar_select %p1018, %s41, 1
        %s1020 = smul.addr %s1019, 8
        %s1021 = smul.addr %s1020, 4
        %s1022 = scalar_lea.vmem %s14, %s1021
        %p1023 = scmp.lt.s32.totalorder %s41, 1
        %s1024 = scalar_select %p1023, %s41, 1
        %s1025 = scalar_lea.vmem %s15, %s1024
        %p1026 = scmp.lt.s32.totalorder %s41, 1
        %s1027 = scalar_select %p1026, %s41, 1
        %s1028 = scalar_lea.vmem %s16, %s1027
        %p1029 = scmp.lt.s32.totalorder %s41, 1
        %s1030 = scalar_select %p1029, %s41, 1
        %s1031 = scalar_lea.vmem %s17, %s1030
        %p1032 = scmp.lt.s32.totalorder %s41, 1
        %s1033 = scalar_select %p1032, %s41, 1
        %s1034 = scalar_lea.vmem %s18, %s1033
        %p1035 = scmp.lt.s32.totalorder %s41, 1
        %s1036 = scalar_select %p1035, %s41, 1
        %s1037 = scalar_lea.vmem %s19, %s1036
        %p1038 = scmp.lt.s32.totalorder %s41, 1
        %s1039 = scalar_select %p1038, %s41, 1
        %s1040 = scalar_lea.vmem %s20, %s1039
        %p1041 = scmp.lt.s32.totalorder %s41, 1
        %s1042 = scalar_select %p1041, %s41, 1
        %s1043 = scalar_lea.vmem %s21, %s1042
        %p1045 = scmp.eq.s32.totalorder %s41, 0
        // Predicated region
        $region125: #{transformer_decoder.1} parent=107 // pred_check
          %p1046 = pneg %p1045
        $region126: #{transformer_decoder.1} parent=107 // pred_check_branch
          %1048 = sbr.rel (%p1046) target = $region128
        $region127: #{transformer_decoder.1} parent=107 // pred_region
          %v1049 = vld [vmem:[#allocation3] sm:$0xff]
          %v1050 = vld [vmem:[#allocation3 + $0x8] sm:$0xff]
          %vm1051 = vcmask 261120
          %1052 = vst.msk [vmem:[#allocation2] sm:$0xff] %vm1051, %v1049
          %1053 = vst.msk [vmem:[#allocation2 + $0x8] sm:$0xff] %vm1051, %v1050
        $region128: #{transformer_decoder.1} parent=107 // pred_fallthru
          _
        %v1054 = vld [vmem:[#allocation2] sm:$0xff]
        %v1055 = vld [vmem:[#allocation2 + $0x8] sm:$0xff]
        %v1056 = vld [vmem:[%s1] sm:$0xff]
        %v1057 = vld [vmem:[%s1 + $0x8] sm:$0xff]
        %v1058 = vld [vmem:[%s1 + $0x10] sm:$0xff]
        %v1059 = vpack.c.bf16 %v1057, %v1056
        %v1060 = vpack.c.bf16 %v1058, %v1058
        %v1061 = vpack.c.bf16 %v1055, %v1054
        %v1062 = vld [vmem:[%s983] sm:$0xf]
        %v1063 = vld [vmem:[%s983 + $0x4] sm:$0xf]
        %v1064 = vld [vmem:[%s983 + $0x8] sm:$0xf]
        %v1065 = vld [vmem:[%s983 + $0xc] sm:$0xf]
        %v1066 = vld [vmem:[%s986] sm:$0x1]
        %v1068 = vlaneseq
        %v1069 = vshrl.u32 %v1068, 7
        %v1070 = vsub.s32 0, %v1069
        %v1071 = vrot.slane %v1066, %v1070
        %v1077 = vunpack.c.l.b16 %v1062
        %v1078 = vunpack.c.l.b16 %v1063
        %v1079 = vunpack.c.l.b16 %v1064
        %v1080 = vunpack.c.l.b16 %v1065
        %v1081 = vpack.c.b16 %v1078, %v1077
        %v1082 = vpack.c.b16 %v1080, %v1079
        %vm1085 = vcmask 261120
        %v1087 = vsel %vm1085, %v1061, 0
        %1089 = vmatprep.subr.bf16.mxu0 0
        %1090 = vmatpush1.bf16.msra.mxu0 0
        %1091 = vmatprep.subr.bf16.mxu0 0
        %1092 = vmatpush1.bf16.msra.mxu0 0
        %1093 = vmatprep.subr.bf16.mxu0 0
        %1094 = vmatpush1.bf16.msra.mxu0 0
        %1095 = vmatprep.subr.bf16.mxu0 0
        %1096 = vmatpush1.bf16.msra.mxu0 0
        %1097 = vmatprep.subr.bf16.mxu0 0
        %1098 = vmatpush1.bf16.msra.mxu0 0
        %1099 = vmatprep.subr.bf16.mxu0 0
        %1100 = vmatpush1.bf16.msra.mxu0 0
        %1101 = vmatprep.subr.bf16.mxu0 0
        %1102 = vmatpush1.bf16.msra.mxu0 %v1082
        %1103 = vmatprep.subr.bf16.mxu0 0
        %1104 = vmatpush1.bf16.msra.mxu0 %v1081
        %1105 = vmatprep.subr.bf16.mxu0 0
        %1106 = vmatpush2.bf16.msra.mxu0 0
        %1107 = vmatprep.subr.bf16.mxu0 0
        %1108 = vmatpush2.bf16.msra.mxu0 0
        %1109 = vmatprep.subr.bf16.mxu0 0
        %1110 = vmatpush2.bf16.msra.mxu0 0
        %1111 = vmatprep.subr.bf16.mxu0 0
        %1112 = vmatpush2.bf16.msra.mxu0 0
        %1113 = vmatprep.subr.bf16.mxu0 0
        %1114 = vmatpush2.bf16.msra.mxu0 0
        %1115 = vmatprep.subr.bf16.mxu0 0
        %1116 = vmatpush2.bf16.msra.mxu0 0
        %1117 = vmatprep.subr.bf16.mxu0 0
        %1118 = vmatpush2.bf16.msra.mxu0 0
        %1119 = vmatprep.subr.bf16.mxu0 0
        %1120 = vmatpush2.bf16.msra.mxu0 0
        %1121 = vmatprep.mubr.bf16.mxu0 0
        %1122 = vmatmul.mubr.bf16.gmra.mxu0 %v1087
        %v1123 = vpop.f32.mrf.mxu0
        %v1124 = vadd.f32 %v1071, %v1123
        %v1125 = vpop.f32.mrf.mxu0
        %v1126 = vpop.f32.mrf.mxu0
        %v1127 = vadd.f32 %v1071, %v1126
        %v1128 = vpop.f32.mrf.mxu0
        %1129 = vdwg.mxu0
        %v1130 = vpack.c.bf16 %v1124, %v1124
        %v1131 = vpack.c.bf16 %v1127, %v1127
        %1133 = vrot.lane.b32.xlu0 %v1130, 96
        %v1134 = vpop.permute.xlu0 %1133
        %vm1135 = vcmask 64512
        %v1137 = vsel %vm1135, %v1130, 0
        %v1140 = vsel %vm1135, %v1134, 0
        %1142 = vmatprep.subr.bf16.mxu0 0
        %1143 = vmatpush1.bf16.xpose.msra.mxu0 0
        %1144 = vmatprep.subr.bf16.mxu0 0
        %1145 = vmatpush1.bf16.xpose.msra.mxu0 0
        %1146 = vmatprep.subr.bf16.mxu0 0
        %1147 = vmatpush1.bf16.xpose.msra.mxu0 0
        %1148 = vmatprep.subr.bf16.mxu0 0
        %1149 = vmatpush1.bf16.xpose.msra.mxu0 0
        %1150 = vmatprep.subr.bf16.mxu0 0
        %1151 = vmatpush1.bf16.xpose.msra.mxu0 0
        %1152 = vmatprep.subr.bf16.mxu0 0
        %1153 = vmatpush1.bf16.xpose.msra.mxu0 0
        %1154 = vmatprep.subr.bf16.mxu0 0
        %1155 = vmatpush1.bf16.xpose.msra.mxu0 0
        %1156 = vmatprep.subr.bf16.mxu0 0
        %1157 = vmatpush1.bf16.xpose.msra.mxu0 %v1140
        %1158 = vmatprep.subr.bf16.mxu0 0
        %1159 = vmatpush2.bf16.xpose.msra.mxu0 0
        %1160 = vmatprep.subr.bf16.mxu0 0
        %1161 = vmatpush2.bf16.xpose.msra.mxu0 0
        %1162 = vmatprep.subr.bf16.mxu0 0
        %1163 = vmatpush2.bf16.xpose.msra.mxu0 0
        %1164 = vmatprep.subr.bf16.mxu0 0
        %1165 = vmatpush2.bf16.xpose.msra.mxu0 0
        %1166 = vmatprep.subr.bf16.mxu0 0
        %1167 = vmatpush2.bf16.xpose.msra.mxu0 0
        %1168 = vmatprep.subr.bf16.mxu0 0
        %1169 = vmatpush2.bf16.xpose.msra.mxu0 0
        %1170 = vmatprep.subr.bf16.mxu0 0
        %1171 = vmatpush2.bf16.xpose.msra.mxu0 0
        %1172 = vmatprep.subr.bf16.mxu0 0
        %1173 = vmatpush2.bf16.xpose.msra.mxu0 0
        %1174 = vmatprep.mubr.bf16.mxu0 0
        %1175 = vmatmul.mubr.bf16.gmra.mxu0 %v1137
        %v1176 = vpop.f32.mrf.mxu0
        %v1177 = vadd.f32 0.0, %v1176
        %v1178 = vpop.f32.mrf.mxu0
        %v1179 = vpop.f32.mrf.mxu0
        %v1180 = vpop.f32.mrf.mxu0
        %1181 = vdwg.mxu0
        %1183 = vrot.lane.b32.xlu0 %v1131, 96
        %v1184 = vpop.permute.xlu0 %1183
        %v1186 = vsel %vm1135, %v1131, 0
        %v1189 = vsel %vm1135, %v1184, 0
        %1191 = vmatprep.subr.bf16.mxu0 0
        %1192 = vmatpush1.bf16.xpose.msra.mxu0 0
        %1193 = vmatprep.subr.bf16.mxu0 0
        %1194 = vmatpush1.bf16.xpose.msra.mxu0 0
        %1195 = vmatprep.subr.bf16.mxu0 0
        %1196 = vmatpush1.bf16.xpose.msra.mxu0 0
        %1197 = vmatprep.subr.bf16.mxu0 0
        %1198 = vmatpush1.bf16.xpose.msra.mxu0 0
        %1199 = vmatprep.subr.bf16.mxu0 0
        %1200 = vmatpush1.bf16.xpose.msra.mxu0 0
        %1201 = vmatprep.subr.bf16.mxu0 0
        %1202 = vmatpush1.bf16.xpose.msra.mxu0 0
        %1203 = vmatprep.subr.bf16.mxu0 0
        %1204 = vmatpush1.bf16.xpose.msra.mxu0 0
        %1205 = vmatprep.subr.bf16.mxu0 0
        %1206 = vmatpush1.bf16.xpose.msra.mxu0 %v1189
        %1207 = vmatprep.subr.bf16.mxu0 0
        %1208 = vmatpush2.bf16.xpose.msra.mxu0 0
        %1209 = vmatprep.subr.bf16.mxu0 0
        %1210 = vmatpush2.bf16.xpose.msra.mxu0 0
        %1211 = vmatprep.subr.bf16.mxu0 0
        %1212 = vmatpush2.bf16.xpose.msra.mxu0 0
        %1213 = vmatprep.subr.bf16.mxu0 0
        %1214 = vmatpush2.bf16.xpose.msra.mxu0 0
        %1215 = vmatprep.subr.bf16.mxu0 0
        %1216 = vmatpush2.bf16.xpose.msra.mxu0 0
        %1217 = vmatprep.subr.bf16.mxu0 0
        %1218 = vmatpush2.bf16.xpose.msra.mxu0 0
        %1219 = vmatprep.subr.bf16.mxu0 0
        %1220 = vmatpush2.bf16.xpose.msra.mxu0 0
        %1221 = vmatprep.subr.bf16.mxu0 0
        %1222 = vmatpush2.bf16.xpose.msra.mxu0 0
        %1223 = vmatprep.mubr.bf16.mxu0 0
        %1224 = vmatmul.mubr.bf16.gmra.mxu0 %v1186
        %v1225 = vpop.f32.mrf.mxu0
        %v1226 = vadd.f32 0.0, %v1225
        %v1227 = vpop.f32.mrf.mxu0
        %v1228 = vpop.f32.mrf.mxu0
        %v1229 = vpop.f32.mrf.mxu0
        %1230 = vdwg.mxu0
        %v1231 = vsel %vm1135, %v1177, -inf
        %1232 = vmax.xlane.f32.xlu0 %v1231
        %v1233 = vpop.xlane.xlu0 %1232
        %v1234 = vsel %vm1135, %v1226, -inf
        %1235 = vmax.xlane.f32.xlu0 %v1234
        %v1236 = vpop.xlane.xlu0 %1235
        %v1237 = vsub.f32 %v1177, %v1233
        %v1238 = vsub.f32 %v1226, %v1236
        %v1239 = vmul.f32 %v1237, 1.442695
        %v1240 = vpow.pop %v1239
        %v1241 = vmul.f32 %v1238, 1.442695
        %v1242 = vpow.pop %v1241
        %v1243 = vsel %vm1135, %v1240, 0.0
        %1244 = vadd.xlane.f32.xlu0 %v1243
        %v1245 = vpop.xlane.xlu0 %1244
        %v1246 = vsel %vm1135, %v1242, 0.0
        %1247 = vadd.xlane.f32.xlu0 %v1246
        %v1248 = vpop.xlane.xlu0 %1247
        %v1249 = vrcp.pop %v1245
        %v1250 = vrcp.pop %v1248
        %v1251 = vmul.f32 %v1240, %v1249
        %v1252 = vmul.f32 %v1242, %v1250
        %v1253 = vpack.c.bf16 %v1251, %v1251
        %v1254 = vpack.c.bf16 %v1252, %v1252
        %1255 = vrot.lane.b32.xlu0 %v1130, 64
        %v1256 = vpop.permute.xlu0 %1255
        %v1258 = vsel %vm1135, %v1253, 0
        %vm1260 = vcmask 1043456
        %v1262 = vsel %vm1260, %v1256, 0
        %1264 = vmatprep.subr.bf16.mxu0 0
        %1265 = vmatpush1.bf16.msra.mxu0 0
        %1266 = vmatprep.subr.bf16.mxu0 0
        %1267 = vmatpush1.bf16.msra.mxu0 0
        %1268 = vmatprep.subr.bf16.mxu0 0
        %1269 = vmatpush1.bf16.msra.mxu0 0
        %1270 = vmatprep.subr.bf16.mxu0 0
        %1271 = vmatpush1.bf16.msra.mxu0 0
        %1272 = vmatprep.subr.bf16.mxu0 0
        %1273 = vmatpush1.bf16.msra.mxu0 0
        %1274 = vmatprep.subr.bf16.mxu0 0
        %1275 = vmatpush1.bf16.msra.mxu0 0
        %1276 = vmatprep.subr.bf16.mxu0 0
        %1277 = vmatpush1.bf16.msra.mxu0 0
        %1278 = vmatprep.subr.bf16.mxu0 0
        %1279 = vmatpush1.bf16.msra.mxu0 %v1262
        %1280 = vmatprep.subr.bf16.mxu0 0
        %1281 = vmatpush2.bf16.msra.mxu0 0
        %1282 = vmatprep.subr.bf16.mxu0 0
        %1283 = vmatpush2.bf16.msra.mxu0 0
        %1284 = vmatprep.subr.bf16.mxu0 0
        %1285 = vmatpush2.bf16.msra.mxu0 0
        %1286 = vmatprep.subr.bf16.mxu0 0
        %1287 = vmatpush2.bf16.msra.mxu0 0
        %1288 = vmatprep.subr.bf16.mxu0 0
        %1289 = vmatpush2.bf16.msra.mxu0 0
        %1290 = vmatprep.subr.bf16.mxu0 0
        %1291 = vmatpush2.bf16.msra.mxu0 0
        %1292 = vmatprep.subr.bf16.mxu0 0
        %1293 = vmatpush2.bf16.msra.mxu0 0
        %1294 = vmatprep.subr.bf16.mxu0 0
        %1295 = vmatpush2.bf16.msra.mxu0 0
        %1296 = vmatprep.mubr.bf16.mxu0 0
        %1297 = vmatmul.mubr.bf16.gmra.mxu0 %v1258
        %v1298 = vpop.f32.mrf.mxu0
        %v1299 = vadd.f32 0.0, %v1298
        %v1300 = vpop.f32.mrf.mxu0
        %v1301 = vpop.f32.mrf.mxu0
        %v1302 = vpop.f32.mrf.mxu0
        %1303 = vdwg.mxu0
        %1304 = vrot.lane.b32.xlu0 %v1131, 64
        %v1305 = vpop.permute.xlu0 %1304
        %v1307 = vsel %vm1135, %v1254, 0
        %v1310 = vsel %vm1260, %v1305, 0
        %1312 = vmatprep.subr.bf16.mxu0 0
        %1313 = vmatpush1.bf16.msra.mxu0 0
        %1314 = vmatprep.subr.bf16.mxu0 0
        %1315 = vmatpush1.bf16.msra.mxu0 0
        %1316 = vmatprep.subr.bf16.mxu0 0
        %1317 = vmatpush1.bf16.msra.mxu0 0
        %1318 = vmatprep.subr.bf16.mxu0 0
        %1319 = vmatpush1.bf16.msra.mxu0 0
        %1320 = vmatprep.subr.bf16.mxu0 0
        %1321 = vmatpush1.bf16.msra.mxu0 0
        %1322 = vmatprep.subr.bf16.mxu0 0
        %1323 = vmatpush1.bf16.msra.mxu0 0
        %1324 = vmatprep.subr.bf16.mxu0 0
        %1325 = vmatpush1.bf16.msra.mxu0 0
        %1326 = vmatprep.subr.bf16.mxu0 0
        %1327 = vmatpush1.bf16.msra.mxu0 %v1310
        %1328 = vmatprep.subr.bf16.mxu0 0
        %1329 = vmatpush2.bf16.msra.mxu0 0
        %1330 = vmatprep.subr.bf16.mxu0 0
        %1331 = vmatpush2.bf16.msra.mxu0 0
        %1332 = vmatprep.subr.bf16.mxu0 0
        %1333 = vmatpush2.bf16.msra.mxu0 0
        %1334 = vmatprep.subr.bf16.mxu0 0
        %1335 = vmatpush2.bf16.msra.mxu0 0
        %1336 = vmatprep.subr.bf16.mxu0 0
        %1337 = vmatpush2.bf16.msra.mxu0 0
        %1338 = vmatprep.subr.bf16.mxu0 0
        %1339 = vmatpush2.bf16.msra.mxu0 0
        %1340 = vmatprep.subr.bf16.mxu0 0
        %1341 = vmatpush2.bf16.msra.mxu0 0
        %1342 = vmatprep.subr.bf16.mxu0 0
        %1343 = vmatpush2.bf16.msra.mxu0 0
        %1344 = vmatprep.mubr.bf16.mxu0 0
        %1345 = vmatmul.mubr.bf16.gmra.mxu0 %v1307
        %v1346 = vpop.f32.mrf.mxu0
        %v1347 = vadd.f32 0.0, %v1346
        %v1348 = vpop.f32.mrf.mxu0
        %v1349 = vpop.f32.mrf.mxu0
        %v1350 = vpop.f32.mrf.mxu0
        %1351 = vdwg.mxu0
        %1352 = vrot.lane.b32.xlu0 %v1130, 120
        %v1353 = vpop.permute.xlu0 %1352
        %1354 = vrot.lane.b32.xlu0 %v1130, 88
        %v1355 = vpop.permute.xlu0 %1354
        %v1357 = vsel %vm1135, %v1353, 0
        %v1360 = vsel %vm1135, %v1355, 0
        %1362 = vmatprep.subr.bf16.mxu0 0
        %1363 = vmatpush1.bf16.xpose.msra.mxu0 0
        %1364 = vmatprep.subr.bf16.mxu0 0
        %1365 = vmatpush1.bf16.xpose.msra.mxu0 0
        %1366 = vmatprep.subr.bf16.mxu0 0
        %1367 = vmatpush1.bf16.xpose.msra.mxu0 0
        %1368 = vmatprep.subr.bf16.mxu0 0
        %1369 = vmatpush1.bf16.xpose.msra.mxu0 0
        %1370 = vmatprep.subr.bf16.mxu0 0
        %1371 = vmatpush1.bf16.xpose.msra.mxu0 0
        %1372 = vmatprep.subr.bf16.mxu0 0
        %1373 = vmatpush1.bf16.xpose.msra.mxu0 0
        %1374 = vmatprep.subr.bf16.mxu0 0
        %1375 = vmatpush1.bf16.xpose.msra.mxu0 0
        %1376 = vmatprep.subr.bf16.mxu0 0
        %1377 = vmatpush1.bf16.xpose.msra.mxu0 %v1360
        %1378 = vmatprep.subr.bf16.mxu0 0
        %1379 = vmatpush2.bf16.xpose.msra.mxu0 0
        %1380 = vmatprep.subr.bf16.mxu0 0
        %1381 = vmatpush2.bf16.xpose.msra.mxu0 0
        %1382 = vmatprep.subr.bf16.mxu0 0
        %1383 = vmatpush2.bf16.xpose.msra.mxu0 0
        %1384 = vmatprep.subr.bf16.mxu0 0
        %1385 = vmatpush2.bf16.xpose.msra.mxu0 0
        %1386 = vmatprep.subr.bf16.mxu0 0
        %1387 = vmatpush2.bf16.xpose.msra.mxu0 0
        %1388 = vmatprep.subr.bf16.mxu0 0
        %1389 = vmatpush2.bf16.xpose.msra.mxu0 0
        %1390 = vmatprep.subr.bf16.mxu0 0
        %1391 = vmatpush2.bf16.xpose.msra.mxu0 0
        %1392 = vmatprep.subr.bf16.mxu0 0
        %1393 = vmatpush2.bf16.xpose.msra.mxu0 0
        %1394 = vmatprep.mubr.bf16.mxu0 0
        %1395 = vmatmul.mubr.bf16.gmra.mxu0 %v1357
        %v1396 = vpop.f32.mrf.mxu0
        %v1397 = vadd.f32 0.0, %v1396
        %v1398 = vpop.f32.mrf.mxu0
        %v1399 = vpop.f32.mrf.mxu0
        %v1400 = vpop.f32.mrf.mxu0
        %1401 = vdwg.mxu0
        %1402 = vrot.lane.b32.xlu0 %v1131, 120
        %v1403 = vpop.permute.xlu0 %1402
        %1404 = vrot.lane.b32.xlu0 %v1131, 88
        %v1405 = vpop.permute.xlu0 %1404
        %v1407 = vsel %vm1135, %v1403, 0
        %v1410 = vsel %vm1135, %v1405, 0
        %1412 = vmatprep.subr.bf16.mxu0 0
        %1413 = vmatpush1.bf16.xpose.msra.mxu0 0
        %1414 = vmatprep.subr.bf16.mxu0 0
        %1415 = vmatpush1.bf16.xpose.msra.mxu0 0
        %1416 = vmatprep.subr.bf16.mxu0 0
        %1417 = vmatpush1.bf16.xpose.msra.mxu0 0
        %1418 = vmatprep.subr.bf16.mxu0 0
        %1419 = vmatpush1.bf16.xpose.msra.mxu0 0
        %1420 = vmatprep.subr.bf16.mxu0 0
        %1421 = vmatpush1.bf16.xpose.msra.mxu0 0
        %1422 = vmatprep.subr.bf16.mxu0 0
        %1423 = vmatpush1.bf16.xpose.msra.mxu0 0
        %1424 = vmatprep.subr.bf16.mxu0 0
        %1425 = vmatpush1.bf16.xpose.msra.mxu0 0
        %1426 = vmatprep.subr.bf16.mxu0 0
        %1427 = vmatpush1.bf16.xpose.msra.mxu0 %v1410
        %1428 = vmatprep.subr.bf16.mxu0 0
        %1429 = vmatpush2.bf16.xpose.msra.mxu0 0
        %1430 = vmatprep.subr.bf16.mxu0 0
        %1431 = vmatpush2.bf16.xpose.msra.mxu0 0
        %1432 = vmatprep.subr.bf16.mxu0 0
        %1433 = vmatpush2.bf16.xpose.msra.mxu0 0
        %1434 = vmatprep.subr.bf16.mxu0 0
        %1435 = vmatpush2.bf16.xpose.msra.mxu0 0
        %1436 = vmatprep.subr.bf16.mxu0 0
        %1437 = vmatpush2.bf16.xpose.msra.mxu0 0
        %1438 = vmatprep.subr.bf16.mxu0 0
        %1439 = vmatpush2.bf16.xpose.msra.mxu0 0
        %1440 = vmatprep.subr.bf16.mxu0 0
        %1441 = vmatpush2.bf16.xpose.msra.mxu0 0
        %1442 = vmatprep.subr.bf16.mxu0 0
        %1443 = vmatpush2.bf16.xpose.msra.mxu0 0
        %1444 = vmatprep.mubr.bf16.mxu0 0
        %1445 = vmatmul.mubr.bf16.gmra.mxu0 %v1407
        %v1446 = vpop.f32.mrf.mxu0
        %v1447 = vadd.f32 0.0, %v1446
        %v1448 = vpop.f32.mrf.mxu0
        %v1449 = vpop.f32.mrf.mxu0
        %v1450 = vpop.f32.mrf.mxu0
        %1451 = vdwg.mxu0
        %v1452 = vsel %vm1135, %v1397, -inf
        %1453 = vmax.xlane.f32.xlu0 %v1452
        %v1454 = vpop.xlane.xlu0 %1453
        %v1455 = vsel %vm1135, %v1447, -inf
        %1456 = vmax.xlane.f32.xlu0 %v1455
        %v1457 = vpop.xlane.xlu0 %1456
        %v1458 = vsub.f32 %v1397, %v1454
        %v1459 = vsub.f32 %v1447, %v1457
        %v1460 = vmul.f32 %v1458, 1.442695
        %v1461 = vpow.pop %v1460
        %v1462 = vmul.f32 %v1459, 1.442695
        %v1463 = vpow.pop %v1462
        %v1464 = vsel %vm1135, %v1461, 0.0
        %1465 = vadd.xlane.f32.xlu0 %v1464
        %v1466 = vpop.xlane.xlu0 %1465
        %v1467 = vsel %vm1135, %v1463, 0.0
        %1468 = vadd.xlane.f32.xlu0 %v1467
        %v1469 = vpop.xlane.xlu0 %1468
        %v1470 = vrcp.pop %v1466
        %v1471 = vrcp.pop %v1469
        %v1472 = vmul.f32 %v1461, %v1470
        %v1473 = vmul.f32 %v1463, %v1471
        %v1474 = vpack.c.bf16 %v1472, %v1472
        %v1475 = vpack.c.bf16 %v1473, %v1473
        %1476 = vrot.lane.b32.xlu0 %v1130, 56
        %v1477 = vpop.permute.xlu0 %1476
        %v1479 = vsel %vm1135, %v1474, 0
        %v1482 = vsel %vm1260, %v1477, 0
        %1484 = vmatprep.subr.bf16.mxu0 0
        %1485 = vmatpush1.bf16.msra.mxu0 0
        %1486 = vmatprep.subr.bf16.mxu0 0
        %1487 = vmatpush1.bf16.msra.mxu0 0
        %1488 = vmatprep.subr.bf16.mxu0 0
        %1489 = vmatpush1.bf16.msra.mxu0 0
        %1490 = vmatprep.subr.bf16.mxu0 0
        %1491 = vmatpush1.bf16.msra.mxu0 0
        %1492 = vmatprep.subr.bf16.mxu0 0
        %1493 = vmatpush1.bf16.msra.mxu0 0
        %1494 = vmatprep.subr.bf16.mxu0 0
        %1495 = vmatpush1.bf16.msra.mxu0 0
        %1496 = vmatprep.subr.bf16.mxu0 0
        %1497 = vmatpush1.bf16.msra.mxu0 0
        %1498 = vmatprep.subr.bf16.mxu0 0
        %1499 = vmatpush1.bf16.msra.mxu0 %v1482
        %1500 = vmatprep.subr.bf16.mxu0 0
        %1501 = vmatpush2.bf16.msra.mxu0 0
        %1502 = vmatprep.subr.bf16.mxu0 0
        %1503 = vmatpush2.bf16.msra.mxu0 0
        %1504 = vmatprep.subr.bf16.mxu0 0
        %1505 = vmatpush2.bf16.msra.mxu0 0
        %1506 = vmatprep.subr.bf16.mxu0 0
        %1507 = vmatpush2.bf16.msra.mxu0 0
        %1508 = vmatprep.subr.bf16.mxu0 0
        %1509 = vmatpush2.bf16.msra.mxu0 0
        %1510 = vmatprep.subr.bf16.mxu0 0
        %1511 = vmatpush2.bf16.msra.mxu0 0
        %1512 = vmatprep.subr.bf16.mxu0 0
        %1513 = vmatpush2.bf16.msra.mxu0 0
        %1514 = vmatprep.subr.bf16.mxu0 0
        %1515 = vmatpush2.bf16.msra.mxu0 0
        %1516 = vmatprep.mubr.bf16.mxu0 0
        %1517 = vmatmul.mubr.bf16.gmra.mxu0 %v1479
        %v1518 = vpop.f32.mrf.mxu0
        %v1519 = vadd.f32 0.0, %v1518
        %v1520 = vpop.f32.mrf.mxu0
        %v1521 = vpop.f32.mrf.mxu0
        %v1522 = vpop.f32.mrf.mxu0
        %1523 = vdwg.mxu0
        %1524 = vrot.lane.b32.xlu0 %v1131, 56
        %v1525 = vpop.permute.xlu0 %1524
        %v1527 = vsel %vm1135, %v1475, 0
        %v1530 = vsel %vm1260, %v1525, 0
        %1532 = vmatprep.subr.bf16.mxu0 0
        %1533 = vmatpush1.bf16.msra.mxu0 0
        %1534 = vmatprep.subr.bf16.mxu0 0
        %1535 = vmatpush1.bf16.msra.mxu0 0
        %1536 = vmatprep.subr.bf16.mxu0 0
        %1537 = vmatpush1.bf16.msra.mxu0 0
        %1538 = vmatprep.subr.bf16.mxu0 0
        %1539 = vmatpush1.bf16.msra.mxu0 0
        %1540 = vmatprep.subr.bf16.mxu0 0
        %1541 = vmatpush1.bf16.msra.mxu0 0
        %1542 = vmatprep.subr.bf16.mxu0 0
        %1543 = vmatpush1.bf16.msra.mxu0 0
        %1544 = vmatprep.subr.bf16.mxu0 0
        %1545 = vmatpush1.bf16.msra.mxu0 0
        %1546 = vmatprep.subr.bf16.mxu0 0
        %1547 = vmatpush1.bf16.msra.mxu0 %v1530
        %1548 = vmatprep.subr.bf16.mxu0 0
        %1549 = vmatpush2.bf16.msra.mxu0 0
        %1550 = vmatprep.subr.bf16.mxu0 0
        %1551 = vmatpush2.bf16.msra.mxu0 0
        %1552 = vmatprep.subr.bf16.mxu0 0
        %1553 = vmatpush2.bf16.msra.mxu0 0
        %1554 = vmatprep.subr.bf16.mxu0 0
        %1555 = vmatpush2.bf16.msra.mxu0 0
        %1556 = vmatprep.subr.bf16.mxu0 0
        %1557 = vmatpush2.bf16.msra.mxu0 0
        %1558 = vmatprep.subr.bf16.mxu0 0
        %1559 = vmatpush2.bf16.msra.mxu0 0
        %1560 = vmatprep.subr.bf16.mxu0 0
        %1561 = vmatpush2.bf16.msra.mxu0 0
        %1562 = vmatprep.subr.bf16.mxu0 0
        %1563 = vmatpush2.bf16.msra.mxu0 0
        %1564 = vmatprep.mubr.bf16.mxu0 0
        %1565 = vmatmul.mubr.bf16.gmra.mxu0 %v1527
        %v1566 = vpop.f32.mrf.mxu0
        %v1567 = vadd.f32 0.0, %v1566
        %v1568 = vpop.f32.mrf.mxu0
        %v1569 = vpop.f32.mrf.mxu0
        %v1570 = vpop.f32.mrf.mxu0
        %1571 = vdwg.mxu0
        %1572 = vrot.lane.b32.xlu0 %v1130, 112
        %v1573 = vpop.permute.xlu0 %1572
        %1574 = vrot.lane.b32.xlu0 %v1130, 80
        %v1575 = vpop.permute.xlu0 %1574
        %v1577 = vsel %vm1135, %v1573, 0
        %v1580 = vsel %vm1135, %v1575, 0
        %1582 = vmatprep.subr.bf16.mxu0 0
        %1583 = vmatpush1.bf16.xpose.msra.mxu0 0
        %1584 = vmatprep.subr.bf16.mxu0 0
        %1585 = vmatpush1.bf16.xpose.msra.mxu0 0
        %1586 = vmatprep.subr.bf16.mxu0 0
        %1587 = vmatpush1.bf16.xpose.msra.mxu0 0
        %1588 = vmatprep.subr.bf16.mxu0 0
        %1589 = vmatpush1.bf16.xpose.msra.mxu0 0
        %1590 = vmatprep.subr.bf16.mxu0 0
        %1591 = vmatpush1.bf16.xpose.msra.mxu0 0
        %1592 = vmatprep.subr.bf16.mxu0 0
        %1593 = vmatpush1.bf16.xpose.msra.mxu0 0
        %1594 = vmatprep.subr.bf16.mxu0 0
        %1595 = vmatpush1.bf16.xpose.msra.mxu0 0
        %1596 = vmatprep.subr.bf16.mxu0 0
        %1597 = vmatpush1.bf16.xpose.msra.mxu0 %v1580
        %1598 = vmatprep.subr.bf16.mxu0 0
        %1599 = vmatpush2.bf16.xpose.msra.mxu0 0
        %1600 = vmatprep.subr.bf16.mxu0 0
        %1601 = vmatpush2.bf16.xpose.msra.mxu0 0
        %1602 = vmatprep.subr.bf16.mxu0 0
        %1603 = vmatpush2.bf16.xpose.msra.mxu0 0
        %1604 = vmatprep.subr.bf16.mxu0 0
        %1605 = vmatpush2.bf16.xpose.msra.mxu0 0
        %1606 = vmatprep.subr.bf16.mxu0 0
        %1607 = vmatpush2.bf16.xpose.msra.mxu0 0
        %1608 = vmatprep.subr.bf16.mxu0 0
        %1609 = vmatpush2.bf16.xpose.msra.mxu0 0
        %1610 = vmatprep.subr.bf16.mxu0 0
        %1611 = vmatpush2.bf16.xpose.msra.mxu0 0
        %1612 = vmatprep.subr.bf16.mxu0 0
        %1613 = vmatpush2.bf16.xpose.msra.mxu0 0
        %1614 = vmatprep.mubr.bf16.mxu0 0
        %1615 = vmatmul.mubr.bf16.gmra.mxu0 %v1577
        %v1616 = vpop.f32.mrf.mxu0
        %v1617 = vadd.f32 0.0, %v1616
        %v1618 = vpop.f32.mrf.mxu0
        %v1619 = vpop.f32.mrf.mxu0
        %v1620 = vpop.f32.mrf.mxu0
        %1621 = vdwg.mxu0
        %1622 = vrot.lane.b32.xlu0 %v1131, 112
        %v1623 = vpop.permute.xlu0 %1622
        %1624 = vrot.lane.b32.xlu0 %v1131, 80
        %v1625 = vpop.permute.xlu0 %1624
        %v1627 = vsel %vm1135, %v1623, 0
        %v1630 = vsel %vm1135, %v1625, 0
        %1632 = vmatprep.subr.bf16.mxu0 0
        %1633 = vmatpush1.bf16.xpose.msra.mxu0 0
        %1634 = vmatprep.subr.bf16.mxu0 0
        %1635 = vmatpush1.bf16.xpose.msra.mxu0 0
        %1636 = vmatprep.subr.bf16.mxu0 0
        %1637 = vmatpush1.bf16.xpose.msra.mxu0 0
        %1638 = vmatprep.subr.bf16.mxu0 0
        %1639 = vmatpush1.bf16.xpose.msra.mxu0 0
        %1640 = vmatprep.subr.bf16.mxu0 0
        %1641 = vmatpush1.bf16.xpose.msra.mxu0 0
        %1642 = vmatprep.subr.bf16.mxu0 0
        %1643 = vmatpush1.bf16.xpose.msra.mxu0 0
        %1644 = vmatprep.subr.bf16.mxu0 0
        %1645 = vmatpush1.bf16.xpose.msra.mxu0 0
        %1646 = vmatprep.subr.bf16.mxu0 0
        %1647 = vmatpush1.bf16.xpose.msra.mxu0 %v1630
        %1648 = vmatprep.subr.bf16.mxu0 0
        %1649 = vmatpush2.bf16.xpose.msra.mxu0 0
        %1650 = vmatprep.subr.bf16.mxu0 0
        %1651 = vmatpush2.bf16.xpose.msra.mxu0 0
        %1652 = vmatprep.subr.bf16.mxu0 0
        %1653 = vmatpush2.bf16.xpose.msra.mxu0 0
        %1654 = vmatprep.subr.bf16.mxu0 0
        %1655 = vmatpush2.bf16.xpose.msra.mxu0 0
        %1656 = vmatprep.subr.bf16.mxu0 0
        %1657 = vmatpush2.bf16.xpose.msra.mxu0 0
        %1658 = vmatprep.subr.bf16.mxu0 0
        %1659 = vmatpush2.bf16.xpose.msra.mxu0 0
        %1660 = vmatprep.subr.bf16.mxu0 0
        %1661 = vmatpush2.bf16.xpose.msra.mxu0 0
        %1662 = vmatprep.subr.bf16.mxu0 0
        %1663 = vmatpush2.bf16.xpose.msra.mxu0 0
        %1664 = vmatprep.mubr.bf16.mxu0 0
        %1665 = vmatmul.mubr.bf16.gmra.mxu0 %v1627
        %v1666 = vpop.f32.mrf.mxu0
        %v1667 = vadd.f32 0.0, %v1666
        %v1668 = vpop.f32.mrf.mxu0
        %v1669 = vpop.f32.mrf.mxu0
        %v1670 = vpop.f32.mrf.mxu0
        %1671 = vdwg.mxu0
        %v1672 = vsel %vm1135, %v1617, -inf
        %1673 = vmax.xlane.f32.xlu0 %v1672
        %v1674 = vpop.xlane.xlu0 %1673
        %v1675 = vsel %vm1135, %v1667, -inf
        %1676 = vmax.xlane.f32.xlu0 %v1675
        %v1677 = vpop.xlane.xlu0 %1676
        %v1678 = vsub.f32 %v1617, %v1674
        %v1679 = vsub.f32 %v1667, %v1677
        %v1680 = vmul.f32 %v1678, 1.442695
        %v1681 = vpow.pop %v1680
        %v1682 = vmul.f32 %v1679, 1.442695
        %v1683 = vpow.pop %v1682
        %v1684 = vsel %vm1135, %v1681, 0.0
        %1685 = vadd.xlane.f32.xlu0 %v1684
        %v1686 = vpop.xlane.xlu0 %1685
        %v1687 = vsel %vm1135, %v1683, 0.0
        %1688 = vadd.xlane.f32.xlu0 %v1687
        %v1689 = vpop.xlane.xlu0 %1688
        %v1690 = vrcp.pop %v1686
        %v1691 = vrcp.pop %v1689
        %v1692 = vmul.f32 %v1681, %v1690
        %v1693 = vmul.f32 %v1683, %v1691
        %v1694 = vpack.c.bf16 %v1692, %v1692
        %v1695 = vpack.c.bf16 %v1693, %v1693
        %1696 = vrot.lane.b32.xlu0 %v1130, 48
        %v1697 = vpop.permute.xlu0 %1696
        %v1699 = vsel %vm1135, %v1694, 0
        %v1702 = vsel %vm1260, %v1697, 0
        %1704 = vmatprep.subr.bf16.mxu0 0
        %1705 = vmatpush1.bf16.msra.mxu0 0
        %1706 = vmatprep.subr.bf16.mxu0 0
        %1707 = vmatpush1.bf16.msra.mxu0 0
        %1708 = vmatprep.subr.bf16.mxu0 0
        %1709 = vmatpush1.bf16.msra.mxu0 0
        %1710 = vmatprep.subr.bf16.mxu0 0
        %1711 = vmatpush1.bf16.msra.mxu0 0
        %1712 = vmatprep.subr.bf16.mxu0 0
        %1713 = vmatpush1.bf16.msra.mxu0 0
        %1714 = vmatprep.subr.bf16.mxu0 0
        %1715 = vmatpush1.bf16.msra.mxu0 0
        %1716 = vmatprep.subr.bf16.mxu0 0
        %1717 = vmatpush1.bf16.msra.mxu0 0
        %1718 = vmatprep.subr.bf16.mxu0 0
        %1719 = vmatpush1.bf16.msra.mxu0 %v1702
        %1720 = vmatprep.subr.bf16.mxu0 0
        %1721 = vmatpush2.bf16.msra.mxu0 0
        %1722 = vmatprep.subr.bf16.mxu0 0
        %1723 = vmatpush2.bf16.msra.mxu0 0
        %1724 = vmatprep.subr.bf16.mxu0 0
        %1725 = vmatpush2.bf16.msra.mxu0 0
        %1726 = vmatprep.subr.bf16.mxu0 0
        %1727 = vmatpush2.bf16.msra.mxu0 0
        %1728 = vmatprep.subr.bf16.mxu0 0
        %1729 = vmatpush2.bf16.msra.mxu0 0
        %1730 = vmatprep.subr.bf16.mxu0 0
        %1731 = vmatpush2.bf16.msra.mxu0 0
        %1732 = vmatprep.subr.bf16.mxu0 0
        %1733 = vmatpush2.bf16.msra.mxu0 0
        %1734 = vmatprep.subr.bf16.mxu0 0
        %1735 = vmatpush2.bf16.msra.mxu0 0
        %1736 = vmatprep.mubr.bf16.mxu0 0
        %1737 = vmatmul.mubr.bf16.gmra.mxu0 %v1699
        %v1738 = vpop.f32.mrf.mxu0
        %v1739 = vadd.f32 0.0, %v1738
        %v1740 = vpop.f32.mrf.mxu0
        %v1741 = vpop.f32.mrf.mxu0
        %v1742 = vpop.f32.mrf.mxu0
        %1743 = vdwg.mxu0
        %1744 = vrot.lane.b32.xlu0 %v1131, 48
        %v1745 = vpop.permute.xlu0 %1744
        %v1747 = vsel %vm1135, %v1695, 0
        %v1750 = vsel %vm1260, %v1745, 0
        %1752 = vmatprep.subr.bf16.mxu0 0
        %1753 = vmatpush1.bf16.msra.mxu0 0
        %1754 = vmatprep.subr.bf16.mxu0 0
        %1755 = vmatpush1.bf16.msra.mxu0 0
        %1756 = vmatprep.subr.bf16.mxu0 0
        %1757 = vmatpush1.bf16.msra.mxu0 0
        %1758 = vmatprep.subr.bf16.mxu0 0
        %1759 = vmatpush1.bf16.msra.mxu0 0
        %1760 = vmatprep.subr.bf16.mxu0 0
        %1761 = vmatpush1.bf16.msra.mxu0 0
        %1762 = vmatprep.subr.bf16.mxu0 0
        %1763 = vmatpush1.bf16.msra.mxu0 0
        %1764 = vmatprep.subr.bf16.mxu0 0
        %1765 = vmatpush1.bf16.msra.mxu0 0
        %1766 = vmatprep.subr.bf16.mxu0 0
        %1767 = vmatpush1.bf16.msra.mxu0 %v1750
        %1768 = vmatprep.subr.bf16.mxu0 0
        %1769 = vmatpush2.bf16.msra.mxu0 0
        %1770 = vmatprep.subr.bf16.mxu0 0
        %1771 = vmatpush2.bf16.msra.mxu0 0
        %1772 = vmatprep.subr.bf16.mxu0 0
        %1773 = vmatpush2.bf16.msra.mxu0 0
        %1774 = vmatprep.subr.bf16.mxu0 0
        %1775 = vmatpush2.bf16.msra.mxu0 0
        %1776 = vmatprep.subr.bf16.mxu0 0
        %1777 = vmatpush2.bf16.msra.mxu0 0
        %1778 = vmatprep.subr.bf16.mxu0 0
        %1779 = vmatpush2.bf16.msra.mxu0 0
        %1780 = vmatprep.subr.bf16.mxu0 0
        %1781 = vmatpush2.bf16.msra.mxu0 0
        %1782 = vmatprep.subr.bf16.mxu0 0
        %1783 = vmatpush2.bf16.msra.mxu0 0
        %1784 = vmatprep.mubr.bf16.mxu0 0
        %1785 = vmatmul.mubr.bf16.gmra.mxu0 %v1747
        %v1786 = vpop.f32.mrf.mxu0
        %v1787 = vadd.f32 0.0, %v1786
        %v1788 = vpop.f32.mrf.mxu0
        %v1789 = vpop.f32.mrf.mxu0
        %v1790 = vpop.f32.mrf.mxu0
        %1791 = vdwg.mxu0
        %1792 = vrot.lane.b32.xlu0 %v1130, 104
        %v1793 = vpop.permute.xlu0 %1792
        %1794 = vrot.lane.b32.xlu0 %v1130, 72
        %v1795 = vpop.permute.xlu0 %1794
        %v1797 = vsel %vm1135, %v1793, 0
        %v1800 = vsel %vm1135, %v1795, 0
        %1802 = vmatprep.subr.bf16.mxu0 0
        %1803 = vmatpush1.bf16.xpose.msra.mxu0 0
        %1804 = vmatprep.subr.bf16.mxu0 0
        %1805 = vmatpush1.bf16.xpose.msra.mxu0 0
        %1806 = vmatprep.subr.bf16.mxu0 0
        %1807 = vmatpush1.bf16.xpose.msra.mxu0 0
        %1808 = vmatprep.subr.bf16.mxu0 0
        %1809 = vmatpush1.bf16.xpose.msra.mxu0 0
        %1810 = vmatprep.subr.bf16.mxu0 0
        %1811 = vmatpush1.bf16.xpose.msra.mxu0 0
        %1812 = vmatprep.subr.bf16.mxu0 0
        %1813 = vmatpush1.bf16.xpose.msra.mxu0 0
        %1814 = vmatprep.subr.bf16.mxu0 0
        %1815 = vmatpush1.bf16.xpose.msra.mxu0 0
        %1816 = vmatprep.subr.bf16.mxu0 0
        %1817 = vmatpush1.bf16.xpose.msra.mxu0 %v1800
        %1818 = vmatprep.subr.bf16.mxu0 0
        %1819 = vmatpush2.bf16.xpose.msra.mxu0 0
        %1820 = vmatprep.subr.bf16.mxu0 0
        %1821 = vmatpush2.bf16.xpose.msra.mxu0 0
        %1822 = vmatprep.subr.bf16.mxu0 0
        %1823 = vmatpush2.bf16.xpose.msra.mxu0 0
        %1824 = vmatprep.subr.bf16.mxu0 0
        %1825 = vmatpush2.bf16.xpose.msra.mxu0 0
        %1826 = vmatprep.subr.bf16.mxu0 0
        %1827 = vmatpush2.bf16.xpose.msra.mxu0 0
        %1828 = vmatprep.subr.bf16.mxu0 0
        %1829 = vmatpush2.bf16.xpose.msra.mxu0 0
        %1830 = vmatprep.subr.bf16.mxu0 0
        %1831 = vmatpush2.bf16.xpose.msra.mxu0 0
        %1832 = vmatprep.subr.bf16.mxu0 0
        %1833 = vmatpush2.bf16.xpose.msra.mxu0 0
        %1834 = vmatprep.mubr.bf16.mxu0 0
        %1835 = vmatmul.mubr.bf16.gmra.mxu0 %v1797
        %v1836 = vpop.f32.mrf.mxu0
        %v1837 = vadd.f32 0.0, %v1836
        %v1838 = vpop.f32.mrf.mxu0
        %v1839 = vpop.f32.mrf.mxu0
        %v1840 = vpop.f32.mrf.mxu0
        %1841 = vdwg.mxu0
        %1842 = vrot.lane.b32.xlu0 %v1131, 104
        %v1843 = vpop.permute.xlu0 %1842
        %1844 = vrot.lane.b32.xlu0 %v1131, 72
        %v1845 = vpop.permute.xlu0 %1844
        %v1847 = vsel %vm1135, %v1843, 0
        %v1850 = vsel %vm1135, %v1845, 0
        %1852 = vmatprep.subr.bf16.mxu0 0
        %1853 = vmatpush1.bf16.xpose.msra.mxu0 0
        %1854 = vmatprep.subr.bf16.mxu0 0
        %1855 = vmatpush1.bf16.xpose.msra.mxu0 0
        %1856 = vmatprep.subr.bf16.mxu0 0
        %1857 = vmatpush1.bf16.xpose.msra.mxu0 0
        %1858 = vmatprep.subr.bf16.mxu0 0
        %1859 = vmatpush1.bf16.xpose.msra.mxu0 0
        %1860 = vmatprep.subr.bf16.mxu0 0
        %1861 = vmatpush1.bf16.xpose.msra.mxu0 0
        %1862 = vmatprep.subr.bf16.mxu0 0
        %1863 = vmatpush1.bf16.xpose.msra.mxu0 0
        %1864 = vmatprep.subr.bf16.mxu0 0
        %1865 = vmatpush1.bf16.xpose.msra.mxu0 0
        %1866 = vmatprep.subr.bf16.mxu0 0
        %1867 = vmatpush1.bf16.xpose.msra.mxu0 %v1850
        %1868 = vmatprep.subr.bf16.mxu0 0
        %1869 = vmatpush2.bf16.xpose.msra.mxu0 0
        %1870 = vmatprep.subr.bf16.mxu0 0
        %1871 = vmatpush2.bf16.xpose.msra.mxu0 0
        %1872 = vmatprep.subr.bf16.mxu0 0
        %1873 = vmatpush2.bf16.xpose.msra.mxu0 0
        %1874 = vmatprep.subr.bf16.mxu0 0
        %1875 = vmatpush2.bf16.xpose.msra.mxu0 0
        %1876 = vmatprep.subr.bf16.mxu0 0
        %1877 = vmatpush2.bf16.xpose.msra.mxu0 0
        %1878 = vmatprep.subr.bf16.mxu0 0
        %1879 = vmatpush2.bf16.xpose.msra.mxu0 0
        %1880 = vmatprep.subr.bf16.mxu0 0
        %1881 = vmatpush2.bf16.xpose.msra.mxu0 0
        %1882 = vmatprep.subr.bf16.mxu0 0
        %1883 = vmatpush2.bf16.xpose.msra.mxu0 0
        %1884 = vmatprep.mubr.bf16.mxu0 0
        %1885 = vmatmul.mubr.bf16.gmra.mxu0 %v1847
        %v1886 = vpop.f32.mrf.mxu0
        %v1887 = vadd.f32 0.0, %v1886
        %v1888 = vpop.f32.mrf.mxu0
        %v1889 = vpop.f32.mrf.mxu0
        %v1890 = vpop.f32.mrf.mxu0
        %1891 = vdwg.mxu0
        %v1892 = vsel %vm1135, %v1837, -inf
        %1893 = vmax.xlane.f32.xlu0 %v1892
        %v1894 = vpop.xlane.xlu0 %1893
        %v1895 = vsel %vm1135, %v1887, -inf
        %1896 = vmax.xlane.f32.xlu0 %v1895
        %v1897 = vpop.xlane.xlu0 %1896
        %v1898 = vsub.f32 %v1837, %v1894
        %v1899 = vsub.f32 %v1887, %v1897
        %v1900 = vmul.f32 %v1898, 1.442695
        %v1901 = vpow.pop %v1900
        %v1902 = vmul.f32 %v1899, 1.442695
        %v1903 = vpow.pop %v1902
        %v1904 = vsel %vm1135, %v1901, 0.0
        %1905 = vadd.xlane.f32.xlu0 %v1904
        %v1906 = vpop.xlane.xlu0 %1905
        %v1907 = vsel %vm1135, %v1903, 0.0
        %1908 = vadd.xlane.f32.xlu0 %v1907
        %v1909 = vpop.xlane.xlu0 %1908
        %v1910 = vrcp.pop %v1906
        %v1911 = vrcp.pop %v1909
        %v1912 = vmul.f32 %v1901, %v1910
        %v1913 = vmul.f32 %v1903, %v1911
        %v1914 = vpack.c.bf16 %v1912, %v1912
        %v1915 = vpack.c.bf16 %v1913, %v1913
        %1916 = vrot.lane.b32.xlu0 %v1130, 40
        %v1917 = vpop.permute.xlu0 %1916
        %v1919 = vsel %vm1135, %v1914, 0
        %v1922 = vsel %vm1260, %v1917, 0
        %1924 = vmatprep.subr.bf16.mxu0 0
        %1925 = vmatpush1.bf16.msra.mxu0 0
        %1926 = vmatprep.subr.bf16.mxu0 0
        %1927 = vmatpush1.bf16.msra.mxu0 0
        %1928 = vmatprep.subr.bf16.mxu0 0
        %1929 = vmatpush1.bf16.msra.mxu0 0
        %1930 = vmatprep.subr.bf16.mxu0 0
        %1931 = vmatpush1.bf16.msra.mxu0 0
        %1932 = vmatprep.subr.bf16.mxu0 0
        %1933 = vmatpush1.bf16.msra.mxu0 0
        %1934 = vmatprep.subr.bf16.mxu0 0
        %1935 = vmatpush1.bf16.msra.mxu0 0
        %1936 = vmatprep.subr.bf16.mxu0 0
        %1937 = vmatpush1.bf16.msra.mxu0 0
        %1938 = vmatprep.subr.bf16.mxu0 0
        %1939 = vmatpush1.bf16.msra.mxu0 %v1922
        %1940 = vmatprep.subr.bf16.mxu0 0
        %1941 = vmatpush2.bf16.msra.mxu0 0
        %1942 = vmatprep.subr.bf16.mxu0 0
        %1943 = vmatpush2.bf16.msra.mxu0 0
        %1944 = vmatprep.subr.bf16.mxu0 0
        %1945 = vmatpush2.bf16.msra.mxu0 0
        %1946 = vmatprep.subr.bf16.mxu0 0
        %1947 = vmatpush2.bf16.msra.mxu0 0
        %1948 = vmatprep.subr.bf16.mxu0 0
        %1949 = vmatpush2.bf16.msra.mxu0 0
        %1950 = vmatprep.subr.bf16.mxu0 0
        %1951 = vmatpush2.bf16.msra.mxu0 0
        %1952 = vmatprep.subr.bf16.mxu0 0
        %1953 = vmatpush2.bf16.msra.mxu0 0
        %1954 = vmatprep.subr.bf16.mxu0 0
        %1955 = vmatpush2.bf16.msra.mxu0 0
        %1956 = vmatprep.mubr.bf16.mxu0 0
        %1957 = vmatmul.mubr.bf16.gmra.mxu0 %v1919
        %v1958 = vpop.f32.mrf.mxu0
        %v1959 = vadd.f32 0.0, %v1958
        %v1960 = vpop.f32.mrf.mxu0
        %v1961 = vpop.f32.mrf.mxu0
        %v1962 = vpop.f32.mrf.mxu0
        %1963 = vdwg.mxu0
        %1964 = vrot.lane.b32.xlu0 %v1131, 40
        %v1965 = vpop.permute.xlu0 %1964
        %v1967 = vsel %vm1135, %v1915, 0
        %v1970 = vsel %vm1260, %v1965, 0
        %1972 = vmatprep.subr.bf16.mxu0 0
        %1973 = vmatpush1.bf16.msra.mxu0 0
        %1974 = vmatprep.subr.bf16.mxu0 0
        %1975 = vmatpush1.bf16.msra.mxu0 0
        %1976 = vmatprep.subr.bf16.mxu0 0
        %1977 = vmatpush1.bf16.msra.mxu0 0
        %1978 = vmatprep.subr.bf16.mxu0 0
        %1979 = vmatpush1.bf16.msra.mxu0 0
        %1980 = vmatprep.subr.bf16.mxu0 0
        %1981 = vmatpush1.bf16.msra.mxu0 0
        %1982 = vmatprep.subr.bf16.mxu0 0
        %1983 = vmatpush1.bf16.msra.mxu0 0
        %1984 = vmatprep.subr.bf16.mxu0 0
        %1985 = vmatpush1.bf16.msra.mxu0 0
        %1986 = vmatprep.subr.bf16.mxu0 0
        %1987 = vmatpush1.bf16.msra.mxu0 %v1970
        %1988 = vmatprep.subr.bf16.mxu0 0
        %1989 = vmatpush2.bf16.msra.mxu0 0
        %1990 = vmatprep.subr.bf16.mxu0 0
        %1991 = vmatpush2.bf16.msra.mxu0 0
        %1992 = vmatprep.subr.bf16.mxu0 0
        %1993 = vmatpush2.bf16.msra.mxu0 0
        %1994 = vmatprep.subr.bf16.mxu0 0
        %1995 = vmatpush2.bf16.msra.mxu0 0
        %1996 = vmatprep.subr.bf16.mxu0 0
        %1997 = vmatpush2.bf16.msra.mxu0 0
        %1998 = vmatprep.subr.bf16.mxu0 0
        %1999 = vmatpush2.bf16.msra.mxu0 0
        %2000 = vmatprep.subr.bf16.mxu0 0
        %2001 = vmatpush2.bf16.msra.mxu0 0
        %2002 = vmatprep.subr.bf16.mxu0 0
        %2003 = vmatpush2.bf16.msra.mxu0 0
        %2004 = vmatprep.mubr.bf16.mxu0 0
        %2005 = vmatmul.mubr.bf16.gmra.mxu0 %v1967
        %v2006 = vpop.f32.mrf.mxu0
        %v2007 = vadd.f32 0.0, %v2006
        %v2008 = vpop.f32.mrf.mxu0
        %v2009 = vpop.f32.mrf.mxu0
        %v2010 = vpop.f32.mrf.mxu0
        %2011 = vdwg.mxu0
        %2014 = vrot.lane.b32.xlu0 %v1519, 8
        %v2015 = vpop.permute.xlu0 %2014
        %2016 = vrot.lane.b32.xlu0 %v1567, 8
        %v2017 = vpop.permute.xlu0 %2016
        %2022 = vrot.lane.b32.xlu0 %v1739, 16
        %v2023 = vpop.permute.xlu0 %2022
        %2024 = vrot.lane.b32.xlu0 %v1787, 16
        %v2025 = vpop.permute.xlu0 %2024
        %2030 = vrot.lane.b32.xlu0 %v1959, 24
        %v2031 = vpop.permute.xlu0 %2030
        %2032 = vrot.lane.b32.xlu0 %v2007, 24
        %v2033 = vpop.permute.xlu0 %2032
        %v2036 = vsel %vm1135, %v1299, %v2015
        %v2037 = vsel %vm1135, %v1347, %v2017
        %vm2038 = vcmask 130048
        %v2039 = vsel %vm2038, %v2036, %v2023
        %v2040 = vsel %vm2038, %v2037, %v2025
        %vm2041 = vcmask 195584
        %v2042 = vsel %vm2041, %v2039, %v2031
        %v2043 = vsel %vm2041, %v2040, %v2033
        %v2044 = vpack.c.bf16 %v2043, %v2042
        %v2045 = vld [vmem:[%s991] sm:$0xf]
        %v2046 = vld [vmem:[%s991 + $0x4] sm:$0xf]
        %v2047 = vld [vmem:[%s991 + $0x8] sm:$0xf]
        %v2048 = vld [vmem:[%s991 + $0xc] sm:$0xf]
        %v2049 = vld [vmem:[%s835] sm:$0x1]
        %v2051 = vlaneseq
        %v2052 = vshrl.u32 %v2051, 7
        %v2053 = vsub.s32 0, %v2052
        %v2054 = vrot.slane %v2049, %v2053
        %v2060 = vunpack.c.l.b16 %v2045
        %v2061 = vunpack.c.l.b16 %v2046
        %v2062 = vunpack.c.l.b16 %v2047
        %v2063 = vunpack.c.l.b16 %v2048
        %v2064 = vpack.c.b16 %v2061, %v2060
        %v2065 = vpack.c.b16 %v2063, %v2062
        %v2069 = vsel %vm1085, %v2044, 0
        %2071 = vmatprep.subr.bf16.mxu0 0
        %2072 = vmatpush1.bf16.msra.mxu0 0
        %2073 = vmatprep.subr.bf16.mxu0 0
        %2074 = vmatpush1.bf16.msra.mxu0 0
        %2075 = vmatprep.subr.bf16.mxu0 0
        %2076 = vmatpush1.bf16.msra.mxu0 0
        %2077 = vmatprep.subr.bf16.mxu0 0
        %2078 = vmatpush1.bf16.msra.mxu0 0
        %2079 = vmatprep.subr.bf16.mxu0 0
        %2080 = vmatpush1.bf16.msra.mxu0 0
        %2081 = vmatprep.subr.bf16.mxu0 0
        %2082 = vmatpush1.bf16.msra.mxu0 0
        %2083 = vmatprep.subr.bf16.mxu0 0
        %2084 = vmatpush1.bf16.msra.mxu0 %v2065
        %2085 = vmatprep.subr.bf16.mxu0 0
        %2086 = vmatpush1.bf16.msra.mxu0 %v2064
        %2087 = vmatprep.subr.bf16.mxu0 0
        %2088 = vmatpush2.bf16.msra.mxu0 0
        %2089 = vmatprep.subr.bf16.mxu0 0
        %2090 = vmatpush2.bf16.msra.mxu0 0
        %2091 = vmatprep.subr.bf16.mxu0 0
        %2092 = vmatpush2.bf16.msra.mxu0 0
        %2093 = vmatprep.subr.bf16.mxu0 0
        %2094 = vmatpush2.bf16.msra.mxu0 0
        %2095 = vmatprep.subr.bf16.mxu0 0
        %2096 = vmatpush2.bf16.msra.mxu0 0
        %2097 = vmatprep.subr.bf16.mxu0 0
        %2098 = vmatpush2.bf16.msra.mxu0 0
        %2099 = vmatprep.subr.bf16.mxu0 0
        %2100 = vmatpush2.bf16.msra.mxu0 0
        %2101 = vmatprep.subr.bf16.mxu0 0
        %2102 = vmatpush2.bf16.msra.mxu0 0
        %2103 = vmatprep.mubr.bf16.mxu0 0
        %2104 = vmatmul.mubr.bf16.gmra.mxu0 %v2069
        %v2105 = vpop.f32.mrf.mxu0
        %v2106 = vadd.f32 %v2054, %v2105
        %v2107 = vpop.f32.mrf.mxu0
        %v2108 = vpop.f32.mrf.mxu0
        %v2109 = vadd.f32 %v2054, %v2108
        %v2110 = vpop.f32.mrf.mxu0
        %2111 = vdwg.mxu0
        %v2112 = vadd.f32 %v1054, %v2106
        %v2113 = vadd.f32 %v1055, %v2109
        %v2114 = vld [vmem:[%s1028] sm:$0x1]
        %v2115 = vld [vmem:[%s1031] sm:$0x1]
        %v2116 = vsel %vm1085, %v2112, 0.0
        %2117 = vadd.xlane.f32.xlu0 %v2116
        %v2118 = vpop.xlane.xlu0 %2117
        %v2119 = vsel %vm1085, %v2113, 0.0
        %2120 = vadd.xlane.f32.xlu0 %v2119
        %v2121 = vpop.xlane.xlu0 %2120
        %v2122 = vrcp.pop 32.0
        %v2123 = vmul.f32 %v2118, %v2122
        %v2124 = vmul.f32 %v2121, %v2122
        %v2125 = vsub.f32 %v2112, %v2123
        %v2126 = vsub.f32 %v2113, %v2124
        %v2127 = vmul.f32 %v2125, %v2125
        %v2128 = vmul.f32 %v2126, %v2126
        %v2129 = vsel %vm1085, %v2127, 0.0
        %2130 = vadd.xlane.f32.xlu0 %v2129
        %v2131 = vpop.xlane.xlu0 %2130
        %v2132 = vsel %vm1085, %v2128, 0.0
        %2133 = vadd.xlane.f32.xlu0 %v2132
        %v2134 = vpop.xlane.xlu0 %2133
        %v2135 = vmul.f32 %v2131, %v2122
        %v2136 = vmul.f32 %v2134, %v2122
        %v2137 = vadd.f32 %v2135, 1e-05
        %v2138 = vadd.f32 %v2136, 1e-05
        %v2139 = vrsqrt.pop %v2137
        %v2140 = vrsqrt.pop %v2138
        %v2141 = vmul.f32 %v2125, %v2139
        %v2142 = vmul.f32 %v2126, %v2140
        %v2144 = vlaneseq
        %v2145 = vshrl.u32 %v2144, 7
        %v2146 = vsub.s32 0, %v2145
        %v2147 = vrot.slane %v2114, %v2146
        %v2149 = vmul.f32 %v2141, %v2147
        %v2150 = vmul.f32 %v2142, %v2147
        %v2152 = vlaneseq
        %v2153 = vshrl.u32 %v2152, 7
        %v2154 = vsub.s32 0, %v2153
        %v2155 = vrot.slane %v2115, %v2154
        %v2157 = vadd.f32 %v2149, %v2155
        %v2158 = vadd.f32 %v2150, %v2155
        %v2159 = vpack.c.bf16 %v2158, %v2157
        %v2160 = vld [vmem:[%s996] sm:$0xf]
        %v2161 = vld [vmem:[%s996 + $0x4] sm:$0xf]
        %v2162 = vld [vmem:[%s996 + $0x8] sm:$0xf]
        %v2163 = vld [vmem:[%s996 + $0xc] sm:$0xf]
        %v2164 = vld [vmem:[%s843] sm:$0x1]
        %v2166 = vlaneseq
        %v2167 = vshrl.u32 %v2166, 7
        %v2168 = vsub.s32 0, %v2167
        %v2169 = vrot.slane %v2164, %v2168
        %v2175 = vunpack.c.l.b16 %v2160
        %v2176 = vunpack.c.l.b16 %v2161
        %v2177 = vunpack.c.l.b16 %v2162
        %v2178 = vunpack.c.l.b16 %v2163
        %v2179 = vpack.c.b16 %v2176, %v2175
        %v2180 = vpack.c.b16 %v2178, %v2177
        %v2184 = vsel %vm1085, %v2159, 0
        %2186 = vmatprep.subr.bf16.mxu0 0
        %2187 = vmatpush1.bf16.msra.mxu0 0
        %2188 = vmatprep.subr.bf16.mxu0 0
        %2189 = vmatpush1.bf16.msra.mxu0 0
        %2190 = vmatprep.subr.bf16.mxu0 0
        %2191 = vmatpush1.bf16.msra.mxu0 0
        %2192 = vmatprep.subr.bf16.mxu0 0
        %2193 = vmatpush1.bf16.msra.mxu0 0
        %2194 = vmatprep.subr.bf16.mxu0 0
        %2195 = vmatpush1.bf16.msra.mxu0 0
        %2196 = vmatprep.subr.bf16.mxu0 0
        %2197 = vmatpush1.bf16.msra.mxu0 0
        %2198 = vmatprep.subr.bf16.mxu0 0
        %2199 = vmatpush1.bf16.msra.mxu0 %v2180
        %2200 = vmatprep.subr.bf16.mxu0 0
        %2201 = vmatpush1.bf16.msra.mxu0 %v2179
        %2202 = vmatprep.subr.bf16.mxu0 0
        %2203 = vmatpush2.bf16.msra.mxu0 0
        %2204 = vmatprep.subr.bf16.mxu0 0
        %2205 = vmatpush2.bf16.msra.mxu0 0
        %2206 = vmatprep.subr.bf16.mxu0 0
        %2207 = vmatpush2.bf16.msra.mxu0 0
        %2208 = vmatprep.subr.bf16.mxu0 0
        %2209 = vmatpush2.bf16.msra.mxu0 0
        %2210 = vmatprep.subr.bf16.mxu0 0
        %2211 = vmatpush2.bf16.msra.mxu0 0
        %2212 = vmatprep.subr.bf16.mxu0 0
        %2213 = vmatpush2.bf16.msra.mxu0 0
        %2214 = vmatprep.subr.bf16.mxu0 0
        %2215 = vmatpush2.bf16.msra.mxu0 0
        %2216 = vmatprep.subr.bf16.mxu0 0
        %2217 = vmatpush2.bf16.msra.mxu0 0
        %2218 = vmatprep.mubr.bf16.mxu0 0
        %2219 = vmatmul.mubr.bf16.gmra.mxu0 %v2184
        %v2220 = vpop.f32.mrf.mxu0
        %v2221 = vadd.f32 %v2169, %v2220
        %v2222 = vpop.f32.mrf.mxu0
        %v2223 = vpop.f32.mrf.mxu0
        %v2224 = vadd.f32 %v2169, %v2223
        %v2225 = vpop.f32.mrf.mxu0
        %2226 = vdwg.mxu0
        %v2227 = vld [vmem:[%s1001] sm:$0xf]
        %v2228 = vld [vmem:[%s1001 + $0x4] sm:$0xf]
        %v2229 = vld [vmem:[%s1001 + $0x8] sm:$0xf]
        %v2230 = vld [vmem:[%s1001 + $0xc] sm:$0xf]
        %v2231 = vld [vmem:[%s851] sm:$0x1]
        %v2233 = vlaneseq
        %v2234 = vshrl.u32 %v2233, 7
        %v2235 = vsub.s32 0, %v2234
        %v2236 = vrot.slane %v2231, %v2235
        %v2242 = vunpack.c.l.b16 %v2227
        %v2243 = vunpack.c.l.b16 %v2228
        %v2244 = vunpack.c.l.b16 %v2229
        %v2245 = vunpack.c.l.b16 %v2230
        %v2246 = vpack.c.b16 %v2243, %v2242
        %v2247 = vpack.c.b16 %v2245, %v2244
        %v2251 = vsel %vm1085, %v1059, 0
        %v2254 = vsel %vm1085, %v1060, 0
        %2256 = vmatprep.subr.bf16.mxu0 0
        %2257 = vmatpush1.bf16.msra.mxu0 0
        %2258 = vmatprep.subr.bf16.mxu0 0
        %2259 = vmatpush1.bf16.msra.mxu0 0
        %2260 = vmatprep.subr.bf16.mxu0 0
        %2261 = vmatpush1.bf16.msra.mxu0 0
        %2262 = vmatprep.subr.bf16.mxu0 0
        %2263 = vmatpush1.bf16.msra.mxu0 0
        %2264 = vmatprep.subr.bf16.mxu0 0
        %2265 = vmatpush1.bf16.msra.mxu0 0
        %2266 = vmatprep.subr.bf16.mxu0 0
        %2267 = vmatpush1.bf16.msra.mxu0 0
        %2268 = vmatprep.subr.bf16.mxu0 0
        %2269 = vmatpush1.bf16.msra.mxu0 %v2247
        %2270 = vmatprep.subr.bf16.mxu0 0
        %2271 = vmatpush1.bf16.msra.mxu0 %v2246
        %2272 = vmatprep.subr.bf16.mxu0 0
        %2273 = vmatpush2.bf16.msra.mxu0 0
        %2274 = vmatprep.subr.bf16.mxu0 0
        %2275 = vmatpush2.bf16.msra.mxu0 0
        %2276 = vmatprep.subr.bf16.mxu0 0
        %2277 = vmatpush2.bf16.msra.mxu0 0
        %2278 = vmatprep.subr.bf16.mxu0 0
        %2279 = vmatpush2.bf16.msra.mxu0 0
        %2280 = vmatprep.subr.bf16.mxu0 0
        %2281 = vmatpush2.bf16.msra.mxu0 0
        %2282 = vmatprep.subr.bf16.mxu0 0
        %2283 = vmatpush2.bf16.msra.mxu0 0
        %2284 = vmatprep.subr.bf16.mxu0 0
        %2285 = vmatpush2.bf16.msra.mxu0 0
        %2286 = vmatprep.subr.bf16.mxu0 0
        %2287 = vmatpush2.bf16.msra.mxu0 0
        %2288 = vmatprep.mubr.bf16.mxu0 0
        %2289 = vmatmul.mubr.bf16.gmra.mxu0 %v2251
        %v2290 = vpop.f32.mrf.mxu0
        %v2291 = vadd.f32 %v2236, %v2290
        %v2292 = vpop.f32.mrf.mxu0
        %v2293 = vpop.f32.mrf.mxu0
        %v2294 = vadd.f32 %v2236, %v2293
        %v2295 = vpop.f32.mrf.mxu0
        %2296 = vmatprep.mubr.bf16.mxu0 0
        %2297 = vmatmul.mubr.bf16.gmra.mxu0 %v2254
        %v2298 = vpop.f32.mrf.mxu0
        %v2299 = vadd.f32 %v2236, %v2298
        %v2300 = vpop.f32.mrf.mxu0
        %v2301 = vpop.f32.mrf.mxu0
        %v2302 = vpop.f32.mrf.mxu0
        %2303 = vdwg.mxu0
        %v2307 = vcombine.high %v2291, %v2291
        %v2308 = vcombine.high %v2294, %v2294
        %v2309 = vcombine.high %v2299, %v2299
        %v2311 = vpack.c.bf16 %v2221, %v2221
        %v2312 = vpack.c.bf16 %v2224, %v2224
        %v2313 = vcombine.low %v2291, %v2307
        %v2314 = vcombine.low %v2308, %v2299
        %v2317 = vpack.c.bf16 %v2294, %v2313
        %v2318 = vpack.c.bf16 %v2309, %v2314
        %v2320 = vsel %vm1135, %v2311, 0
        %v2323 = vsel %vm1135, %v2317, 0
        %2325 = vmatprep.subr.bf16.mxu0 0
        %2326 = vmatpush1.bf16.xpose.msra.mxu0 0
        %2327 = vmatprep.subr.bf16.mxu0 0
        %2328 = vmatpush1.bf16.xpose.msra.mxu0 0
        %2329 = vmatprep.subr.bf16.mxu0 0
        %2330 = vmatpush1.bf16.xpose.msra.mxu0 0
        %2331 = vmatprep.subr.bf16.mxu0 0
        %2332 = vmatpush1.bf16.xpose.msra.mxu0 0
        %2333 = vmatprep.subr.bf16.mxu0 0
        %2334 = vmatpush1.bf16.xpose.msra.mxu0 0
        %2335 = vmatprep.subr.bf16.mxu0 0
        %2336 = vmatpush1.bf16.xpose.msra.mxu0 0
        %2337 = vmatprep.subr.bf16.mxu0 0
        %2338 = vmatpush1.bf16.xpose.msra.mxu0 0
        %2339 = vmatprep.subr.bf16.mxu0 0
        %2340 = vmatpush1.bf16.xpose.msra.mxu0 %v2323
        %2341 = vmatprep.subr.bf16.mxu0 0
        %2342 = vmatpush2.bf16.xpose.msra.mxu0 0
        %2343 = vmatprep.subr.bf16.mxu0 0
        %2344 = vmatpush2.bf16.xpose.msra.mxu0 0
        %2345 = vmatprep.subr.bf16.mxu0 0
        %2346 = vmatpush2.bf16.xpose.msra.mxu0 0
        %2347 = vmatprep.subr.bf16.mxu0 0
        %2348 = vmatpush2.bf16.xpose.msra.mxu0 0
        %2349 = vmatprep.subr.bf16.mxu0 0
        %2350 = vmatpush2.bf16.xpose.msra.mxu0 0
        %2351 = vmatprep.subr.bf16.mxu0 0
        %2352 = vmatpush2.bf16.xpose.msra.mxu0 0
        %2353 = vmatprep.subr.bf16.mxu0 0
        %2354 = vmatpush2.bf16.xpose.msra.mxu0 0
        %2355 = vmatprep.subr.bf16.mxu0 0
        %2356 = vmatpush2.bf16.xpose.msra.mxu0 0
        %2357 = vmatprep.mubr.bf16.mxu0 0
        %2358 = vmatmul.mubr.bf16.gmra.mxu0 %v2320
        %v2359 = vpop.f32.mrf.mxu0
        %v2360 = vadd.f32 0.0, %v2359
        %v2361 = vpop.f32.mrf.mxu0
        %v2362 = vpop.f32.mrf.mxu0
        %v2363 = vpop.f32.mrf.mxu0
        %2364 = vdwg.mxu0
        %v2366 = vsel %vm1135, %v2312, 0
        %v2369 = vsel %vm1135, %v2318, 0
        %2371 = vmatprep.subr.bf16.mxu0 0
        %2372 = vmatpush1.bf16.xpose.msra.mxu0 0
        %2373 = vmatprep.subr.bf16.mxu0 0
        %2374 = vmatpush1.bf16.xpose.msra.mxu0 0
        %2375 = vmatprep.subr.bf16.mxu0 0
        %2376 = vmatpush1.bf16.xpose.msra.mxu0 0
        %2377 = vmatprep.subr.bf16.mxu0 0
        %2378 = vmatpush1.bf16.xpose.msra.mxu0 0
        %2379 = vmatprep.subr.bf16.mxu0 0
        %2380 = vmatpush1.bf16.xpose.msra.mxu0 0
        %2381 = vmatprep.subr.bf16.mxu0 0
        %2382 = vmatpush1.bf16.xpose.msra.mxu0 0
        %2383 = vmatprep.subr.bf16.mxu0 0
        %2384 = vmatpush1.bf16.xpose.msra.mxu0 0
        %2385 = vmatprep.subr.bf16.mxu0 0
        %2386 = vmatpush1.bf16.xpose.msra.mxu0 %v2369
        %2387 = vmatprep.subr.bf16.mxu0 0
        %2388 = vmatpush2.bf16.xpose.msra.mxu0 0
        %2389 = vmatprep.subr.bf16.mxu0 0
        %2390 = vmatpush2.bf16.xpose.msra.mxu0 0
        %2391 = vmatprep.subr.bf16.mxu0 0
        %2392 = vmatpush2.bf16.xpose.msra.mxu0 0
        %2393 = vmatprep.subr.bf16.mxu0 0
        %2394 = vmatpush2.bf16.xpose.msra.mxu0 0
        %2395 = vmatprep.subr.bf16.mxu0 0
        %2396 = vmatpush2.bf16.xpose.msra.mxu0 0
        %2397 = vmatprep.subr.bf16.mxu0 0
        %2398 = vmatpush2.bf16.xpose.msra.mxu0 0
        %2399 = vmatprep.subr.bf16.mxu0 0
        %2400 = vmatpush2.bf16.xpose.msra.mxu0 0
        %2401 = vmatprep.subr.bf16.mxu0 0
        %2402 = vmatpush2.bf16.xpose.msra.mxu0 0
        %2403 = vmatprep.mubr.bf16.mxu0 0
        %2404 = vmatmul.mubr.bf16.gmra.mxu0 %v2366
        %v2405 = vpop.f32.mrf.mxu0
        %v2406 = vadd.f32 0.0, %v2405
        %v2407 = vpop.f32.mrf.mxu0
        %v2408 = vpop.f32.mrf.mxu0
        %v2409 = vpop.f32.mrf.mxu0
        %2410 = vdwg.mxu0
        %vm2411 = vcmask 97280
        %v2412 = vsel %vm2411, %v2360, -inf
        %2413 = vmax.xlane.f32.xlu0 %v2412
        %v2414 = vpop.xlane.xlu0 %2413
        %v2415 = vsel %vm2411, %v2406, -inf
        %2416 = vmax.xlane.f32.xlu0 %v2415
        %v2417 = vpop.xlane.xlu0 %2416
        %v2418 = vsub.f32 %v2360, %v2414
        %v2419 = vsub.f32 %v2406, %v2417
        %v2420 = vmul.f32 %v2418, 1.442695
        %v2421 = vpow.pop %v2420
        %v2422 = vmul.f32 %v2419, 1.442695
        %v2423 = vpow.pop %v2422
        %v2424 = vsel %vm2411, %v2421, 0.0
        %2425 = vadd.xlane.f32.xlu0 %v2424
        %v2426 = vpop.xlane.xlu0 %2425
        %v2427 = vsel %vm2411, %v2423, 0.0
        %2428 = vadd.xlane.f32.xlu0 %v2427
        %v2429 = vpop.xlane.xlu0 %2428
        %v2430 = vrcp.pop %v2426
        %v2431 = vrcp.pop %v2429
        %v2432 = vmul.f32 %v2421, %v2430
        %v2433 = vmul.f32 %v2423, %v2431
        %v2434 = vpack.c.bf16 %v2432, %v2432
        %v2435 = vpack.c.bf16 %v2433, %v2433
        %2437 = vrot.lane.b32.xlu0 %v2317, 96
        %v2438 = vpop.permute.xlu0 %2437
        %v2440 = vsel %vm2411, %v2434, 0
        %vm2442 = vcmask 1045504
        %v2444 = vsel %vm2442, %v2438, 0
        %2446 = vmatprep.subr.bf16.mxu0 0
        %2447 = vmatpush1.bf16.msra.mxu0 0
        %2448 = vmatprep.subr.bf16.mxu0 0
        %2449 = vmatpush1.bf16.msra.mxu0 0
        %2450 = vmatprep.subr.bf16.mxu0 0
        %2451 = vmatpush1.bf16.msra.mxu0 0
        %2452 = vmatprep.subr.bf16.mxu0 0
        %2453 = vmatpush1.bf16.msra.mxu0 0
        %2454 = vmatprep.subr.bf16.mxu0 0
        %2455 = vmatpush1.bf16.msra.mxu0 0
        %2456 = vmatprep.subr.bf16.mxu0 0
        %2457 = vmatpush1.bf16.msra.mxu0 0
        %2458 = vmatprep.subr.bf16.mxu0 0
        %2459 = vmatpush1.bf16.msra.mxu0 0
        %2460 = vmatprep.subr.bf16.mxu0 0
        %2461 = vmatpush1.bf16.msra.mxu0 %v2444
        %2462 = vmatprep.subr.bf16.mxu0 0
        %2463 = vmatpush2.bf16.msra.mxu0 0
        %2464 = vmatprep.subr.bf16.mxu0 0
        %2465 = vmatpush2.bf16.msra.mxu0 0
        %2466 = vmatprep.subr.bf16.mxu0 0
        %2467 = vmatpush2.bf16.msra.mxu0 0
        %2468 = vmatprep.subr.bf16.mxu0 0
        %2469 = vmatpush2.bf16.msra.mxu0 0
        %2470 = vmatprep.subr.bf16.mxu0 0
        %2471 = vmatpush2.bf16.msra.mxu0 0
        %2472 = vmatprep.subr.bf16.mxu0 0
        %2473 = vmatpush2.bf16.msra.mxu0 0
        %2474 = vmatprep.subr.bf16.mxu0 0
        %2475 = vmatpush2.bf16.msra.mxu0 0
        %2476 = vmatprep.subr.bf16.mxu0 0
        %2477 = vmatpush2.bf16.msra.mxu0 0
        %2478 = vmatprep.mubr.bf16.mxu0 0
        %2479 = vmatmul.mubr.bf16.gmra.mxu0 %v2440
        %v2480 = vpop.f32.mrf.mxu0
        %v2481 = vadd.f32 0.0, %v2480
        %v2482 = vpop.f32.mrf.mxu0
        %v2483 = vpop.f32.mrf.mxu0
        %v2484 = vpop.f32.mrf.mxu0
        %2485 = vdwg.mxu0
        %2487 = vrot.lane.b32.xlu0 %v2318, 96
        %v2488 = vpop.permute.xlu0 %2487
        %v2490 = vsel %vm2411, %v2435, 0
        %v2493 = vsel %vm2442, %v2488, 0
        %2495 = vmatprep.subr.bf16.mxu0 0
        %2496 = vmatpush1.bf16.msra.mxu0 0
        %2497 = vmatprep.subr.bf16.mxu0 0
        %2498 = vmatpush1.bf16.msra.mxu0 0
        %2499 = vmatprep.subr.bf16.mxu0 0
        %2500 = vmatpush1.bf16.msra.mxu0 0
        %2501 = vmatprep.subr.bf16.mxu0 0
        %2502 = vmatpush1.bf16.msra.mxu0 0
        %2503 = vmatprep.subr.bf16.mxu0 0
        %2504 = vmatpush1.bf16.msra.mxu0 0
        %2505 = vmatprep.subr.bf16.mxu0 0
        %2506 = vmatpush1.bf16.msra.mxu0 0
        %2507 = vmatprep.subr.bf16.mxu0 0
        %2508 = vmatpush1.bf16.msra.mxu0 0
        %2509 = vmatprep.subr.bf16.mxu0 0
        %2510 = vmatpush1.bf16.msra.mxu0 %v2493
        %2511 = vmatprep.subr.bf16.mxu0 0
        %2512 = vmatpush2.bf16.msra.mxu0 0
        %2513 = vmatprep.subr.bf16.mxu0 0
        %2514 = vmatpush2.bf16.msra.mxu0 0
        %2515 = vmatprep.subr.bf16.mxu0 0
        %2516 = vmatpush2.bf16.msra.mxu0 0
        %2517 = vmatprep.subr.bf16.mxu0 0
        %2518 = vmatpush2.bf16.msra.mxu0 0
        %2519 = vmatprep.subr.bf16.mxu0 0
        %2520 = vmatpush2.bf16.msra.mxu0 0
        %2521 = vmatprep.subr.bf16.mxu0 0
        %2522 = vmatpush2.bf16.msra.mxu0 0
        %2523 = vmatprep.subr.bf16.mxu0 0
        %2524 = vmatpush2.bf16.msra.mxu0 0
        %2525 = vmatprep.subr.bf16.mxu0 0
        %2526 = vmatpush2.bf16.msra.mxu0 0
        %2527 = vmatprep.mubr.bf16.mxu0 0
        %2528 = vmatmul.mubr.bf16.gmra.mxu0 %v2490
        %v2529 = vpop.f32.mrf.mxu0
        %v2530 = vadd.f32 0.0, %v2529
        %v2531 = vpop.f32.mrf.mxu0
        %v2532 = vpop.f32.mrf.mxu0
        %v2533 = vpop.f32.mrf.mxu0
        %2534 = vdwg.mxu0
        %2536 = vrot.lane.b32.xlu0 %v2311, 120
        %v2537 = vpop.permute.xlu0 %2536
        %2538 = vrot.lane.b32.xlu0 %v2317, 120
        %v2539 = vpop.permute.xlu0 %2538
        %v2541 = vsel %vm1135, %v2537, 0
        %v2544 = vsel %vm1135, %v2539, 0
        %2546 = vmatprep.subr.bf16.mxu0 0
        %2547 = vmatpush1.bf16.xpose.msra.mxu0 0
        %2548 = vmatprep.subr.bf16.mxu0 0
        %2549 = vmatpush1.bf16.xpose.msra.mxu0 0
        %2550 = vmatprep.subr.bf16.mxu0 0
        %2551 = vmatpush1.bf16.xpose.msra.mxu0 0
        %2552 = vmatprep.subr.bf16.mxu0 0
        %2553 = vmatpush1.bf16.xpose.msra.mxu0 0
        %2554 = vmatprep.subr.bf16.mxu0 0
        %2555 = vmatpush1.bf16.xpose.msra.mxu0 0
        %2556 = vmatprep.subr.bf16.mxu0 0
        %2557 = vmatpush1.bf16.xpose.msra.mxu0 0
        %2558 = vmatprep.subr.bf16.mxu0 0
        %2559 = vmatpush1.bf16.xpose.msra.mxu0 0
        %2560 = vmatprep.subr.bf16.mxu0 0
        %2561 = vmatpush1.bf16.xpose.msra.mxu0 %v2544
        %2562 = vmatprep.subr.bf16.mxu0 0
        %2563 = vmatpush2.bf16.xpose.msra.mxu0 0
        %2564 = vmatprep.subr.bf16.mxu0 0
        %2565 = vmatpush2.bf16.xpose.msra.mxu0 0
        %2566 = vmatprep.subr.bf16.mxu0 0
        %2567 = vmatpush2.bf16.xpose.msra.mxu0 0
        %2568 = vmatprep.subr.bf16.mxu0 0
        %2569 = vmatpush2.bf16.xpose.msra.mxu0 0
        %2570 = vmatprep.subr.bf16.mxu0 0
        %2571 = vmatpush2.bf16.xpose.msra.mxu0 0
        %2572 = vmatprep.subr.bf16.mxu0 0
        %2573 = vmatpush2.bf16.xpose.msra.mxu0 0
        %2574 = vmatprep.subr.bf16.mxu0 0
        %2575 = vmatpush2.bf16.xpose.msra.mxu0 0
        %2576 = vmatprep.subr.bf16.mxu0 0
        %2577 = vmatpush2.bf16.xpose.msra.mxu0 0
        %2578 = vmatprep.mubr.bf16.mxu0 0
        %2579 = vmatmul.mubr.bf16.gmra.mxu0 %v2541
        %v2580 = vpop.f32.mrf.mxu0
        %v2581 = vadd.f32 0.0, %v2580
        %v2582 = vpop.f32.mrf.mxu0
        %v2583 = vpop.f32.mrf.mxu0
        %v2584 = vpop.f32.mrf.mxu0
        %2585 = vdwg.mxu0
        %2587 = vrot.lane.b32.xlu0 %v2312, 120
        %v2588 = vpop.permute.xlu0 %2587
        %2589 = vrot.lane.b32.xlu0 %v2318, 120
        %v2590 = vpop.permute.xlu0 %2589
        %v2592 = vsel %vm1135, %v2588, 0
        %v2595 = vsel %vm1135, %v2590, 0
        %2597 = vmatprep.subr.bf16.mxu0 0
        %2598 = vmatpush1.bf16.xpose.msra.mxu0 0
        %2599 = vmatprep.subr.bf16.mxu0 0
        %2600 = vmatpush1.bf16.xpose.msra.mxu0 0
        %2601 = vmatprep.subr.bf16.mxu0 0
        %2602 = vmatpush1.bf16.xpose.msra.mxu0 0
        %2603 = vmatprep.subr.bf16.mxu0 0
        %2604 = vmatpush1.bf16.xpose.msra.mxu0 0
        %2605 = vmatprep.subr.bf16.mxu0 0
        %2606 = vmatpush1.bf16.xpose.msra.mxu0 0
        %2607 = vmatprep.subr.bf16.mxu0 0
        %2608 = vmatpush1.bf16.xpose.msra.mxu0 0
        %2609 = vmatprep.subr.bf16.mxu0 0
        %2610 = vmatpush1.bf16.xpose.msra.mxu0 0
        %2611 = vmatprep.subr.bf16.mxu0 0
        %2612 = vmatpush1.bf16.xpose.msra.mxu0 %v2595
        %2613 = vmatprep.subr.bf16.mxu0 0
        %2614 = vmatpush2.bf16.xpose.msra.mxu0 0
        %2615 = vmatprep.subr.bf16.mxu0 0
        %2616 = vmatpush2.bf16.xpose.msra.mxu0 0
        %2617 = vmatprep.subr.bf16.mxu0 0
        %2618 = vmatpush2.bf16.xpose.msra.mxu0 0
        %2619 = vmatprep.subr.bf16.mxu0 0
        %2620 = vmatpush2.bf16.xpose.msra.mxu0 0
        %2621 = vmatprep.subr.bf16.mxu0 0
        %2622 = vmatpush2.bf16.xpose.msra.mxu0 0
        %2623 = vmatprep.subr.bf16.mxu0 0
        %2624 = vmatpush2.bf16.xpose.msra.mxu0 0
        %2625 = vmatprep.subr.bf16.mxu0 0
        %2626 = vmatpush2.bf16.xpose.msra.mxu0 0
        %2627 = vmatprep.subr.bf16.mxu0 0
        %2628 = vmatpush2.bf16.xpose.msra.mxu0 0
        %2629 = vmatprep.mubr.bf16.mxu0 0
        %2630 = vmatmul.mubr.bf16.gmra.mxu0 %v2592
        %v2631 = vpop.f32.mrf.mxu0
        %v2632 = vadd.f32 0.0, %v2631
        %v2633 = vpop.f32.mrf.mxu0
        %v2634 = vpop.f32.mrf.mxu0
        %v2635 = vpop.f32.mrf.mxu0
        %2636 = vdwg.mxu0
        %v2637 = vsel %vm2411, %v2581, -inf
        %2638 = vmax.xlane.f32.xlu0 %v2637
        %v2639 = vpop.xlane.xlu0 %2638
        %v2640 = vsel %vm2411, %v2632, -inf
        %2641 = vmax.xlane.f32.xlu0 %v2640
        %v2642 = vpop.xlane.xlu0 %2641
        %v2643 = vsub.f32 %v2581, %v2639
        %v2644 = vsub.f32 %v2632, %v2642
        %v2645 = vmul.f32 %v2643, 1.442695
        %v2646 = vpow.pop %v2645
        %v2647 = vmul.f32 %v2644, 1.442695
        %v2648 = vpow.pop %v2647
        %v2649 = vsel %vm2411, %v2646, 0.0
        %2650 = vadd.xlane.f32.xlu0 %v2649
        %v2651 = vpop.xlane.xlu0 %2650
        %v2652 = vsel %vm2411, %v2648, 0.0
        %2653 = vadd.xlane.f32.xlu0 %v2652
        %v2654 = vpop.xlane.xlu0 %2653
        %v2655 = vrcp.pop %v2651
        %v2656 = vrcp.pop %v2654
        %v2657 = vmul.f32 %v2646, %v2655
        %v2658 = vmul.f32 %v2648, %v2656
        %v2659 = vpack.c.bf16 %v2657, %v2657
        %v2660 = vpack.c.bf16 %v2658, %v2658
        %2661 = vrot.lane.b32.xlu0 %v2317, 88
        %v2662 = vpop.permute.xlu0 %2661
        %v2664 = vsel %vm2411, %v2659, 0
        %v2667 = vsel %vm2442, %v2662, 0
        %2669 = vmatprep.subr.bf16.mxu0 0
        %2670 = vmatpush1.bf16.msra.mxu0 0
        %2671 = vmatprep.subr.bf16.mxu0 0
        %2672 = vmatpush1.bf16.msra.mxu0 0
        %2673 = vmatprep.subr.bf16.mxu0 0
        %2674 = vmatpush1.bf16.msra.mxu0 0
        %2675 = vmatprep.subr.bf16.mxu0 0
        %2676 = vmatpush1.bf16.msra.mxu0 0
        %2677 = vmatprep.subr.bf16.mxu0 0
        %2678 = vmatpush1.bf16.msra.mxu0 0
        %2679 = vmatprep.subr.bf16.mxu0 0
        %2680 = vmatpush1.bf16.msra.mxu0 0
        %2681 = vmatprep.subr.bf16.mxu0 0
        %2682 = vmatpush1.bf16.msra.mxu0 0
        %2683 = vmatprep.subr.bf16.mxu0 0
        %2684 = vmatpush1.bf16.msra.mxu0 %v2667
        %2685 = vmatprep.subr.bf16.mxu0 0
        %2686 = vmatpush2.bf16.msra.mxu0 0
        %2687 = vmatprep.subr.bf16.mxu0 0
        %2688 = vmatpush2.bf16.msra.mxu0 0
        %2689 = vmatprep.subr.bf16.mxu0 0
        %2690 = vmatpush2.bf16.msra.mxu0 0
        %2691 = vmatprep.subr.bf16.mxu0 0
        %2692 = vmatpush2.bf16.msra.mxu0 0
        %2693 = vmatprep.subr.bf16.mxu0 0
        %2694 = vmatpush2.bf16.msra.mxu0 0
        %2695 = vmatprep.subr.bf16.mxu0 0
        %2696 = vmatpush2.bf16.msra.mxu0 0
        %2697 = vmatprep.subr.bf16.mxu0 0
        %2698 = vmatpush2.bf16.msra.mxu0 0
        %2699 = vmatprep.subr.bf16.mxu0 0
        %2700 = vmatpush2.bf16.msra.mxu0 0
        %2701 = vmatprep.mubr.bf16.mxu0 0
        %2702 = vmatmul.mubr.bf16.gmra.mxu0 %v2664
        %v2703 = vpop.f32.mrf.mxu0
        %v2704 = vadd.f32 0.0, %v2703
        %v2705 = vpop.f32.mrf.mxu0
        %v2706 = vpop.f32.mrf.mxu0
        %v2707 = vpop.f32.mrf.mxu0
        %2708 = vdwg.mxu0
        %2709 = vrot.lane.b32.xlu0 %v2318, 88
        %v2710 = vpop.permute.xlu0 %2709
        %v2712 = vsel %vm2411, %v2660, 0
        %v2715 = vsel %vm2442, %v2710, 0
        %2717 = vmatprep.subr.bf16.mxu0 0
        %2718 = vmatpush1.bf16.msra.mxu0 0
        %2719 = vmatprep.subr.bf16.mxu0 0
        %2720 = vmatpush1.bf16.msra.mxu0 0
        %2721 = vmatprep.subr.bf16.mxu0 0
        %2722 = vmatpush1.bf16.msra.mxu0 0
        %2723 = vmatprep.subr.bf16.mxu0 0
        %2724 = vmatpush1.bf16.msra.mxu0 0
        %2725 = vmatprep.subr.bf16.mxu0 0
        %2726 = vmatpush1.bf16.msra.mxu0 0
        %2727 = vmatprep.subr.bf16.mxu0 0
        %2728 = vmatpush1.bf16.msra.mxu0 0
        %2729 = vmatprep.subr.bf16.mxu0 0
        %2730 = vmatpush1.bf16.msra.mxu0 0
        %2731 = vmatprep.subr.bf16.mxu0 0
        %2732 = vmatpush1.bf16.msra.mxu0 %v2715
        %2733 = vmatprep.subr.bf16.mxu0 0
        %2734 = vmatpush2.bf16.msra.mxu0 0
        %2735 = vmatprep.subr.bf16.mxu0 0
        %2736 = vmatpush2.bf16.msra.mxu0 0
        %2737 = vmatprep.subr.bf16.mxu0 0
        %2738 = vmatpush2.bf16.msra.mxu0 0
        %2739 = vmatprep.subr.bf16.mxu0 0
        %2740 = vmatpush2.bf16.msra.mxu0 0
        %2741 = vmatprep.subr.bf16.mxu0 0
        %2742 = vmatpush2.bf16.msra.mxu0 0
        %2743 = vmatprep.subr.bf16.mxu0 0
        %2744 = vmatpush2.bf16.msra.mxu0 0
        %2745 = vmatprep.subr.bf16.mxu0 0
        %2746 = vmatpush2.bf16.msra.mxu0 0
        %2747 = vmatprep.subr.bf16.mxu0 0
        %2748 = vmatpush2.bf16.msra.mxu0 0
        %2749 = vmatprep.mubr.bf16.mxu0 0
        %2750 = vmatmul.mubr.bf16.gmra.mxu0 %v2712
        %v2751 = vpop.f32.mrf.mxu0
        %v2752 = vadd.f32 0.0, %v2751
        %v2753 = vpop.f32.mrf.mxu0
        %v2754 = vpop.f32.mrf.mxu0
        %v2755 = vpop.f32.mrf.mxu0
        %2756 = vdwg.mxu0
        %2757 = vrot.lane.b32.xlu0 %v2311, 112
        %v2758 = vpop.permute.xlu0 %2757
        %2759 = vrot.lane.b32.xlu0 %v2317, 112
        %v2760 = vpop.permute.xlu0 %2759
        %v2762 = vsel %vm1135, %v2758, 0
        %v2765 = vsel %vm1135, %v2760, 0
        %2767 = vmatprep.subr.bf16.mxu0 0
        %2768 = vmatpush1.bf16.xpose.msra.mxu0 0
        %2769 = vmatprep.subr.bf16.mxu0 0
        %2770 = vmatpush1.bf16.xpose.msra.mxu0 0
        %2771 = vmatprep.subr.bf16.mxu0 0
        %2772 = vmatpush1.bf16.xpose.msra.mxu0 0
        %2773 = vmatprep.subr.bf16.mxu0 0
        %2774 = vmatpush1.bf16.xpose.msra.mxu0 0
        %2775 = vmatprep.subr.bf16.mxu0 0
        %2776 = vmatpush1.bf16.xpose.msra.mxu0 0
        %2777 = vmatprep.subr.bf16.mxu0 0
        %2778 = vmatpush1.bf16.xpose.msra.mxu0 0
        %2779 = vmatprep.subr.bf16.mxu0 0
        %2780 = vmatpush1.bf16.xpose.msra.mxu0 0
        %2781 = vmatprep.subr.bf16.mxu0 0
        %2782 = vmatpush1.bf16.xpose.msra.mxu0 %v2765
        %2783 = vmatprep.subr.bf16.mxu0 0
        %2784 = vmatpush2.bf16.xpose.msra.mxu0 0
        %2785 = vmatprep.subr.bf16.mxu0 0
        %2786 = vmatpush2.bf16.xpose.msra.mxu0 0
        %2787 = vmatprep.subr.bf16.mxu0 0
        %2788 = vmatpush2.bf16.xpose.msra.mxu0 0
        %2789 = vmatprep.subr.bf16.mxu0 0
        %2790 = vmatpush2.bf16.xpose.msra.mxu0 0
        %2791 = vmatprep.subr.bf16.mxu0 0
        %2792 = vmatpush2.bf16.xpose.msra.mxu0 0
        %2793 = vmatprep.subr.bf16.mxu0 0
        %2794 = vmatpush2.bf16.xpose.msra.mxu0 0
        %2795 = vmatprep.subr.bf16.mxu0 0
        %2796 = vmatpush2.bf16.xpose.msra.mxu0 0
        %2797 = vmatprep.subr.bf16.mxu0 0
        %2798 = vmatpush2.bf16.xpose.msra.mxu0 0
        %2799 = vmatprep.mubr.bf16.mxu0 0
        %2800 = vmatmul.mubr.bf16.gmra.mxu0 %v2762
        %v2801 = vpop.f32.mrf.mxu0
        %v2802 = vadd.f32 0.0, %v2801
        %v2803 = vpop.f32.mrf.mxu0
        %v2804 = vpop.f32.mrf.mxu0
        %v2805 = vpop.f32.mrf.mxu0
        %2806 = vdwg.mxu0
        %2807 = vrot.lane.b32.xlu0 %v2312, 112
        %v2808 = vpop.permute.xlu0 %2807
        %2809 = vrot.lane.b32.xlu0 %v2318, 112
        %v2810 = vpop.permute.xlu0 %2809
        %v2812 = vsel %vm1135, %v2808, 0
        %v2815 = vsel %vm1135, %v2810, 0
        %2817 = vmatprep.subr.bf16.mxu0 0
        %2818 = vmatpush1.bf16.xpose.msra.mxu0 0
        %2819 = vmatprep.subr.bf16.mxu0 0
        %2820 = vmatpush1.bf16.xpose.msra.mxu0 0
        %2821 = vmatprep.subr.bf16.mxu0 0
        %2822 = vmatpush1.bf16.xpose.msra.mxu0 0
        %2823 = vmatprep.subr.bf16.mxu0 0
        %2824 = vmatpush1.bf16.xpose.msra.mxu0 0
        %2825 = vmatprep.subr.bf16.mxu0 0
        %2826 = vmatpush1.bf16.xpose.msra.mxu0 0
        %2827 = vmatprep.subr.bf16.mxu0 0
        %2828 = vmatpush1.bf16.xpose.msra.mxu0 0
        %2829 = vmatprep.subr.bf16.mxu0 0
        %2830 = vmatpush1.bf16.xpose.msra.mxu0 0
        %2831 = vmatprep.subr.bf16.mxu0 0
        %2832 = vmatpush1.bf16.xpose.msra.mxu0 %v2815
        %2833 = vmatprep.subr.bf16.mxu0 0
        %2834 = vmatpush2.bf16.xpose.msra.mxu0 0
        %2835 = vmatprep.subr.bf16.mxu0 0
        %2836 = vmatpush2.bf16.xpose.msra.mxu0 0
        %2837 = vmatprep.subr.bf16.mxu0 0
        %2838 = vmatpush2.bf16.xpose.msra.mxu0 0
        %2839 = vmatprep.subr.bf16.mxu0 0
        %2840 = vmatpush2.bf16.xpose.msra.mxu0 0
        %2841 = vmatprep.subr.bf16.mxu0 0
        %2842 = vmatpush2.bf16.xpose.msra.mxu0 0
        %2843 = vmatprep.subr.bf16.mxu0 0
        %2844 = vmatpush2.bf16.xpose.msra.mxu0 0
        %2845 = vmatprep.subr.bf16.mxu0 0
        %2846 = vmatpush2.bf16.xpose.msra.mxu0 0
        %2847 = vmatprep.subr.bf16.mxu0 0
        %2848 = vmatpush2.bf16.xpose.msra.mxu0 0
        %2849 = vmatprep.mubr.bf16.mxu0 0
        %2850 = vmatmul.mubr.bf16.gmra.mxu0 %v2812
        %v2851 = vpop.f32.mrf.mxu0
        %v2852 = vadd.f32 0.0, %v2851
        %v2853 = vpop.f32.mrf.mxu0
        %v2854 = vpop.f32.mrf.mxu0
        %v2855 = vpop.f32.mrf.mxu0
        %2856 = vdwg.mxu0
        %v2857 = vsel %vm2411, %v2802, -inf
        %2858 = vmax.xlane.f32.xlu0 %v2857
        %v2859 = vpop.xlane.xlu0 %2858
        %v2860 = vsel %vm2411, %v2852, -inf
        %2861 = vmax.xlane.f32.xlu0 %v2860
        %v2862 = vpop.xlane.xlu0 %2861
        %v2863 = vsub.f32 %v2802, %v2859
        %v2864 = vsub.f32 %v2852, %v2862
        %v2865 = vmul.f32 %v2863, 1.442695
        %v2866 = vpow.pop %v2865
        %v2867 = vmul.f32 %v2864, 1.442695
        %v2868 = vpow.pop %v2867
        %v2869 = vsel %vm2411, %v2866, 0.0
        %2870 = vadd.xlane.f32.xlu0 %v2869
        %v2871 = vpop.xlane.xlu0 %2870
        %v2872 = vsel %vm2411, %v2868, 0.0
        %2873 = vadd.xlane.f32.xlu0 %v2872
        %v2874 = vpop.xlane.xlu0 %2873
        %v2875 = vrcp.pop %v2871
        %v2876 = vrcp.pop %v2874
        %v2877 = vmul.f32 %v2866, %v2875
        %v2878 = vmul.f32 %v2868, %v2876
        %v2879 = vpack.c.bf16 %v2877, %v2877
        %v2880 = vpack.c.bf16 %v2878, %v2878
        %2881 = vrot.lane.b32.xlu0 %v2317, 80
        %v2882 = vpop.permute.xlu0 %2881
        %v2884 = vsel %vm2411, %v2879, 0
        %v2887 = vsel %vm2442, %v2882, 0
        %2889 = vmatprep.subr.bf16.mxu0 0
        %2890 = vmatpush1.bf16.msra.mxu0 0
        %2891 = vmatprep.subr.bf16.mxu0 0
        %2892 = vmatpush1.bf16.msra.mxu0 0
        %2893 = vmatprep.subr.bf16.mxu0 0
        %2894 = vmatpush1.bf16.msra.mxu0 0
        %2895 = vmatprep.subr.bf16.mxu0 0
        %2896 = vmatpush1.bf16.msra.mxu0 0
        %2897 = vmatprep.subr.bf16.mxu0 0
        %2898 = vmatpush1.bf16.msra.mxu0 0
        %2899 = vmatprep.subr.bf16.mxu0 0
        %2900 = vmatpush1.bf16.msra.mxu0 0
        %2901 = vmatprep.subr.bf16.mxu0 0
        %2902 = vmatpush1.bf16.msra.mxu0 0
        %2903 = vmatprep.subr.bf16.mxu0 0
        %2904 = vmatpush1.bf16.msra.mxu0 %v2887
        %2905 = vmatprep.subr.bf16.mxu0 0
        %2906 = vmatpush2.bf16.msra.mxu0 0
        %2907 = vmatprep.subr.bf16.mxu0 0
        %2908 = vmatpush2.bf16.msra.mxu0 0
        %2909 = vmatprep.subr.bf16.mxu0 0
        %2910 = vmatpush2.bf16.msra.mxu0 0
        %2911 = vmatprep.subr.bf16.mxu0 0
        %2912 = vmatpush2.bf16.msra.mxu0 0
        %2913 = vmatprep.subr.bf16.mxu0 0
        %2914 = vmatpush2.bf16.msra.mxu0 0
        %2915 = vmatprep.subr.bf16.mxu0 0
        %2916 = vmatpush2.bf16.msra.mxu0 0
        %2917 = vmatprep.subr.bf16.mxu0 0
        %2918 = vmatpush2.bf16.msra.mxu0 0
        %2919 = vmatprep.subr.bf16.mxu0 0
        %2920 = vmatpush2.bf16.msra.mxu0 0
        %2921 = vmatprep.mubr.bf16.mxu0 0
        %2922 = vmatmul.mubr.bf16.gmra.mxu0 %v2884
        %v2923 = vpop.f32.mrf.mxu0
        %v2924 = vadd.f32 0.0, %v2923
        %v2925 = vpop.f32.mrf.mxu0
        %v2926 = vpop.f32.mrf.mxu0
        %v2927 = vpop.f32.mrf.mxu0
        %2928 = vdwg.mxu0
        %2929 = vrot.lane.b32.xlu0 %v2318, 80
        %v2930 = vpop.permute.xlu0 %2929
        %v2932 = vsel %vm2411, %v2880, 0
        %v2935 = vsel %vm2442, %v2930, 0
        %2937 = vmatprep.subr.bf16.mxu0 0
        %2938 = vmatpush1.bf16.msra.mxu0 0
        %2939 = vmatprep.subr.bf16.mxu0 0
        %2940 = vmatpush1.bf16.msra.mxu0 0
        %2941 = vmatprep.subr.bf16.mxu0 0
        %2942 = vmatpush1.bf16.msra.mxu0 0
        %2943 = vmatprep.subr.bf16.mxu0 0
        %2944 = vmatpush1.bf16.msra.mxu0 0
        %2945 = vmatprep.subr.bf16.mxu0 0
        %2946 = vmatpush1.bf16.msra.mxu0 0
        %2947 = vmatprep.subr.bf16.mxu0 0
        %2948 = vmatpush1.bf16.msra.mxu0 0
        %2949 = vmatprep.subr.bf16.mxu0 0
        %2950 = vmatpush1.bf16.msra.mxu0 0
        %2951 = vmatprep.subr.bf16.mxu0 0
        %2952 = vmatpush1.bf16.msra.mxu0 %v2935
        %2953 = vmatprep.subr.bf16.mxu0 0
        %2954 = vmatpush2.bf16.msra.mxu0 0
        %2955 = vmatprep.subr.bf16.mxu0 0
        %2956 = vmatpush2.bf16.msra.mxu0 0
        %2957 = vmatprep.subr.bf16.mxu0 0
        %2958 = vmatpush2.bf16.msra.mxu0 0
        %2959 = vmatprep.subr.bf16.mxu0 0
        %2960 = vmatpush2.bf16.msra.mxu0 0
        %2961 = vmatprep.subr.bf16.mxu0 0
        %2962 = vmatpush2.bf16.msra.mxu0 0
        %2963 = vmatprep.subr.bf16.mxu0 0
        %2964 = vmatpush2.bf16.msra.mxu0 0
        %2965 = vmatprep.subr.bf16.mxu0 0
        %2966 = vmatpush2.bf16.msra.mxu0 0
        %2967 = vmatprep.subr.bf16.mxu0 0
        %2968 = vmatpush2.bf16.msra.mxu0 0
        %2969 = vmatprep.mubr.bf16.mxu0 0
        %2970 = vmatmul.mubr.bf16.gmra.mxu0 %v2932
        %v2971 = vpop.f32.mrf.mxu0
        %v2972 = vadd.f32 0.0, %v2971
        %v2973 = vpop.f32.mrf.mxu0
        %v2974 = vpop.f32.mrf.mxu0
        %v2975 = vpop.f32.mrf.mxu0
        %2976 = vdwg.mxu0
        %2977 = vrot.lane.b32.xlu0 %v2311, 104
        %v2978 = vpop.permute.xlu0 %2977
        %2979 = vrot.lane.b32.xlu0 %v2317, 104
        %v2980 = vpop.permute.xlu0 %2979
        %v2982 = vsel %vm1135, %v2978, 0
        %v2985 = vsel %vm1135, %v2980, 0
        %2987 = vmatprep.subr.bf16.mxu0 0
        %2988 = vmatpush1.bf16.xpose.msra.mxu0 0
        %2989 = vmatprep.subr.bf16.mxu0 0
        %2990 = vmatpush1.bf16.xpose.msra.mxu0 0
        %2991 = vmatprep.subr.bf16.mxu0 0
        %2992 = vmatpush1.bf16.xpose.msra.mxu0 0
        %2993 = vmatprep.subr.bf16.mxu0 0
        %2994 = vmatpush1.bf16.xpose.msra.mxu0 0
        %2995 = vmatprep.subr.bf16.mxu0 0
        %2996 = vmatpush1.bf16.xpose.msra.mxu0 0
        %2997 = vmatprep.subr.bf16.mxu0 0
        %2998 = vmatpush1.bf16.xpose.msra.mxu0 0
        %2999 = vmatprep.subr.bf16.mxu0 0
        %3000 = vmatpush1.bf16.xpose.msra.mxu0 0
        %3001 = vmatprep.subr.bf16.mxu0 0
        %3002 = vmatpush1.bf16.xpose.msra.mxu0 %v2985
        %3003 = vmatprep.subr.bf16.mxu0 0
        %3004 = vmatpush2.bf16.xpose.msra.mxu0 0
        %3005 = vmatprep.subr.bf16.mxu0 0
        %3006 = vmatpush2.bf16.xpose.msra.mxu0 0
        %3007 = vmatprep.subr.bf16.mxu0 0
        %3008 = vmatpush2.bf16.xpose.msra.mxu0 0
        %3009 = vmatprep.subr.bf16.mxu0 0
        %3010 = vmatpush2.bf16.xpose.msra.mxu0 0
        %3011 = vmatprep.subr.bf16.mxu0 0
        %3012 = vmatpush2.bf16.xpose.msra.mxu0 0
        %3013 = vmatprep.subr.bf16.mxu0 0
        %3014 = vmatpush2.bf16.xpose.msra.mxu0 0
        %3015 = vmatprep.subr.bf16.mxu0 0
        %3016 = vmatpush2.bf16.xpose.msra.mxu0 0
        %3017 = vmatprep.subr.bf16.mxu0 0
        %3018 = vmatpush2.bf16.xpose.msra.mxu0 0
        %3019 = vmatprep.mubr.bf16.mxu0 0
        %3020 = vmatmul.mubr.bf16.gmra.mxu0 %v2982
        %v3021 = vpop.f32.mrf.mxu0
        %v3022 = vadd.f32 0.0, %v3021
        %v3023 = vpop.f32.mrf.mxu0
        %v3024 = vpop.f32.mrf.mxu0
        %v3025 = vpop.f32.mrf.mxu0
        %3026 = vdwg.mxu0
        %3027 = vrot.lane.b32.xlu0 %v2312, 104
        %v3028 = vpop.permute.xlu0 %3027
        %3029 = vrot.lane.b32.xlu0 %v2318, 104
        %v3030 = vpop.permute.xlu0 %3029
        %v3032 = vsel %vm1135, %v3028, 0
        %v3035 = vsel %vm1135, %v3030, 0
        %3037 = vmatprep.subr.bf16.mxu0 0
        %3038 = vmatpush1.bf16.xpose.msra.mxu0 0
        %3039 = vmatprep.subr.bf16.mxu0 0
        %3040 = vmatpush1.bf16.xpose.msra.mxu0 0
        %3041 = vmatprep.subr.bf16.mxu0 0
        %3042 = vmatpush1.bf16.xpose.msra.mxu0 0
        %3043 = vmatprep.subr.bf16.mxu0 0
        %3044 = vmatpush1.bf16.xpose.msra.mxu0 0
        %3045 = vmatprep.subr.bf16.mxu0 0
        %3046 = vmatpush1.bf16.xpose.msra.mxu0 0
        %3047 = vmatprep.subr.bf16.mxu0 0
        %3048 = vmatpush1.bf16.xpose.msra.mxu0 0
        %3049 = vmatprep.subr.bf16.mxu0 0
        %3050 = vmatpush1.bf16.xpose.msra.mxu0 0
        %3051 = vmatprep.subr.bf16.mxu0 0
        %3052 = vmatpush1.bf16.xpose.msra.mxu0 %v3035
        %3053 = vmatprep.subr.bf16.mxu0 0
        %3054 = vmatpush2.bf16.xpose.msra.mxu0 0
        %3055 = vmatprep.subr.bf16.mxu0 0
        %3056 = vmatpush2.bf16.xpose.msra.mxu0 0
        %3057 = vmatprep.subr.bf16.mxu0 0
        %3058 = vmatpush2.bf16.xpose.msra.mxu0 0
        %3059 = vmatprep.subr.bf16.mxu0 0
        %3060 = vmatpush2.bf16.xpose.msra.mxu0 0
        %3061 = vmatprep.subr.bf16.mxu0 0
        %3062 = vmatpush2.bf16.xpose.msra.mxu0 0
        %3063 = vmatprep.subr.bf16.mxu0 0
        %3064 = vmatpush2.bf16.xpose.msra.mxu0 0
        %3065 = vmatprep.subr.bf16.mxu0 0
        %3066 = vmatpush2.bf16.xpose.msra.mxu0 0
        %3067 = vmatprep.subr.bf16.mxu0 0
        %3068 = vmatpush2.bf16.xpose.msra.mxu0 0
        %3069 = vmatprep.mubr.bf16.mxu0 0
        %3070 = vmatmul.mubr.bf16.gmra.mxu0 %v3032
        %v3071 = vpop.f32.mrf.mxu0
        %v3072 = vadd.f32 0.0, %v3071
        %v3073 = vpop.f32.mrf.mxu0
        %v3074 = vpop.f32.mrf.mxu0
        %v3075 = vpop.f32.mrf.mxu0
        %3076 = vdwg.mxu0
        %v3077 = vsel %vm2411, %v3022, -inf
        %3078 = vmax.xlane.f32.xlu0 %v3077
        %v3079 = vpop.xlane.xlu0 %3078
        %v3080 = vsel %vm2411, %v3072, -inf
        %3081 = vmax.xlane.f32.xlu0 %v3080
        %v3082 = vpop.xlane.xlu0 %3081
        %v3083 = vsub.f32 %v3022, %v3079
        %v3084 = vsub.f32 %v3072, %v3082
        %v3085 = vmul.f32 %v3083, 1.442695
        %v3086 = vpow.pop %v3085
        %v3087 = vmul.f32 %v3084, 1.442695
        %v3088 = vpow.pop %v3087
        %v3089 = vsel %vm2411, %v3086, 0.0
        %3090 = vadd.xlane.f32.xlu0 %v3089
        %v3091 = vpop.xlane.xlu0 %3090
        %v3092 = vsel %vm2411, %v3088, 0.0
        %3093 = vadd.xlane.f32.xlu0 %v3092
        %v3094 = vpop.xlane.xlu0 %3093
        %v3095 = vrcp.pop %v3091
        %v3096 = vrcp.pop %v3094
        %v3097 = vmul.f32 %v3086, %v3095
        %v3098 = vmul.f32 %v3088, %v3096
        %v3099 = vpack.c.bf16 %v3097, %v3097
        %v3100 = vpack.c.bf16 %v3098, %v3098
        %3101 = vrot.lane.b32.xlu0 %v2317, 72
        %v3102 = vpop.permute.xlu0 %3101
        %v3104 = vsel %vm2411, %v3099, 0
        %v3107 = vsel %vm2442, %v3102, 0
        %3109 = vmatprep.subr.bf16.mxu0 0
        %3110 = vmatpush1.bf16.msra.mxu0 0
        %3111 = vmatprep.subr.bf16.mxu0 0
        %3112 = vmatpush1.bf16.msra.mxu0 0
        %3113 = vmatprep.subr.bf16.mxu0 0
        %3114 = vmatpush1.bf16.msra.mxu0 0
        %3115 = vmatprep.subr.bf16.mxu0 0
        %3116 = vmatpush1.bf16.msra.mxu0 0
        %3117 = vmatprep.subr.bf16.mxu0 0
        %3118 = vmatpush1.bf16.msra.mxu0 0
        %3119 = vmatprep.subr.bf16.mxu0 0
        %3120 = vmatpush1.bf16.msra.mxu0 0
        %3121 = vmatprep.subr.bf16.mxu0 0
        %3122 = vmatpush1.bf16.msra.mxu0 0
        %3123 = vmatprep.subr.bf16.mxu0 0
        %3124 = vmatpush1.bf16.msra.mxu0 %v3107
        %3125 = vmatprep.subr.bf16.mxu0 0
        %3126 = vmatpush2.bf16.msra.mxu0 0
        %3127 = vmatprep.subr.bf16.mxu0 0
        %3128 = vmatpush2.bf16.msra.mxu0 0
        %3129 = vmatprep.subr.bf16.mxu0 0
        %3130 = vmatpush2.bf16.msra.mxu0 0
        %3131 = vmatprep.subr.bf16.mxu0 0
        %3132 = vmatpush2.bf16.msra.mxu0 0
        %3133 = vmatprep.subr.bf16.mxu0 0
        %3134 = vmatpush2.bf16.msra.mxu0 0
        %3135 = vmatprep.subr.bf16.mxu0 0
        %3136 = vmatpush2.bf16.msra.mxu0 0
        %3137 = vmatprep.subr.bf16.mxu0 0
        %3138 = vmatpush2.bf16.msra.mxu0 0
        %3139 = vmatprep.subr.bf16.mxu0 0
        %3140 = vmatpush2.bf16.msra.mxu0 0
        %3141 = vmatprep.mubr.bf16.mxu0 0
        %3142 = vmatmul.mubr.bf16.gmra.mxu0 %v3104
        %v3143 = vpop.f32.mrf.mxu0
        %v3144 = vadd.f32 0.0, %v3143
        %v3145 = vpop.f32.mrf.mxu0
        %v3146 = vpop.f32.mrf.mxu0
        %v3147 = vpop.f32.mrf.mxu0
        %3148 = vdwg.mxu0
        %3149 = vrot.lane.b32.xlu0 %v2318, 72
        %v3150 = vpop.permute.xlu0 %3149
        %v3152 = vsel %vm2411, %v3100, 0
        %v3155 = vsel %vm2442, %v3150, 0
        %3157 = vmatprep.subr.bf16.mxu0 0
        %3158 = vmatpush1.bf16.msra.mxu0 0
        %3159 = vmatprep.subr.bf16.mxu0 0
        %3160 = vmatpush1.bf16.msra.mxu0 0
        %3161 = vmatprep.subr.bf16.mxu0 0
        %3162 = vmatpush1.bf16.msra.mxu0 0
        %3163 = vmatprep.subr.bf16.mxu0 0
        %3164 = vmatpush1.bf16.msra.mxu0 0
        %3165 = vmatprep.subr.bf16.mxu0 0
        %3166 = vmatpush1.bf16.msra.mxu0 0
        %3167 = vmatprep.subr.bf16.mxu0 0
        %3168 = vmatpush1.bf16.msra.mxu0 0
        %3169 = vmatprep.subr.bf16.mxu0 0
        %3170 = vmatpush1.bf16.msra.mxu0 0
        %3171 = vmatprep.subr.bf16.mxu0 0
        %3172 = vmatpush1.bf16.msra.mxu0 %v3155
        %3173 = vmatprep.subr.bf16.mxu0 0
        %3174 = vmatpush2.bf16.msra.mxu0 0
        %3175 = vmatprep.subr.bf16.mxu0 0
        %3176 = vmatpush2.bf16.msra.mxu0 0
        %3177 = vmatprep.subr.bf16.mxu0 0
        %3178 = vmatpush2.bf16.msra.mxu0 0
        %3179 = vmatprep.subr.bf16.mxu0 0
        %3180 = vmatpush2.bf16.msra.mxu0 0
        %3181 = vmatprep.subr.bf16.mxu0 0
        %3182 = vmatpush2.bf16.msra.mxu0 0
        %3183 = vmatprep.subr.bf16.mxu0 0
        %3184 = vmatpush2.bf16.msra.mxu0 0
        %3185 = vmatprep.subr.bf16.mxu0 0
        %3186 = vmatpush2.bf16.msra.mxu0 0
        %3187 = vmatprep.subr.bf16.mxu0 0
        %3188 = vmatpush2.bf16.msra.mxu0 0
        %3189 = vmatprep.mubr.bf16.mxu0 0
        %3190 = vmatmul.mubr.bf16.gmra.mxu0 %v3152
        %v3191 = vpop.f32.mrf.mxu0
        %v3192 = vadd.f32 0.0, %v3191
        %v3193 = vpop.f32.mrf.mxu0
        %v3194 = vpop.f32.mrf.mxu0
        %v3195 = vpop.f32.mrf.mxu0
        %3196 = vdwg.mxu0
        %3199 = vrot.lane.b32.xlu0 %v2704, 8
        %v3200 = vpop.permute.xlu0 %3199
        %3201 = vrot.lane.b32.xlu0 %v2752, 8
        %v3202 = vpop.permute.xlu0 %3201
        %3207 = vrot.lane.b32.xlu0 %v2924, 16
        %v3208 = vpop.permute.xlu0 %3207
        %3209 = vrot.lane.b32.xlu0 %v2972, 16
        %v3210 = vpop.permute.xlu0 %3209
        %3215 = vrot.lane.b32.xlu0 %v3144, 24
        %v3216 = vpop.permute.xlu0 %3215
        %3217 = vrot.lane.b32.xlu0 %v3192, 24
        %v3218 = vpop.permute.xlu0 %3217
        %v3221 = vsel %vm1135, %v2481, %v3200
        %v3222 = vsel %vm1135, %v2530, %v3202
        %v3223 = vsel %vm2038, %v3221, %v3208
        %v3224 = vsel %vm2038, %v3222, %v3210
        %v3225 = vsel %vm2041, %v3223, %v3216
        %v3226 = vsel %vm2041, %v3224, %v3218
        %v3227 = vpack.c.bf16 %v3226, %v3225
        %v3228 = vld [vmem:[%s1006] sm:$0xf]
        %v3229 = vld [vmem:[%s1006 + $0x4] sm:$0xf]
        %v3230 = vld [vmem:[%s1006 + $0x8] sm:$0xf]
        %v3231 = vld [vmem:[%s1006 + $0xc] sm:$0xf]
        %v3232 = vld [vmem:[%s1009] sm:$0x1]
        %v3234 = vlaneseq
        %v3235 = vshrl.u32 %v3234, 7
        %v3236 = vsub.s32 0, %v3235
        %v3237 = vrot.slane %v3232, %v3236
        %v3243 = vunpack.c.l.b16 %v3228
        %v3244 = vunpack.c.l.b16 %v3229
        %v3245 = vunpack.c.l.b16 %v3230
        %v3246 = vunpack.c.l.b16 %v3231
        %v3247 = vpack.c.b16 %v3244, %v3243
        %v3248 = vpack.c.b16 %v3246, %v3245
        %v3252 = vsel %vm1085, %v3227, 0
        %3254 = vmatprep.subr.bf16.mxu0 0
        %3255 = vmatpush1.bf16.msra.mxu0 0
        %3256 = vmatprep.subr.bf16.mxu0 0
        %3257 = vmatpush1.bf16.msra.mxu0 0
        %3258 = vmatprep.subr.bf16.mxu0 0
        %3259 = vmatpush1.bf16.msra.mxu0 0
        %3260 = vmatprep.subr.bf16.mxu0 0
        %3261 = vmatpush1.bf16.msra.mxu0 0
        %3262 = vmatprep.subr.bf16.mxu0 0
        %3263 = vmatpush1.bf16.msra.mxu0 0
        %3264 = vmatprep.subr.bf16.mxu0 0
        %3265 = vmatpush1.bf16.msra.mxu0 0
        %3266 = vmatprep.subr.bf16.mxu0 0
        %3267 = vmatpush1.bf16.msra.mxu0 %v3248
        %3268 = vmatprep.subr.bf16.mxu0 0
        %3269 = vmatpush1.bf16.msra.mxu0 %v3247
        %3270 = vmatprep.subr.bf16.mxu0 0
        %3271 = vmatpush2.bf16.msra.mxu0 0
        %3272 = vmatprep.subr.bf16.mxu0 0
        %3273 = vmatpush2.bf16.msra.mxu0 0
        %3274 = vmatprep.subr.bf16.mxu0 0
        %3275 = vmatpush2.bf16.msra.mxu0 0
        %3276 = vmatprep.subr.bf16.mxu0 0
        %3277 = vmatpush2.bf16.msra.mxu0 0
        %3278 = vmatprep.subr.bf16.mxu0 0
        %3279 = vmatpush2.bf16.msra.mxu0 0
        %3280 = vmatprep.subr.bf16.mxu0 0
        %3281 = vmatpush2.bf16.msra.mxu0 0
        %3282 = vmatprep.subr.bf16.mxu0 0
        %3283 = vmatpush2.bf16.msra.mxu0 0
        %3284 = vmatprep.subr.bf16.mxu0 0
        %3285 = vmatpush2.bf16.msra.mxu0 0
        %3286 = vmatprep.mubr.bf16.mxu0 0
        %3287 = vmatmul.mubr.bf16.gmra.mxu0 %v3252
        %v3288 = vpop.f32.mrf.mxu0
        %v3289 = vadd.f32 %v3237, %v3288
        %v3290 = vpop.f32.mrf.mxu0
        %v3291 = vpop.f32.mrf.mxu0
        %v3292 = vadd.f32 %v3237, %v3291
        %v3293 = vpop.f32.mrf.mxu0
        %3294 = vdwg.mxu0
        %v3295 = vadd.f32 %v2157, %v3289
        %v3296 = vadd.f32 %v2158, %v3292
        %v3297 = vld [vmem:[%s1034] sm:$0x1]
        %v3298 = vld [vmem:[%s1037] sm:$0x1]
        %v3299 = vsel %vm1085, %v3295, 0.0
        %3300 = vadd.xlane.f32.xlu0 %v3299
        %v3301 = vpop.xlane.xlu0 %3300
        %v3302 = vsel %vm1085, %v3296, 0.0
        %3303 = vadd.xlane.f32.xlu0 %v3302
        %v3304 = vpop.xlane.xlu0 %3303
        %v3305 = vmul.f32 %v3301, %v2122
        %v3306 = vmul.f32 %v3304, %v2122
        %v3307 = vsub.f32 %v3295, %v3305
        %v3308 = vsub.f32 %v3296, %v3306
        %v3309 = vmul.f32 %v3307, %v3307
        %v3310 = vmul.f32 %v3308, %v3308
        %v3311 = vsel %vm1085, %v3309, 0.0
        %3312 = vadd.xlane.f32.xlu0 %v3311
        %v3313 = vpop.xlane.xlu0 %3312
        %v3314 = vsel %vm1085, %v3310, 0.0
        %3315 = vadd.xlane.f32.xlu0 %v3314
        %v3316 = vpop.xlane.xlu0 %3315
        %v3317 = vmul.f32 %v3313, %v2122
        %v3318 = vmul.f32 %v3316, %v2122
        %v3319 = vadd.f32 %v3317, 1e-05
        %v3320 = vadd.f32 %v3318, 1e-05
        %v3321 = vrsqrt.pop %v3319
        %v3322 = vrsqrt.pop %v3320
        %v3323 = vmul.f32 %v3307, %v3321
        %v3324 = vmul.f32 %v3308, %v3322
        %v3326 = vlaneseq
        %v3327 = vshrl.u32 %v3326, 7
        %v3328 = vsub.s32 0, %v3327
        %v3329 = vrot.slane %v3297, %v3328
        %v3331 = vmul.f32 %v3323, %v3329
        %v3332 = vmul.f32 %v3324, %v3329
        %v3334 = vlaneseq
        %v3335 = vshrl.u32 %v3334, 7
        %v3336 = vsub.s32 0, %v3335
        %v3337 = vrot.slane %v3298, %v3336
        %v3339 = vadd.f32 %v3331, %v3337
        %v3340 = vadd.f32 %v3332, %v3337
        %v3341 = vpack.c.bf16 %v3340, %v3339
        %v3342 = vld [vmem:[%s1014] sm:$0xf]
        %v3343 = vld [vmem:[%s1014 + $0x4] sm:$0xf]
        %v3344 = vld [vmem:[%s1014 + $0x8] sm:$0xf]
        %v3345 = vld [vmem:[%s1014 + $0xc] sm:$0xf]
        %v3346 = vld [vmem:[%s1017] sm:$0x1]
        %v3348 = vlaneseq
        %v3349 = vshrl.u32 %v3348, 7
        %v3350 = vsub.s32 0, %v3349
        %v3351 = vrot.slane %v3346, %v3350
        %v3357 = vunpack.c.l.b16 %v3342
        %v3358 = vunpack.c.l.b16 %v3343
        %v3359 = vunpack.c.l.b16 %v3344
        %v3360 = vunpack.c.l.b16 %v3345
        %v3361 = vpack.c.b16 %v3358, %v3357
        %v3362 = vpack.c.b16 %v3360, %v3359
        %v3366 = vsel %vm1085, %v3341, 0
        %3368 = vmatprep.subr.bf16.mxu0 0
        %3369 = vmatpush1.bf16.msra.mxu0 0
        %3370 = vmatprep.subr.bf16.mxu0 0
        %3371 = vmatpush1.bf16.msra.mxu0 0
        %3372 = vmatprep.subr.bf16.mxu0 0
        %3373 = vmatpush1.bf16.msra.mxu0 0
        %3374 = vmatprep.subr.bf16.mxu0 0
        %3375 = vmatpush1.bf16.msra.mxu0 0
        %3376 = vmatprep.subr.bf16.mxu0 0
        %3377 = vmatpush1.bf16.msra.mxu0 0
        %3378 = vmatprep.subr.bf16.mxu0 0
        %3379 = vmatpush1.bf16.msra.mxu0 0
        %3380 = vmatprep.subr.bf16.mxu0 0
        %3381 = vmatpush1.bf16.msra.mxu0 %v3362
        %3382 = vmatprep.subr.bf16.mxu0 0
        %3383 = vmatpush1.bf16.msra.mxu0 %v3361
        %3384 = vmatprep.subr.bf16.mxu0 0
        %3385 = vmatpush2.bf16.msra.mxu0 0
        %3386 = vmatprep.subr.bf16.mxu0 0
        %3387 = vmatpush2.bf16.msra.mxu0 0
        %3388 = vmatprep.subr.bf16.mxu0 0
        %3389 = vmatpush2.bf16.msra.mxu0 0
        %3390 = vmatprep.subr.bf16.mxu0 0
        %3391 = vmatpush2.bf16.msra.mxu0 0
        %3392 = vmatprep.subr.bf16.mxu0 0
        %3393 = vmatpush2.bf16.msra.mxu0 0
        %3394 = vmatprep.subr.bf16.mxu0 0
        %3395 = vmatpush2.bf16.msra.mxu0 0
        %3396 = vmatprep.subr.bf16.mxu0 0
        %3397 = vmatpush2.bf16.msra.mxu0 0
        %3398 = vmatprep.subr.bf16.mxu0 0
        %3399 = vmatpush2.bf16.msra.mxu0 0
        %3400 = vmatprep.mubr.bf16.mxu0 0
        %3401 = vmatmul.mubr.bf16.gmra.mxu0 %v3366
        %v3402 = vpop.f32.mrf.mxu0
        %v3403 = vadd.f32 %v3351, %v3402
        %v3404 = vpop.f32.mrf.mxu0
        %v3405 = vpop.f32.mrf.mxu0
        %v3406 = vadd.f32 %v3351, %v3405
        %v3407 = vpop.f32.mrf.mxu0
        %3408 = vdwg.mxu0
        %v3409 = vmax.f32 %v3403, 0.0
        %v3410 = vmax.f32 %v3406, 0.0
        %v3411 = vpack.c.bf16 %v3410, %v3409
        %v3412 = vld [vmem:[%s1022] sm:$0xf]
        %v3413 = vld [vmem:[%s1022 + $0x4] sm:$0xf]
        %v3414 = vld [vmem:[%s1022 + $0x8] sm:$0xf]
        %v3415 = vld [vmem:[%s1022 + $0xc] sm:$0xf]
        %v3416 = vld [vmem:[%s1022 + $0x10] sm:$0xf]
        %v3417 = vld [vmem:[%s1022 + $0x14] sm:$0xf]
        %v3418 = vld [vmem:[%s1022 + $0x18] sm:$0xf]
        %v3419 = vld [vmem:[%s1022 + $0x1c] sm:$0xf]
        %v3420 = vld [vmem:[%s1025] sm:$0x1]
        %v3422 = vlaneseq
        %v3423 = vshrl.u32 %v3422, 7
        %v3424 = vsub.s32 0, %v3423
        %v3425 = vrot.slane %v3420, %v3424
        %v3435 = vunpack.c.l.b16 %v3412
        %v3436 = vunpack.c.l.b16 %v3413
        %v3437 = vunpack.c.l.b16 %v3414
        %v3438 = vunpack.c.l.b16 %v3415
        %v3439 = vunpack.c.l.b16 %v3416
        %v3440 = vunpack.c.l.b16 %v3417
        %v3441 = vunpack.c.l.b16 %v3418
        %v3442 = vunpack.c.l.b16 %v3419
        %v3443 = vpack.c.b16 %v3436, %v3435
        %v3444 = vpack.c.b16 %v3438, %v3437
        %v3445 = vpack.c.b16 %v3440, %v3439
        %v3446 = vpack.c.b16 %v3442, %v3441
        %vm3451 = vcmask 523264
        %v3453 = vsel %vm3451, %v3411, 0
        %3455 = vmatprep.subr.bf16.mxu0 0
        %3456 = vmatpush1.bf16.msra.mxu0 0
        %3457 = vmatprep.subr.bf16.mxu0 0
        %3458 = vmatpush1.bf16.msra.mxu0 0
        %3459 = vmatprep.subr.bf16.mxu0 0
        %3460 = vmatpush1.bf16.msra.mxu0 0
        %3461 = vmatprep.subr.bf16.mxu0 0
        %3462 = vmatpush1.bf16.msra.mxu0 0
        %3463 = vmatprep.subr.bf16.mxu0 0
        %3464 = vmatpush1.bf16.msra.mxu0 %v3446
        %3465 = vmatprep.subr.bf16.mxu0 0
        %3466 = vmatpush1.bf16.msra.mxu0 %v3445
        %3467 = vmatprep.subr.bf16.mxu0 0
        %3468 = vmatpush1.bf16.msra.mxu0 %v3444
        %3469 = vmatprep.subr.bf16.mxu0 0
        %3470 = vmatpush1.bf16.msra.mxu0 %v3443
        %3471 = vmatprep.subr.bf16.mxu0 0
        %3472 = vmatpush2.bf16.msra.mxu0 0
        %3473 = vmatprep.subr.bf16.mxu0 0
        %3474 = vmatpush2.bf16.msra.mxu0 0
        %3475 = vmatprep.subr.bf16.mxu0 0
        %3476 = vmatpush2.bf16.msra.mxu0 0
        %3477 = vmatprep.subr.bf16.mxu0 0
        %3478 = vmatpush2.bf16.msra.mxu0 0
        %3479 = vmatprep.subr.bf16.mxu0 0
        %3480 = vmatpush2.bf16.msra.mxu0 0
        %3481 = vmatprep.subr.bf16.mxu0 0
        %3482 = vmatpush2.bf16.msra.mxu0 0
        %3483 = vmatprep.subr.bf16.mxu0 0
        %3484 = vmatpush2.bf16.msra.mxu0 0
        %3485 = vmatprep.subr.bf16.mxu0 0
        %3486 = vmatpush2.bf16.msra.mxu0 0
        %3487 = vmatprep.mubr.bf16.mxu0 0
        %3488 = vmatmul.mubr.bf16.gmra.mxu0 %v3453
        %v3489 = vpop.f32.mrf.mxu0
        %v3490 = vadd.f32 %v3425, %v3489
        %v3491 = vpop.f32.mrf.mxu0
        %v3492 = vpop.f32.mrf.mxu0
        %v3493 = vadd.f32 %v3425, %v3492
        %v3494 = vpop.f32.mrf.mxu0
        %3495 = vdwg.mxu0
        %v3496 = vadd.f32 %v3339, %v3490
        %v3497 = vadd.f32 %v3340, %v3493
        %v3498 = vld [vmem:[%s1040] sm:$0x1]
        %v3499 = vld [vmem:[%s1043] sm:$0x1]
        %v3500 = vsel %vm1085, %v3496, 0.0
        %3501 = vadd.xlane.f32.xlu0 %v3500
        %v3502 = vpop.xlane.xlu0 %3501
        %v3503 = vsel %vm1085, %v3497, 0.0
        %3504 = vadd.xlane.f32.xlu0 %v3503
        %v3505 = vpop.xlane.xlu0 %3504
        %v3506 = vmul.f32 %v3502, %v2122
        %v3507 = vmul.f32 %v3505, %v2122
        %v3508 = vsub.f32 %v3496, %v3506
        %v3509 = vsub.f32 %v3497, %v3507
        %v3510 = vmul.f32 %v3508, %v3508
        %v3511 = vmul.f32 %v3509, %v3509
        %v3512 = vsel %vm1085, %v3510, 0.0
        %3513 = vadd.xlane.f32.xlu0 %v3512
        %v3514 = vpop.xlane.xlu0 %3513
        %v3515 = vsel %vm1085, %v3511, 0.0
        %3516 = vadd.xlane.f32.xlu0 %v3515
        %v3517 = vpop.xlane.xlu0 %3516
        %v3518 = vmul.f32 %v3514, %v2122
        %v3519 = vmul.f32 %v3517, %v2122
        %v3520 = vadd.f32 %v3518, 1e-05
        %v3521 = vadd.f32 %v3519, 1e-05
        %v3522 = vrsqrt.pop %v3520
        %v3523 = vrsqrt.pop %v3521
        %v3524 = vmul.f32 %v3508, %v3522
        %v3525 = vmul.f32 %v3509, %v3523
        %v3527 = vlaneseq
        %v3528 = vshrl.u32 %v3527, 7
        %v3529 = vsub.s32 0, %v3528
        %v3530 = vrot.slane %v3498, %v3529
        %v3532 = vmul.f32 %v3524, %v3530
        %v3533 = vmul.f32 %v3525, %v3530
        %v3535 = vlaneseq
        %v3536 = vshrl.u32 %v3535, 7
        %v3537 = vsub.s32 0, %v3536
        %v3538 = vrot.slane %v3499, %v3537
        %v3540 = vadd.f32 %v3532, %v3538
        %v3541 = vadd.f32 %v3533, %v3538
        %3542 = vst.msk [vmem:[#allocation2] sm:$0xff] %vm1085, %v3540
        %3543 = vst.msk [vmem:[#allocation2 + $0x8] sm:$0xff] %vm1085, %v3541
        %3544 = vst.msk [vmem:[#allocation11] sm:$0xff] %vm1085, %v3540
        %3545 = vst.msk [vmem:[#allocation11 + $0x8] sm:$0xff] %vm1085, %v3541
        // Predicated region
        $region129: #{transformer_decoder.1} parent=107 // pred_check
          %p3546 = pneg %p616
        $region130: #{transformer_decoder.1} parent=107 // pred_check_branch
          %3548 = sbr.rel (%p3546) target = $region132
        $region131: #{transformer_decoder.1} parent=107 // pred_region
          %s3550 = ssub.s32 256, 256
          %3551 = vsyncadd [#allocation5], %s3550
          %s3552 = sshll.u32 [#allocation11], 4
          %s3553 = int_to_ptr.vmem [resolvable:$true] %s3552
          %3558 = dma.vmem_to_hbm [thread:$0]  %s3553, 256, %s22, [#allocation5], 128, 128, 8
        $region132: #{transformer_decoder.1} parent=107 // pred_fallthru
          _
        // Predicated region
        $region133: #{transformer_decoder.1} parent=107 // pred_check
          %p3559 = pneg %p616
        $region134: #{transformer_decoder.1} parent=107 // pred_check_branch
          %3561 = sbr.rel (%p3559) target = $region136
        $region135: #{transformer_decoder.1} parent=107 // pred_region
          %3562 = dma.done [#allocation5], 256
        $region136: #{transformer_decoder.1} parent=107 // pred_fallthru
          _
      $region108: #{transformer_decoder.1} parent=5 // pred_fallthru
        _
      %p3563 = scmp.le.s32.totalorder 2, %s36
      // Predicated region
      $region137: #{transformer_decoder.1} parent=5 // pred_check
        %p3564 = pneg %p3563
      $region138: #{transformer_decoder.1} parent=5 // pred_check_branch
        %3566 = sbr.rel (%p3564) target = $region140
      $region139: #{transformer_decoder.1} parent=5 // pred_region
        %s3567 = ssub.s32 %s36, 2
      $region140: #{transformer_decoder.1} parent=5 // pred_fallthru
        _
    $region6: #{transformer_decoder.1} parent=1 // loop_footer
      %s40 = sadd.s32 1, %s36
    $region7: #{transformer_decoder.1} parent=1 // loop_footer_branch
      %35 = sbr.rel target = $region3
    $region8: #{transformer_decoder.1} parent=1 // loop_exit
      _
    %3568 = vsyncpa [#allocation4], 1
    %s3569 = scalar_lea.sflag [#allocation4], 1
    %3570 = vsyncpa %s3569, 1
    %3571 = vsyncpa [#allocation7], 1
    %s3572 = scalar_lea.sflag [#allocation7], 1
    %3573 = vsyncpa %s3572, 1
    %3574 = vsyncpa [#allocation10], 1
    %s3575 = scalar_lea.sflag [#allocation10], 1
    %3576 = vsyncpa %s3575, 1
    %3577 = vsyncpa [#allocation5], 1
    %s3578 = scalar_lea.sflag [#allocation5], 1
    %3579 = vsyncpa %s3578, 1

</llo_original>
